<compile_context>
chip_gen: v7x
topology: tpu7x:2x2x1
jax: 0.10.0
libtpu: 0.0.40
codegen_flags: <defaults>
</compile_context>

<pallas_src>
import math
import functools

import jax
import jax.numpy as jnp
from jax.experimental import pallas as pl
from jax.experimental.pallas import tpu as pltpu


# ----------------------------------------------------------------------------
# Fused self-attention kernel (one batch element per grid step)
# ----------------------------------------------------------------------------

def _self_attention_kernel(x_ref, gmat_ref, wqkv_ref, bqkv_ref, wout_ref,
                           bout_ref, o_ref, *, eps):
    x = x_ref[0]                                     # (C, S) f32, channel-major
    C = x.shape[0]
    S = x.shape[1]

    # ---- GroupNorm, one pass over x (PyTorch semantics: biased var, eps inside rsqrt)
    # gmat[i, j] = 1/(Cg*S) if channels i, j share a group else 0, so
    # gmat @ per-row sums broadcasts each group's statistic to its rows.
    gmat = gmat_ref[...]                                               # (C, C)
    row_sum = jnp.sum(x, axis=1, keepdims=True)                        # (C, 1) lane reduce
    row_sq = jnp.sum(x * x, axis=1, keepdims=True)                     # (C, 1)
    mean = jnp.dot(gmat, row_sum, preferred_element_type=jnp.float32)  # (C, 1)
    ex2 = jnp.dot(gmat, row_sq, preferred_element_type=jnp.float32)    # (C, 1)
    var = jnp.maximum(ex2 - mean * mean, 0.0)
    # gamma/beta are folded into wqkv / bqkv in the wrapper -> no affine here.
    xn = ((x - mean) * jax.lax.rsqrt(var + eps)).astype(jnp.bfloat16)  # (C, S)

    # ---- qkv projection: 1x1x1 conv == channel matmul (bf16 operands, f32 acc).
    # 1/sqrt(C) is pre-folded into the q rows of wqkv/bqkv.
    qkv = jnp.dot(wqkv_ref[...], xn,
                  preferred_element_type=jnp.float32) + bqkv_ref[...]  # (3C, S) f32
    qkv_b = qkv.astype(jnp.bfloat16)
    q = qkv_b[0:C]                                   # (C, S) bf16 (already scaled)
    k = qkv_b[C:2 * C]                               # (C, S) bf16
    v = qkv_b[2 * C:3 * C]                           # (C, S) bf16

    # ---- attention scores: transposed-LHS contraction over channels (no q.T copy)
    s = jax.lax.dot_general(q, k, (((0,), (0,)), ((), ())),
                            preferred_element_type=jnp.float32)        # (S, S)
    s = s - jnp.max(s, axis=-1, keepdims=True)
    p = jnp.exp(s).astype(jnp.bfloat16)              # unnormalized probabilities

    # ---- PV on unnormalized p (NT dot -> result already channel-major), plus
    # row sums produced directly in (1, S) lane layout via a ones-row matmul.
    attn = jax.lax.dot_general(v, p, (((1,), (1,)), ((), ())),
                               preferred_element_type=jnp.float32)     # (C, S)
    ones_row = jnp.ones((1, S), dtype=jnp.bfloat16)
    l = jax.lax.dot_general(ones_row, p, (((1,), (1,)), ((), ())),
                            preferred_element_type=jnp.float32)        # (1, S)
    attn = attn * pl.reciprocal(l, approx=True)      # deferred softmax normalization

    # ---- output 1x1x1 conv + bias + residual
    y = jnp.dot(wout_ref[...], attn.astype(jnp.bfloat16),
                preferred_element_type=jnp.float32)                    # (C, S)
    o_ref[0] = y + bout_ref[...] + x


def self_attention_forward(x, params, *, norm_groups=32, eps=1e-5):
    """Pallas forward of the PyTorch SelfAttention module (n_head=1).

    x: (B, C, H, W, D) float32. params holds norm gamma/beta, qkv/out conv weights.
    """
    B, C, H, W, D = x.shape
    S = H * W * D
    assert C % norm_groups == 0
    cg = C // norm_groups

    xr = x.reshape(B, C, S).astype(jnp.float32)      # free contiguous reshape

    # Group-membership pooling matrix (tiny constant), pre-divided by group size.
    cid = jnp.arange(C, dtype=jnp.int32) // cg
    gmat = (cid[:, None] == cid[None, :]).astype(jnp.float32) / float(cg * S)

    gamma = params["norm_g"].astype(jnp.float32)                 # (C,)
    beta = params["norm_b"].astype(jnp.float32)                  # (C,)
    wqkv = params["qkv_w"].reshape(3 * C, C).astype(jnp.float32)
    wout = params["out_w"].reshape(C, C).astype(jnp.float32)
    bout = params["out_b"].reshape(C, 1).astype(jnp.float32)
    scale = 1.0 / math.sqrt(C)                       # spec divides by sqrt(channel)

    # Fold the GroupNorm affine into the qkv projection:
    #   Wqkv @ (xhat*gamma + beta) = (Wqkv*gamma) @ xhat + Wqkv@beta
    # and fold 1/sqrt(C) into the q rows of the weight & bias.
    wqkv_g = wqkv * gamma[None, :]
    bqkv = jnp.dot(wqkv, beta[:, None], precision=jax.lax.Precision.HIGHEST)  # (3C, 1)
    row_scale = jnp.concatenate(
        [jnp.full((C, 1), scale, jnp.float32), jnp.ones((2 * C, 1), jnp.float32)],
        axis=0)                                                  # (3C, 1)
    wqkv_b16 = (wqkv_g * row_scale).astype(jnp.bfloat16)
    bqkv = bqkv * row_scale
    wout_b16 = wout.astype(jnp.bfloat16)

    out = pl.pallas_call(
        functools.partial(_self_attention_kernel, eps=eps),
        out_shape=jax.ShapeDtypeStruct((B, C, S), jnp.float32),
        grid=(B,),
        in_specs=[
            pl.BlockSpec((1, C, S), lambda b: (b, 0, 0)),
            pl.BlockSpec((C, C), lambda b: (0, 0)),
            pl.BlockSpec((3 * C, C), lambda b: (0, 0)),
            pl.BlockSpec((3 * C, 1), lambda b: (0, 0)),
            pl.BlockSpec((C, C), lambda b: (0, 0)),
            pl.BlockSpec((C, 1), lambda b: (0, 0)),
        ],
        out_specs=pl.BlockSpec((1, C, S), lambda b: (b, 0, 0)),
        compiler_params=pltpu.CompilerParams(
            dimension_semantics=("parallel",),
            vmem_limit_bytes=32 * 1024 * 1024),
    )(xr, gmat, wqkv_b16, bqkv, wout_b16, bout)

    return out.reshape(B, C, H, W, D)


# ----------------------------------------------------------------------------
# Pure-JAX reference (mirrors the PyTorch forward) for correctness checking
# ----------------------------------------------------------------------------

def self_attention_reference(x, params, *, norm_groups=32, eps=1e-5):
    B, C, H, W, D = x.shape
    S = H * W * D
    hp = jax.lax.Precision.HIGHEST

    xg = x.reshape(B, norm_groups, (C // norm_groups) * S)
    mean = xg.mean(-1, keepdims=True)
    var = xg.var(-1, keepdims=True)
    xn = ((xg - mean) / jnp.sqrt(var + eps)).reshape(B, C, S)
    xn = xn * params["norm_g"][None, :, None] + params["norm_b"][None, :, None]

    wqkv = params["qkv_w"].reshape(3 * C, C)
    qkv = jnp.einsum("oc,bcs->bos", wqkv, xn, precision=hp)
    q, k, v = qkv[:, :C], qkv[:, C:2 * C], qkv[:, 2 * C:]

    s = jnp.einsum("bcq,bck->bqk", q, k, precision=hp) / math.sqrt(C)
    p = jax.nn.softmax(s, axis=-1)
    o = jnp.einsum("bqk,bck->bcq", p, v, precision=hp)

    wout = params["out_w"].reshape(C, C)
    o = jnp.einsum("oc,bcs->bos", wout, o, precision=hp) + params["out_b"][None, :, None]
    return (o + x.reshape(B, C, S)).reshape(B, C, H, W, D)


# ----------------------------------------------------------------------------
# Main
# ----------------------------------------------------------------------------

if __name__ == "__main__":
    key = jax.random.PRNGKey(0)
    kx, kg, kb, kq, kw, ko = jax.random.split(key, 6)

    # Small shapes consistent with the module: batch=2, channels=64,
    # spatial 8x8x8 (S=512), norm_groups=32 (module default).
    B, C, H, W, D = 2, 64, 8, 8, 8
    NORM_GROUPS = 32

    x = jax.random.normal(kx, (B, C, H, W, D), jnp.float32)
    params = {
        "norm_g": 1.0 + 0.1 * jax.random.normal(kg, (C,), jnp.float32),
        "norm_b": 0.1 * jax.random.normal(kb, (C,), jnp.float32),
        "qkv_w": 0.05 * jax.random.normal(kq, (3 * C, C, 1, 1, 1), jnp.float32),
        "out_w": 0.05 * jax.random.normal(kw, (C, C, 1, 1, 1), jnp.float32),
        "out_b": 0.05 * jax.random.normal(ko, (C,), jnp.float32),
    }

    fwd = jax.jit(functools.partial(self_attention_forward,
                                    norm_groups=NORM_GROUPS))
    out = jax.block_until_ready(fwd(x, params))

    ref = jax.block_until_ready(
        self_attention_reference(x, params, norm_groups=NORM_GROUPS))

    assert out.shape == (B, C, H, W, D), out.shape
    assert bool(jnp.all(jnp.isfinite(out)))
    max_err = float(jnp.max(jnp.abs(out - ref)))
    assert max_err < 1e-2, f"mismatch vs reference: {max_err}"
    print("KERNEL_OK")
</pallas_src>

<mosaic_0001>
module attributes {stable_mosaic.version = 11 : i64} {
  func.func @_self_attention_kernel(%arg0: i32, %arg1: memref<1x64x512xf32, #tpu.memory_space<vmem>>, %arg2: memref<64x64xf32, #tpu.memory_space<vmem>>, %arg3: memref<192x64xbf16, #tpu.memory_space<vmem>>, %arg4: memref<192x1xf32, #tpu.memory_space<vmem>>, %arg5: memref<64x64xbf16, #tpu.memory_space<vmem>>, %arg6: memref<64x1xf32, #tpu.memory_space<vmem>>, %arg7: memref<1x64x512xf32, #tpu.memory_space<vmem>>) attributes {dimension_semantics = [#tpu.dimension_semantics<parallel>], iteration_bounds = array<i64: 2>, scalar_prefetch = 0 : i64, scratch_operands = 0 : i64, tpu.core_type = #tpu.core_type<tc>, window_params = [{transform_indices = @transform_0, window_bounds = array<i64: 1, 64, 512>}, {pipeline_mode = #tpu.pipeline_mode<synchronous>, transform_indices = @transform_1, window_bounds = array<i64: 64, 64>}, {pipeline_mode = #tpu.pipeline_mode<synchronous>, transform_indices = @transform_2, window_bounds = array<i64: 192, 64>}, {pipeline_mode = #tpu.pipeline_mode<synchronous>, transform_indices = @transform_3, window_bounds = array<i64: 192, 1>}, {pipeline_mode = #tpu.pipeline_mode<synchronous>, transform_indices = @transform_4, window_bounds = array<i64: 64, 64>}, {pipeline_mode = #tpu.pipeline_mode<synchronous>, transform_indices = @transform_5, window_bounds = array<i64: 64, 1>}, {transform_indices = @transform_6, window_bounds = array<i64: 1, 64, 512>}]} {
    %c0 = arith.constant 0 : index
    %c0_0 = arith.constant 0 : index
    %c0_1 = arith.constant 0 : index
    %0 = vector.load %arg1[%c0, %c0_0, %c0_1] : memref<1x64x512xf32, #tpu.memory_space<vmem>>, vector<1x64x512xf32>
    %1 = vector.shape_cast %0 : vector<1x64x512xf32> to vector<64x512xf32>
    %c0_2 = arith.constant 0 : index
    %c0_3 = arith.constant 0 : index
    %2 = vector.load %arg2[%c0_2, %c0_3] : memref<64x64xf32, #tpu.memory_space<vmem>>, vector<64x64xf32>
    %cst = arith.constant dense<0.000000e+00> : vector<64xf32>
    %3 = vector.multi_reduction <add>, %1, %cst [1] : vector<64x512xf32> to vector<64xf32>
    %4 = vector.shape_cast %3 : vector<64xf32> to vector<64x1xf32>
    %5 = arith.mulf %1, %1 : vector<64x512xf32>
    %cst_4 = arith.constant dense<0.000000e+00> : vector<64xf32>
    %6 = vector.multi_reduction <add>, %5, %cst_4 [1] : vector<64x512xf32> to vector<64xf32>
    %7 = vector.shape_cast %6 : vector<64xf32> to vector<64x1xf32>
    %cst_5 = arith.constant dense<0.000000e+00> : vector<64x1xf32>
    %8 = tpu.matmul %2, %4, %cst_5 {dimension_numbers = #tpu.dot_dimension_numbers<[1], [0], [0], [1], [0, 0, 1, 1], [], []>} : vector<64x64xf32>, vector<64x1xf32>, vector<64x1xf32> -> vector<64x1xf32>
    %cst_6 = arith.constant dense<0.000000e+00> : vector<64x1xf32>
    %9 = tpu.matmul %2, %7, %cst_6 {dimension_numbers = #tpu.dot_dimension_numbers<[1], [0], [0], [1], [0, 0, 1, 1], [], []>} : vector<64x64xf32>, vector<64x1xf32>, vector<64x1xf32> -> vector<64x1xf32>
    %10 = arith.mulf %8, %8 : vector<64x1xf32>
    %11 = arith.subf %9, %10 : vector<64x1xf32>
    %cst_7 = arith.constant 0.000000e+00 : f32
    %12 = vector.broadcast %cst_7 : f32 to vector<64x1xf32>
    %13 = arith.maximumf %11, %12 : vector<64x1xf32>
    %14 = vector.broadcast %8 : vector<64x1xf32> to vector<64x512xf32>
    %15 = arith.subf %1, %14 : vector<64x512xf32>
    %cst_8 = arith.constant 9.99999974E-6 : f32
    %16 = vector.broadcast %cst_8 : f32 to vector<64x1xf32>
    %17 = arith.addf %13, %16 : vector<64x1xf32>
    %18 = math.rsqrt %17 : vector<64x1xf32>
    %19 = vector.broadcast %18 : vector<64x1xf32> to vector<64x512xf32>
    %20 = arith.mulf %15, %19 : vector<64x512xf32>
    %21 = arith.truncf %20 : vector<64x512xf32> to vector<64x512xbf16>
    %c0_9 = arith.constant 0 : index
    %c0_10 = arith.constant 0 : index
    %22 = vector.load %arg3[%c0_9, %c0_10] : memref<192x64xbf16, #tpu.memory_space<vmem>>, vector<192x64xbf16>
    %cst_11 = arith.constant dense<0.000000e+00> : vector<192x512xf32>
    %23 = tpu.matmul %22, %21, %cst_11 {dimension_numbers = #tpu.dot_dimension_numbers<[1], [0], [0], [1], [0, 0, 1, 1], [], []>} : vector<192x64xbf16>, vector<64x512xbf16>, vector<192x512xf32> -> vector<192x512xf32>
    %c0_12 = arith.constant 0 : index
    %c0_13 = arith.constant 0 : index
    %24 = vector.load %arg4[%c0_12, %c0_13] : memref<192x1xf32, #tpu.memory_space<vmem>>, vector<192x1xf32>
    %25 = vector.broadcast %24 : vector<192x1xf32> to vector<192x512xf32>
    %26 = arith.addf %23, %25 : vector<192x512xf32>
    %27 = arith.truncf %26 : vector<192x512xf32> to vector<192x512xbf16>
    %28 = vector.extract_strided_slice %27 {offsets = [0, 0], sizes = [64, 512], strides = [1, 1]} : vector<192x512xbf16> to vector<64x512xbf16>
    %29 = vector.extract_strided_slice %27 {offsets = [64, 0], sizes = [64, 512], strides = [1, 1]} : vector<192x512xbf16> to vector<64x512xbf16>
    %30 = vector.extract_strided_slice %27 {offsets = [128, 0], sizes = [64, 512], strides = [1, 1]} : vector<192x512xbf16> to vector<64x512xbf16>
    %cst_14 = arith.constant dense<0.000000e+00> : vector<512x512xf32>
    %31 = tpu.matmul %28, %29, %cst_14 {dimension_numbers = #tpu.dot_dimension_numbers<[0], [0], [1], [1], [0, 1, 1, 1], [], []>} : vector<64x512xbf16>, vector<64x512xbf16>, vector<512x512xf32> -> vector<512x512xf32>
    %cst_15 = arith.constant dense<0xFF800000> : vector<512xf32>
    %32 = vector.multi_reduction <maximumf>, %31, %cst_15 [1] : vector<512x512xf32> to vector<512xf32>
    %33 = vector.shape_cast %32 : vector<512xf32> to vector<512x1xf32>
    %34 = vector.broadcast %33 : vector<512x1xf32> to vector<512x512xf32>
    %35 = arith.subf %31, %34 : vector<512x512xf32>
    %36 = math.exp %35 : vector<512x512xf32>
    %37 = arith.truncf %36 : vector<512x512xf32> to vector<512x512xbf16>
    %cst_16 = arith.constant dense<0.000000e+00> : vector<64x512xf32>
    %38 = tpu.matmul %30, %37, %cst_16 {dimension_numbers = #tpu.dot_dimension_numbers<[1], [1], [0], [0], [0, 0, 1, 0], [], []>} : vector<64x512xbf16>, vector<512x512xbf16>, vector<64x512xf32> -> vector<64x512xf32>
    %cst_17 = arith.constant 1.000000e+00 : bf16
    %39 = vector.broadcast %cst_17 : bf16 to vector<1x512xbf16>
    %cst_18 = arith.constant dense<0.000000e+00> : vector<1x512xf32>
    %40 = tpu.matmul %39, %37, %cst_18 {dimension_numbers = #tpu.dot_dimension_numbers<[1], [1], [0], [0], [0, 0, 1, 0], [], []>} : vector<1x512xbf16>, vector<512x512xbf16>, vector<1x512xf32> -> vector<1x512xf32>
    %41 = tpu.reciprocal %40 {approx = true} : vector<1x512xf32> -> vector<1x512xf32>
    %42 = vector.broadcast %41 : vector<1x512xf32> to vector<64x512xf32>
    %43 = arith.mulf %38, %42 : vector<64x512xf32>
    %c0_19 = arith.constant 0 : index
    %c0_20 = arith.constant 0 : index
    %44 = vector.load %arg5[%c0_19, %c0_20] : memref<64x64xbf16, #tpu.memory_space<vmem>>, vector<64x64xbf16>
    %45 = arith.truncf %43 : vector<64x512xf32> to vector<64x512xbf16>
    %cst_21 = arith.constant dense<0.000000e+00> : vector<64x512xf32>
    %46 = tpu.matmul %44, %45, %cst_21 {dimension_numbers = #tpu.dot_dimension_numbers<[1], [0], [0], [1], [0, 0, 1, 1], [], []>} : vector<64x64xbf16>, vector<64x512xbf16>, vector<64x512xf32> -> vector<64x512xf32>
    %c0_22 = arith.constant 0 : index
    %c0_23 = arith.constant 0 : index
    %47 = vector.load %arg6[%c0_22, %c0_23] : memref<64x1xf32, #tpu.memory_space<vmem>>, vector<64x1xf32>
    %48 = vector.broadcast %47 : vector<64x1xf32> to vector<64x512xf32>
    %49 = arith.addf %46, %48 : vector<64x512xf32>
    %50 = arith.addf %49, %1 : vector<64x512xf32>
    %c0_24 = arith.constant 0 : index
    %c0_25 = arith.constant 0 : index
    %c0_26 = arith.constant 0 : index
    %51 = vector.load %arg7[%c0_24, %c0_25, %c0_26] : memref<1x64x512xf32, #tpu.memory_space<vmem>>, vector<1x64x512xf32>
    %52 = vector.shape_cast %51 : vector<1x64x512xf32> to vector<64x512xf32>
    %53 = vector.shape_cast %50 : vector<64x512xf32> to vector<1x64x512xf32>
    tpu.vector_store %arg7[%c0_24, %c0_25, %c0_26], %53 {strides = array<i32>} : memref<1x64x512xf32, #tpu.memory_space<vmem>>, vector<1x64x512xf32>,
    return
  }
  func.func @transform_0(%arg0: i32) -> (i32, i32, i32) {
    %c0_i32 = arith.constant 0 : i32
    %c0_i32_0 = arith.constant 0 : i32
    %c0_i32_1 = arith.constant 0 : i32
    return %arg0, %c0_i32, %c0_i32_0 : i32, i32, i32
  }
  func.func @transform_1(%arg0: i32) -> (i32, i32) {
    %c0_i32 = arith.constant 0 : i32
    %c0_i32_0 = arith.constant 0 : i32
    %c0_i32_1 = arith.constant 0 : i32
    return %c0_i32, %c0_i32_0 : i32, i32
  }
  func.func @transform_2(%arg0: i32) -> (i32, i32) {
    %c0_i32 = arith.constant 0 : i32
    %c0_i32_0 = arith.constant 0 : i32
    %c0_i32_1 = arith.constant 0 : i32
    return %c0_i32, %c0_i32_0 : i32, i32
  }
  func.func @transform_3(%arg0: i32) -> (i32, i32) {
    %c0_i32 = arith.constant 0 : i32
    %c0_i32_0 = arith.constant 0 : i32
    %c0_i32_1 = arith.constant 0 : i32
    return %c0_i32, %c0_i32_0 : i32, i32
  }
  func.func @transform_4(%arg0: i32) -> (i32, i32) {
    %c0_i32 = arith.constant 0 : i32
    %c0_i32_0 = arith.constant 0 : i32
    %c0_i32_1 = arith.constant 0 : i32
    return %c0_i32, %c0_i32_0 : i32, i32
  }
  func.func @transform_5(%arg0: i32) -> (i32, i32) {
    %c0_i32 = arith.constant 0 : i32
    %c0_i32_0 = arith.constant 0 : i32
    %c0_i32_1 = arith.constant 0 : i32
    return %c0_i32, %c0_i32_0 : i32, i32
  }
  func.func @transform_6(%arg0: i32) -> (i32, i32, i32) {
    %c0_i32 = arith.constant 0 : i32
    %c0_i32_0 = arith.constant 0 : i32
    %c0_i32_1 = arith.constant 0 : i32
    return %arg0, %c0_i32, %c0_i32_0 : i32, i32, i32
  }
}

</mosaic_0001>

<llo_original>
// kernel: mul.6
$region0: #{mul.6}
  #allocation0 [shape = 's32[1]{0}', space=sflag, size = 0x4, scoped, tag = 'scoped memory for mul.6']
  %s0 = inlined_call_operand.vmem [shape: f32[192], index: 0, kind: input, shape index: {}]
  %s1 = inlined_call_operand.vmem [shape: f32[192], index: 1, kind: input, shape index: {}]
  %s2 = inlined_call_operand.vmem [shape: f32[192], index: 2, kind: output, shape index: {}]
  %v3 = vld [vmem:[%s0] sm:$0x3]
  %v4 = vld [vmem:[%s1] sm:$0x3]
  %5 = xla_tuple %v3, %v4
  %6 = xla_tuple %5
  %v7 = vmul.f32 %v3, %v4
  %8 = xla_tuple %v7
  %9 = vst [vmem:[%s2] sm:$0x3] %v7

// kernel: self_attention_forward.1
$region0: #{self_attention_forward.1}
  #allocation0 [shape = 'u32[]', space=smem, size = 0x4, offset = 0x4, fixed_abs, tag = 'smem constant byte address 0x4 - core index']
  #allocation1 [shape = 'u32[144,128]{1,0:T(1,128)}', space=vmem, size = 0x12000, scoped, tag = 'internal scratch']
  %s0 = inlined_call_operand.vmem [shape: f32[2,64,512], index: 0, kind: input, shape index: {}]
  %s1 = inlined_call_operand.vmem [shape: f32[64,64], index: 1, kind: input, shape index: {}]
  %s2 = inlined_call_operand.vmem [shape: bf16[192,64], index: 2, kind: input, shape index: {}]
  %s3 = inlined_call_operand.vmem [shape: f32[192,1], index: 3, kind: input, shape index: {}]
  %s4 = inlined_call_operand.vmem [shape: bf16[64,64], index: 4, kind: input, shape index: {}]
  %s5 = inlined_call_operand.vmem [shape: f32[64,1], index: 5, kind: input, shape index: {}]
  %s6 = inlined_call_operand.vmem [shape: f32[2,64,512], index: 6, kind: output, shape index: {}]
  %s7 = sld [smem:[#allocation0]]
  $region57: #{self_attention_forward.1} parent=0
    _
  %s9 = ssub.s32 1, %s7
  %s10 = scalar_select 0, %s9, %s7
  loop: start=0, step=1, limit=4
  $region2: #{self_attention_forward.1} parent=0 // loop_pre_header
    _
  $region3: #{self_attention_forward.1} parent=0 // loop_header
    %s12 = sphi 0, %s16
    %p13 = scmp.ge.s32.totalorder %s12, 4
    %s22 = sphi 0, %s24
    %s25 = sphi 0, %s22
    %s26 = sphi 0, %s25
    %s42 = sphi 0, %s26
    %s46 = sphi 0, %s46
    %s48 = sphi 0, %s46
    %s49 = sphi 0, %s48
    %s63 = sphi 0, %s49
    %s67 = sphi 0, %s67
    %s69 = sphi 0, %s67
    %s70 = sphi 0, %s69
    %s84 = sphi 0, %s70
    %s88 = sphi 0, %s88
    %s90 = sphi 0, %s88
    %s91 = sphi 0, %s90
    %s105 = sphi 0, %s91
    %s109 = sphi 0, %s109
    %s111 = sphi 0, %s109
    %s112 = sphi 0, %s111
    %s126 = sphi 0, %s112
    %s130 = sphi 0, %s130
    %s132 = sphi 0, %s130
    %s133 = sphi 0, %s132
    %s147 = sphi 0, %s133
    %s153 = sphi 0, %s155
    %s156 = sphi 0, %s153
    %s157 = sphi 0, %s156
    %s173 = sphi 0, %s157
  $region4: #{self_attention_forward.1} parent=0 // loop_header_branch
    %15 = sbr.rel (%p13) target = $region8
  $region5: #{self_attention_forward.1} parent=0 // loop_body
    %s17 = ssub.s32 %s12, 1
    %s18 = ssub.s32 %s12, 2
    %s19 = sadd.s32 %s12, 1
    %s20 = ssub.s32 %s12, %s19
    %p21 = scmp.eq.s32.totalorder %s20, 0
    %s23 = sadd.s32 %s22, 1
    %s24 = scalar_select %p21, %s22, %s23
    %p27 = pneg %p21
    %p28 = scmp.eq.s32.totalorder %s12, 1
    %p29 = por %p27, %p28
    %p30 = scmp.ne.s32.totalorder %s22, %s25
    %p31 = scmp.eq.s32.totalorder %s12, 0
    %p32 = por %p30, %p31
    %p33 = scmp.ne.s32.totalorder %s22, %s25
    %p34 = scmp.eq.s32.totalorder %s17, 1
    %p35 = por %p33, %p34
    %p36 = scmp.ne.s32.totalorder %s25, %s26
    %p37 = scmp.eq.s32.totalorder %s17, 0
    %p38 = por %p36, %p37
    %p39 = scmp.ne.s32.totalorder %s25, %s26
    %p40 = scmp.eq.s32.totalorder %s18, 1
    %p41 = por %p39, %p40
    %p43 = scmp.ne.s32.totalorder %s26, %s42
    %p44 = scmp.eq.s32.totalorder %s18, 0
    %p45 = por %p43, %p44
    %s47 = sadd.s32 %s46, 1
    %p50 = scmp.eq.s32.totalorder %s12, 1
    %p51 = scmp.ne.s32.totalorder %s46, %s48
    %p52 = scmp.eq.s32.totalorder %s12, 0
    %p53 = por %p51, %p52
    %p54 = scmp.ne.s32.totalorder %s46, %s48
    %p55 = scmp.eq.s32.totalorder %s17, 1
    %p56 = por %p54, %p55
    %p57 = scmp.ne.s32.totalorder %s48, %s49
    %p58 = scmp.eq.s32.totalorder %s17, 0
    %p59 = por %p57, %p58
    %p60 = scmp.ne.s32.totalorder %s48, %s49
    %p61 = scmp.eq.s32.totalorder %s18, 1
    %p62 = por %p60, %p61
    %p64 = scmp.ne.s32.totalorder %s49, %s63
    %p65 = scmp.eq.s32.totalorder %s18, 0
    %p66 = por %p64, %p65
    %s68 = sadd.s32 %s67, 1
    %p71 = scmp.eq.s32.totalorder %s12, 1
    %p72 = scmp.ne.s32.totalorder %s67, %s69
    %p73 = scmp.eq.s32.totalorder %s12, 0
    %p74 = por %p72, %p73
    %p75 = scmp.ne.s32.totalorder %s67, %s69
    %p76 = scmp.eq.s32.totalorder %s17, 1
    %p77 = por %p75, %p76
    %p78 = scmp.ne.s32.totalorder %s69, %s70
    %p79 = scmp.eq.s32.totalorder %s17, 0
    %p80 = por %p78, %p79
    %p81 = scmp.ne.s32.totalorder %s69, %s70
    %p82 = scmp.eq.s32.totalorder %s18, 1
    %p83 = por %p81, %p82
    %p85 = scmp.ne.s32.totalorder %s70, %s84
    %p86 = scmp.eq.s32.totalorder %s18, 0
    %p87 = por %p85, %p86
    %s89 = sadd.s32 %s88, 1
    %p92 = scmp.eq.s32.totalorder %s12, 1
    %p93 = scmp.ne.s32.totalorder %s88, %s90
    %p94 = scmp.eq.s32.totalorder %s12, 0
    %p95 = por %p93, %p94
    %p96 = scmp.ne.s32.totalorder %s88, %s90
    %p97 = scmp.eq.s32.totalorder %s17, 1
    %p98 = por %p96, %p97
    %p99 = scmp.ne.s32.totalorder %s90, %s91
    %p100 = scmp.eq.s32.totalorder %s17, 0
    %p101 = por %p99, %p100
    %p102 = scmp.ne.s32.totalorder %s90, %s91
    %p103 = scmp.eq.s32.totalorder %s18, 1
    %p104 = por %p102, %p103
    %p106 = scmp.ne.s32.totalorder %s91, %s105
    %p107 = scmp.eq.s32.totalorder %s18, 0
    %p108 = por %p106, %p107
    %s110 = sadd.s32 %s109, 1
    %p113 = scmp.eq.s32.totalorder %s12, 1
    %p114 = scmp.ne.s32.totalorder %s109, %s111
    %p115 = scmp.eq.s32.totalorder %s12, 0
    %p116 = por %p114, %p115
    %p117 = scmp.ne.s32.totalorder %s109, %s111
    %p118 = scmp.eq.s32.totalorder %s17, 1
    %p119 = por %p117, %p118
    %p120 = scmp.ne.s32.totalorder %s111, %s112
    %p121 = scmp.eq.s32.totalorder %s17, 0
    %p122 = por %p120, %p121
    %p123 = scmp.ne.s32.totalorder %s111, %s112
    %p124 = scmp.eq.s32.totalorder %s18, 1
    %p125 = por %p123, %p124
    %p127 = scmp.ne.s32.totalorder %s112, %s126
    %p128 = scmp.eq.s32.totalorder %s18, 0
    %p129 = por %p127, %p128
    %s131 = sadd.s32 %s130, 1
    %p134 = scmp.eq.s32.totalorder %s12, 1
    %p135 = scmp.ne.s32.totalorder %s130, %s132
    %p136 = scmp.eq.s32.totalorder %s12, 0
    %p137 = por %p135, %p136
    %p138 = scmp.ne.s32.totalorder %s130, %s132
    %p139 = scmp.eq.s32.totalorder %s17, 1
    %p140 = por %p138, %p139
    %p141 = scmp.ne.s32.totalorder %s132, %s133
    %p142 = scmp.eq.s32.totalorder %s17, 0
    %p143 = por %p141, %p142
    %p144 = scmp.ne.s32.totalorder %s132, %s133
    %p145 = scmp.eq.s32.totalorder %s18, 1
    %p146 = por %p144, %p145
    %p148 = scmp.ne.s32.totalorder %s133, %s147
    %p149 = scmp.eq.s32.totalorder %s18, 0
    %p150 = por %p148, %p149
    %s151 = ssub.s32 %s12, %s19
    %p152 = scmp.eq.s32.totalorder %s151, 0
    %s154 = sadd.s32 %s153, 1
    %s155 = scalar_select %p152, %s153, %s154
    %p158 = pneg %p152
    %p159 = scmp.eq.s32.totalorder %s12, 1
    %p160 = por %p158, %p159
    %p161 = scmp.ne.s32.totalorder %s153, %s156
    %p162 = scmp.eq.s32.totalorder %s12, 0
    %p163 = por %p161, %p162
    %p164 = scmp.ne.s32.totalorder %s153, %s156
    %p165 = scmp.eq.s32.totalorder %s17, 1
    %p166 = por %p164, %p165
    %p167 = scmp.ne.s32.totalorder %s156, %s157
    %p168 = scmp.eq.s32.totalorder %s17, 0
    %p169 = por %p167, %p168
    %p170 = scmp.ne.s32.totalorder %s156, %s157
    %p171 = scmp.eq.s32.totalorder %s18, 1
    %p172 = por %p170, %p171
    %p174 = scmp.ne.s32.totalorder %s157, %s173
    %p175 = scmp.eq.s32.totalorder %s18, 0
    %p176 = por %p174, %p175
    %p177 = scmp.le.s32.totalorder 1, %s12
    %p178 = scmp.lt.s32.totalorder %s12, 3
    %p179 = pnand %p177, %p178
    %p180 = pneg %p179
    // Predicated region
    $region9: #{self_attention_forward.1} parent=5 // pred_check
      _
    $region10: #{self_attention_forward.1} parent=5 // pred_check_branch
      %182 = sbr.rel (%p179) target = $region12
    $region11: #{self_attention_forward.1} parent=5 // pred_region
      %s183 = ssub.s32 %s12, 1
      // Predicated region
      $region13: #{self_attention_forward.1} parent=11 // pred_check
        %p184 = pneg %p59
      $region14: #{self_attention_forward.1} parent=11 // pred_check_branch
        %186 = sbr.rel (%p184) target = $region16
      $region15: #{self_attention_forward.1} parent=11 // pred_region
        _
      $region16: #{self_attention_forward.1} parent=11 // pred_fallthru
        _
      // Predicated region
      $region17: #{self_attention_forward.1} parent=11 // pred_check
        %p187 = pneg %p80
      $region18: #{self_attention_forward.1} parent=11 // pred_check_branch
        %189 = sbr.rel (%p187) target = $region20
      $region19: #{self_attention_forward.1} parent=11 // pred_region
        _
      $region20: #{self_attention_forward.1} parent=11 // pred_fallthru
        _
      // Predicated region
      $region21: #{self_attention_forward.1} parent=11 // pred_check
        %p190 = pneg %p101
      $region22: #{self_attention_forward.1} parent=11 // pred_check_branch
        %192 = sbr.rel (%p190) target = $region24
      $region23: #{self_attention_forward.1} parent=11 // pred_region
        _
      $region24: #{self_attention_forward.1} parent=11 // pred_fallthru
        _
      // Predicated region
      $region25: #{self_attention_forward.1} parent=11 // pred_check
        %p193 = pneg %p122
      $region26: #{self_attention_forward.1} parent=11 // pred_check_branch
        %195 = sbr.rel (%p193) target = $region28
      $region27: #{self_attention_forward.1} parent=11 // pred_region
        _
      $region28: #{self_attention_forward.1} parent=11 // pred_fallthru
        _
      // Predicated region
      $region29: #{self_attention_forward.1} parent=11 // pred_check
        %p196 = pneg %p143
      $region30: #{self_attention_forward.1} parent=11 // pred_check_branch
        %198 = sbr.rel (%p196) target = $region32
      $region31: #{self_attention_forward.1} parent=11 // pred_region
        _
      $region32: #{self_attention_forward.1} parent=11 // pred_fallthru
        _
    $region12: #{self_attention_forward.1} parent=5 // pred_fallthru
      _
    %p199 = scmp.lt.s32.totalorder %s12, 2
    // Predicated region
    $region33: #{self_attention_forward.1} parent=5 // pred_check
      %p200 = pneg %p199
    $region34: #{self_attention_forward.1} parent=5 // pred_check_branch
      %202 = sbr.rel (%p200) target = $region36
    $region35: #{self_attention_forward.1} parent=5 // pred_region
      // Predicated region
      $region37: #{self_attention_forward.1} parent=35 // pred_check
        %p203 = pneg %p32
      $region38: #{self_attention_forward.1} parent=35 // pred_check_branch
        %205 = sbr.rel (%p203) target = $region40
      $region39: #{self_attention_forward.1} parent=35 // pred_region
        %p206 = scmp.lt.s32.totalorder %s12, 1
        %s207 = scalar_select %p206, %s12, 1
        %s208 = smul.addr %s207, 32
        %s209 = smul.addr %s208, 8
        %s210 = scalar_lea.vmem %s0, %s209
      $region40: #{self_attention_forward.1} parent=35 // pred_fallthru
        _
    $region36: #{self_attention_forward.1} parent=5 // pred_fallthru
      _
    %p211 = scmp.le.s32.totalorder 1, %s12
    %p212 = scmp.lt.s32.totalorder %s12, 3
    %p213 = pnand %p211, %p212
    %p214 = pneg %p213
    // Predicated region
    $region41: #{self_attention_forward.1} parent=5 // pred_check
      _
    $region42: #{self_attention_forward.1} parent=5 // pred_check_branch
      %216 = sbr.rel (%p213) target = $region44
    $region43: #{self_attention_forward.1} parent=5 // pred_region
      %s217 = ssub.s32 %s12, 1
      %p218 = scmp.lt.s32.totalorder %s17, 1
      %s219 = scalar_select %p218, %s17, 1
      %s220 = smul.addr %s219, 32
      %s221 = smul.addr %s220, 8
      %s222 = scalar_lea.vmem %s0, %s221
      %p223 = pneg %p38
      %p224 = pneg %p35
      %p225 = pneg %p59
      %p226 = pneg %p56
      %p227 = pneg %p80
      %p228 = pneg %p77
      %p229 = pneg %p101
      %p230 = pneg %p98
      %p231 = pneg %p122
      %p232 = pneg %p119
      %p233 = pneg %p143
      %p234 = pneg %p140
      %p235 = pneg %p169
      %p236 = pneg %p166
      %p237 = scmp.lt.s32.totalorder %s17, 1
      %s238 = scalar_select %p237, %s17, 1
      %s239 = smul.addr %s238, 32
      %s240 = smul.addr %s239, 8
      %s241 = scalar_lea.vmem %s6, %s240
      %p242 = scmp.lt.s32.totalorder %s17, 1
      %s243 = scalar_select %p242, %s17, 1
      %s244 = smul.addr %s243, 32
      %s245 = smul.addr %s244, 8
      %s246 = scalar_lea.vmem %s0, %s245
      %p247 = scmp.lt.s32.totalorder %s17, 1
      %s248 = scalar_select %p247, %s17, 1
      %s249 = smul.addr %s248, 32
      %s250 = smul.addr %s249, 8
      %s251 = scalar_lea.vmem %s6, %s250
      %v254 = vld [vmem:[%s246] sm:$0xff]
      %v255 = vld [vmem:[%s246 + $0x8] sm:$0xff]
      %v256 = vld [vmem:[%s246 + $0x10] sm:$0xff]
      %v257 = vld [vmem:[%s246 + $0x18] sm:$0xff]
      %v258 = vld [vmem:[%s246 + $0x20] sm:$0xff]
      %v259 = vld [vmem:[%s246 + $0x28] sm:$0xff]
      %v260 = vld [vmem:[%s246 + $0x30] sm:$0xff]
      %v261 = vld [vmem:[%s246 + $0x38] sm:$0xff]
      %v262 = vld [vmem:[%s246 + $0x40] sm:$0xff]
      %v263 = vld [vmem:[%s246 + $0x48] sm:$0xff]
      %v264 = vld [vmem:[%s246 + $0x50] sm:$0xff]
      %v265 = vld [vmem:[%s246 + $0x58] sm:$0xff]
      %v266 = vld [vmem:[%s246 + $0x60] sm:$0xff]
      %v267 = vld [vmem:[%s246 + $0x68] sm:$0xff]
      %v268 = vld [vmem:[%s246 + $0x70] sm:$0xff]
      %v269 = vld [vmem:[%s246 + $0x78] sm:$0xff]
      %v270 = vld [vmem:[%s246 + $0x80] sm:$0xff]
      %v271 = vld [vmem:[%s246 + $0x88] sm:$0xff]
      %v272 = vld [vmem:[%s246 + $0x90] sm:$0xff]
      %v273 = vld [vmem:[%s246 + $0x98] sm:$0xff]
      %v274 = vld [vmem:[%s246 + $0xa0] sm:$0xff]
      %v275 = vld [vmem:[%s246 + $0xa8] sm:$0xff]
      %v276 = vld [vmem:[%s246 + $0xb0] sm:$0xff]
      %v277 = vld [vmem:[%s246 + $0xb8] sm:$0xff]
      %v278 = vld [vmem:[%s246 + $0xc0] sm:$0xff]
      %v279 = vld [vmem:[%s246 + $0xc8] sm:$0xff]
      %v280 = vld [vmem:[%s246 + $0xd0] sm:$0xff]
      %v281 = vld [vmem:[%s246 + $0xd8] sm:$0xff]
      %v282 = vld [vmem:[%s246 + $0xe0] sm:$0xff]
      %v283 = vld [vmem:[%s246 + $0xe8] sm:$0xff]
      %v284 = vld [vmem:[%s246 + $0xf0] sm:$0xff]
      %v285 = vld [vmem:[%s246 + $0xf8] sm:$0xff]
      %v286 = vld [vmem:[%s1] sm:$0xff]
      %v287 = vld [vmem:[%s1 + $0x8] sm:$0xff]
      %v288 = vld [vmem:[%s1 + $0x10] sm:$0xff]
      %v289 = vld [vmem:[%s1 + $0x18] sm:$0xff]
      %v290 = vld [vmem:[%s1 + $0x20] sm:$0xff]
      %v291 = vld [vmem:[%s1 + $0x28] sm:$0xff]
      %v292 = vld [vmem:[%s1 + $0x30] sm:$0xff]
      %v293 = vld [vmem:[%s1 + $0x38] sm:$0xff]
      %v294 = vadd.f32 %v254, %v255
      %v295 = vadd.f32 %v294, %v256
      %v296 = vadd.f32 %v295, %v257
      %297 = vadd.xlane.f32.xlu0 %v296
      %v298 = vpop.xlane.xlu0 %297
      %v299 = vadd.f32 %v258, %v259
      %v300 = vadd.f32 %v299, %v260
      %v301 = vadd.f32 %v300, %v261
      %302 = vadd.xlane.f32.xlu0 %v301
      %v303 = vpop.xlane.xlu0 %302
      %v304 = vadd.f32 %v262, %v263
      %v305 = vadd.f32 %v304, %v264
      %v306 = vadd.f32 %v305, %v265
      %307 = vadd.xlane.f32.xlu0 %v306
      %v308 = vpop.xlane.xlu0 %307
      %v309 = vadd.f32 %v266, %v267
      %v310 = vadd.f32 %v309, %v268
      %v311 = vadd.f32 %v310, %v269
      %312 = vadd.xlane.f32.xlu0 %v311
      %v313 = vpop.xlane.xlu0 %312
      %v314 = vadd.f32 %v270, %v271
      %v315 = vadd.f32 %v314, %v272
      %v316 = vadd.f32 %v315, %v273
      %317 = vadd.xlane.f32.xlu0 %v316
      %v318 = vpop.xlane.xlu0 %317
      %v319 = vadd.f32 %v274, %v275
      %v320 = vadd.f32 %v319, %v276
      %v321 = vadd.f32 %v320, %v277
      %322 = vadd.xlane.f32.xlu0 %v321
      %v323 = vpop.xlane.xlu0 %322
      %v324 = vadd.f32 %v278, %v279
      %v325 = vadd.f32 %v324, %v280
      %v326 = vadd.f32 %v325, %v281
      %327 = vadd.xlane.f32.xlu0 %v326
      %v328 = vpop.xlane.xlu0 %327
      %v329 = vadd.f32 %v282, %v283
      %v330 = vadd.f32 %v329, %v284
      %v331 = vadd.f32 %v330, %v285
      %332 = vadd.xlane.f32.xlu0 %v331
      %v333 = vpop.xlane.xlu0 %332
      %v334 = vmul.f32 %v254, %v254
      %v335 = vmul.f32 %v255, %v255
      %v336 = vmul.f32 %v256, %v256
      %v337 = vmul.f32 %v257, %v257
      %v338 = vmul.f32 %v258, %v258
      %v339 = vmul.f32 %v259, %v259
      %v340 = vmul.f32 %v260, %v260
      %v341 = vmul.f32 %v261, %v261
      %v342 = vmul.f32 %v262, %v262
      %v343 = vmul.f32 %v263, %v263
      %v344 = vmul.f32 %v264, %v264
      %v345 = vmul.f32 %v265, %v265
      %v346 = vmul.f32 %v266, %v266
      %v347 = vmul.f32 %v267, %v267
      %v348 = vmul.f32 %v268, %v268
      %v349 = vmul.f32 %v269, %v269
      %v350 = vmul.f32 %v270, %v270
      %v351 = vmul.f32 %v271, %v271
      %v352 = vmul.f32 %v272, %v272
      %v353 = vmul.f32 %v273, %v273
      %v354 = vmul.f32 %v274, %v274
      %v355 = vmul.f32 %v275, %v275
      %v356 = vmul.f32 %v276, %v276
      %v357 = vmul.f32 %v277, %v277
      %v358 = vmul.f32 %v278, %v278
      %v359 = vmul.f32 %v279, %v279
      %v360 = vmul.f32 %v280, %v280
      %v361 = vmul.f32 %v281, %v281
      %v362 = vmul.f32 %v282, %v282
      %v363 = vmul.f32 %v283, %v283
      %v364 = vmul.f32 %v284, %v284
      %v365 = vmul.f32 %v285, %v285
      %v366 = vadd.f32 %v334, %v335
      %v367 = vadd.f32 %v366, %v336
      %v368 = vadd.f32 %v367, %v337
      %369 = vadd.xlane.f32.xlu0 %v368
      %v370 = vpop.xlane.xlu0 %369
      %v371 = vadd.f32 %v338, %v339
      %v372 = vadd.f32 %v371, %v340
      %v373 = vadd.f32 %v372, %v341
      %374 = vadd.xlane.f32.xlu0 %v373
      %v375 = vpop.xlane.xlu0 %374
      %v376 = vadd.f32 %v342, %v343
      %v377 = vadd.f32 %v376, %v344
      %v378 = vadd.f32 %v377, %v345
      %379 = vadd.xlane.f32.xlu0 %v378
      %v380 = vpop.xlane.xlu0 %379
      %v381 = vadd.f32 %v346, %v347
      %v382 = vadd.f32 %v381, %v348
      %v383 = vadd.f32 %v382, %v349
      %384 = vadd.xlane.f32.xlu0 %v383
      %v385 = vpop.xlane.xlu0 %384
      %v386 = vadd.f32 %v350, %v351
      %v387 = vadd.f32 %v386, %v352
      %v388 = vadd.f32 %v387, %v353
      %389 = vadd.xlane.f32.xlu0 %v388
      %v390 = vpop.xlane.xlu0 %389
      %v391 = vadd.f32 %v354, %v355
      %v392 = vadd.f32 %v391, %v356
      %v393 = vadd.f32 %v392, %v357
      %394 = vadd.xlane.f32.xlu0 %v393
      %v395 = vpop.xlane.xlu0 %394
      %v396 = vadd.f32 %v358, %v359
      %v397 = vadd.f32 %v396, %v360
      %v398 = vadd.f32 %v397, %v361
      %399 = vadd.xlane.f32.xlu0 %v398
      %v400 = vpop.xlane.xlu0 %399
      %v401 = vadd.f32 %v362, %v363
      %v402 = vadd.f32 %v401, %v364
      %v403 = vadd.f32 %v402, %v365
      %404 = vadd.xlane.f32.xlu0 %v403
      %v405 = vpop.xlane.xlu0 %404
      %vm406 = vcmask 523264
      %v408 = vsel %vm406, %v286, 0
      %v411 = vsel %vm406, %v287, 0
      %v414 = vsel %vm406, %v288, 0
      %v417 = vsel %vm406, %v289, 0
      %v420 = vsel %vm406, %v290, 0
      %v423 = vsel %vm406, %v291, 0
      %v426 = vsel %vm406, %v292, 0
      %v429 = vsel %vm406, %v293, 0
      %431 = vmatprep.subr.mxu0 0.0
      %432 = vmatpush1.msra.mxu0 %v298
      %433 = vmatprep.subr.mxu0 0.0
      %434 = vmatpush1.msra.mxu0 %v303
      %435 = vmatprep.subr.mxu0 0.0
      %436 = vmatpush1.msra.mxu0 %v308
      %437 = vmatprep.subr.mxu0 0.0
      %438 = vmatpush1.msra.mxu0 %v313
      %439 = vmatprep.subr.mxu0 0.0
      %440 = vmatpush1.msra.mxu0 %v318
      %441 = vmatprep.subr.mxu0 0.0
      %442 = vmatpush1.msra.mxu0 %v323
      %443 = vmatprep.subr.mxu0 0.0
      %444 = vmatpush1.msra.mxu0 %v328
      %445 = vmatprep.subr.mxu0 0.0
      %446 = vmatpush1.msra.mxu0 %v333
      %447 = vmatprep.subr.mxu0 0.0
      %448 = vmatpush1.msra.mxu0 0.0
      %449 = vmatprep.subr.mxu0 0.0
      %450 = vmatpush1.msra.mxu0 0.0
      %451 = vmatprep.subr.mxu0 0.0
      %452 = vmatpush1.msra.mxu0 0.0
      %453 = vmatprep.subr.mxu0 0.0
      %454 = vmatpush1.msra.mxu0 0.0
      %455 = vmatprep.subr.mxu0 0.0
      %456 = vmatpush1.msra.mxu0 0.0
      %457 = vmatprep.subr.mxu0 0.0
      %458 = vmatpush1.msra.mxu0 0.0
      %459 = vmatprep.subr.mxu0 0.0
      %460 = vmatpush1.msra.mxu0 0.0
      %461 = vmatprep.subr.mxu0 0.0
      %462 = vmatpush1.msra.mxu0 0.0
      %463 = vmatprep.subr.mxu0 0.0
      %464 = vmatpush1.msra.mxu0 0.0
      %465 = vmatprep.subr.mxu0 0.0
      %466 = vmatpush1.msra.mxu0 0.0
      %467 = vmatprep.subr.mxu0 0.0
      %468 = vmatpush1.msra.mxu0 0.0
      %469 = vmatprep.subr.mxu0 0.0
      %470 = vmatpush1.msra.mxu0 0.0
      %471 = vmatprep.subr.mxu0 0.0
      %472 = vmatpush1.msra.mxu0 0.0
      %473 = vmatprep.subr.mxu0 0.0
      %474 = vmatpush1.msra.mxu0 0.0
      %475 = vmatprep.subr.mxu0 0.0
      %476 = vmatpush1.msra.mxu0 0.0
      %477 = vmatprep.subr.mxu0 0.0
      %478 = vmatpush1.msra.mxu0 0.0
      %479 = vmatprep.subr.mxu0 0.0
      %480 = vmatpush1.msra.mxu0 0.0
      %481 = vmatprep.subr.mxu0 0.0
      %482 = vmatpush1.msra.mxu0 0.0
      %483 = vmatprep.subr.mxu0 0.0
      %484 = vmatpush1.msra.mxu0 0.0
      %485 = vmatprep.subr.mxu0 0.0
      %486 = vmatpush1.msra.mxu0 0.0
      %487 = vmatprep.subr.mxu0 0.0
      %488 = vmatpush1.msra.mxu0 0.0
      %489 = vmatprep.subr.mxu0 0.0
      %490 = vmatpush1.msra.mxu0 0.0
      %491 = vmatprep.subr.mxu0 0.0
      %492 = vmatpush1.msra.mxu0 0.0
      %493 = vmatprep.subr.mxu0 0.0
      %494 = vmatpush1.msra.mxu0 0.0
      %495 = vmatprep.mubr.f32.mxu0 0.0
      %496 = vmatmul.mubr.f32.gmra.mrb[0].mxu0 %v408
      %v497 = vpop.f32.mrb[0].mxu0
      %v498 = vadd.f32 0.0, %v497
      %v499 = vpop.f32.mrb[0].mxu0
      %500 = vmatprep.mubr.f32.mxu0 0.0
      %501 = vmatmul.mubr.f32.gmra.mrb[0].mxu0 %v411
      %v502 = vpop.f32.mrb[0].mxu0
      %v503 = vadd.f32 0.0, %v502
      %v504 = vpop.f32.mrb[0].mxu0
      %505 = vmatprep.mubr.f32.mxu0 0.0
      %506 = vmatmul.mubr.f32.gmra.mrb[0].mxu0 %v414
      %v507 = vpop.f32.mrb[0].mxu0
      %v508 = vadd.f32 0.0, %v507
      %v509 = vpop.f32.mrb[0].mxu0
      %510 = vmatprep.mubr.f32.mxu0 0.0
      %511 = vmatmul.mubr.f32.gmra.mrb[0].mxu0 %v417
      %v512 = vpop.f32.mrb[0].mxu0
      %v513 = vadd.f32 0.0, %v512
      %v514 = vpop.f32.mrb[0].mxu0
      %515 = vmatprep.mubr.f32.mxu0 0.0
      %516 = vmatmul.mubr.f32.gmra.mrb[0].mxu0 %v420
      %v517 = vpop.f32.mrb[0].mxu0
      %v518 = vadd.f32 0.0, %v517
      %v519 = vpop.f32.mrb[0].mxu0
      %520 = vmatprep.mubr.f32.mxu0 0.0
      %521 = vmatmul.mubr.f32.gmra.mrb[0].mxu0 %v423
      %v522 = vpop.f32.mrb[0].mxu0
      %v523 = vadd.f32 0.0, %v522
      %v524 = vpop.f32.mrb[0].mxu0
      %525 = vmatprep.mubr.f32.mxu0 0.0
      %526 = vmatmul.mubr.f32.gmra.mrb[0].mxu0 %v426
      %v527 = vpop.f32.mrb[0].mxu0
      %v528 = vadd.f32 0.0, %v527
      %v529 = vpop.f32.mrb[0].mxu0
      %530 = vmatprep.mubr.f32.mxu0 0.0
      %531 = vmatmul.mubr.f32.gmra.mrb[0].mxu0 %v429
      %v532 = vpop.f32.mrb[0].mxu0
      %v533 = vadd.f32 0.0, %v532
      %v534 = vpop.f32.mrb[0].mxu0
      %535 = vdwg.mxu0
      %536 = vmatprep.subr.mxu0 0.0
      %537 = vmatpush1.msra.mxu0 %v370
      %538 = vmatprep.subr.mxu0 0.0
      %539 = vmatpush1.msra.mxu0 %v375
      %540 = vmatprep.subr.mxu0 0.0
      %541 = vmatpush1.msra.mxu0 %v380
      %542 = vmatprep.subr.mxu0 0.0
      %543 = vmatpush1.msra.mxu0 %v385
      %544 = vmatprep.subr.mxu0 0.0
      %545 = vmatpush1.msra.mxu0 %v390
      %546 = vmatprep.subr.mxu0 0.0
      %547 = vmatpush1.msra.mxu0 %v395
      %548 = vmatprep.subr.mxu0 0.0
      %549 = vmatpush1.msra.mxu0 %v400
      %550 = vmatprep.subr.mxu0 0.0
      %551 = vmatpush1.msra.mxu0 %v405
      %552 = vmatprep.subr.mxu0 0.0
      %553 = vmatpush1.msra.mxu0 0.0
      %554 = vmatprep.subr.mxu0 0.0
      %555 = vmatpush1.msra.mxu0 0.0
      %556 = vmatprep.subr.mxu0 0.0
      %557 = vmatpush1.msra.mxu0 0.0
      %558 = vmatprep.subr.mxu0 0.0
      %559 = vmatpush1.msra.mxu0 0.0
      %560 = vmatprep.subr.mxu0 0.0
      %561 = vmatpush1.msra.mxu0 0.0
      %562 = vmatprep.subr.mxu0 0.0
      %563 = vmatpush1.msra.mxu0 0.0
      %564 = vmatprep.subr.mxu0 0.0
      %565 = vmatpush1.msra.mxu0 0.0
      %566 = vmatprep.subr.mxu0 0.0
      %567 = vmatpush1.msra.mxu0 0.0
      %568 = vmatprep.subr.mxu0 0.0
      %569 = vmatpush1.msra.mxu0 0.0
      %570 = vmatprep.subr.mxu0 0.0
      %571 = vmatpush1.msra.mxu0 0.0
      %572 = vmatprep.subr.mxu0 0.0
      %573 = vmatpush1.msra.mxu0 0.0
      %574 = vmatprep.subr.mxu0 0.0
      %575 = vmatpush1.msra.mxu0 0.0
      %576 = vmatprep.subr.mxu0 0.0
      %577 = vmatpush1.msra.mxu0 0.0
      %578 = vmatprep.subr.mxu0 0.0
      %579 = vmatpush1.msra.mxu0 0.0
      %580 = vmatprep.subr.mxu0 0.0
      %581 = vmatpush1.msra.mxu0 0.0
      %582 = vmatprep.subr.mxu0 0.0
      %583 = vmatpush1.msra.mxu0 0.0
      %584 = vmatprep.subr.mxu0 0.0
      %585 = vmatpush1.msra.mxu0 0.0
      %586 = vmatprep.subr.mxu0 0.0
      %587 = vmatpush1.msra.mxu0 0.0
      %588 = vmatprep.subr.mxu0 0.0
      %589 = vmatpush1.msra.mxu0 0.0
      %590 = vmatprep.subr.mxu0 0.0
      %591 = vmatpush1.msra.mxu0 0.0
      %592 = vmatprep.subr.mxu0 0.0
      %593 = vmatpush1.msra.mxu0 0.0
      %594 = vmatprep.subr.mxu0 0.0
      %595 = vmatpush1.msra.mxu0 0.0
      %596 = vmatprep.subr.mxu0 0.0
      %597 = vmatpush1.msra.mxu0 0.0
      %598 = vmatprep.subr.mxu0 0.0
      %599 = vmatpush1.msra.mxu0 0.0
      %600 = vmatprep.mubr.f32.mxu0 0.0
      %601 = vmatmul.mubr.f32.gmra.mrb[0].mxu0 %v408
      %v602 = vpop.f32.mrb[0].mxu0
      %v603 = vadd.f32 0.0, %v602
      %v604 = vpop.f32.mrb[0].mxu0
      %605 = vmatprep.mubr.f32.mxu0 0.0
      %606 = vmatmul.mubr.f32.gmra.mrb[0].mxu0 %v411
      %v607 = vpop.f32.mrb[0].mxu0
      %v608 = vadd.f32 0.0, %v607
      %v609 = vpop.f32.mrb[0].mxu0
      %610 = vmatprep.mubr.f32.mxu0 0.0
      %611 = vmatmul.mubr.f32.gmra.mrb[0].mxu0 %v414
      %v612 = vpop.f32.mrb[0].mxu0
      %v613 = vadd.f32 0.0, %v612
      %v614 = vpop.f32.mrb[0].mxu0
      %615 = vmatprep.mubr.f32.mxu0 0.0
      %616 = vmatmul.mubr.f32.gmra.mrb[0].mxu0 %v417
      %v617 = vpop.f32.mrb[0].mxu0
      %v618 = vadd.f32 0.0, %v617
      %v619 = vpop.f32.mrb[0].mxu0
      %620 = vmatprep.mubr.f32.mxu0 0.0
      %621 = vmatmul.mubr.f32.gmra.mrb[0].mxu0 %v420
      %v622 = vpop.f32.mrb[0].mxu0
      %v623 = vadd.f32 0.0, %v622
      %v624 = vpop.f32.mrb[0].mxu0
      %625 = vmatprep.mubr.f32.mxu0 0.0
      %626 = vmatmul.mubr.f32.gmra.mrb[0].mxu0 %v423
      %v627 = vpop.f32.mrb[0].mxu0
      %v628 = vadd.f32 0.0, %v627
      %v629 = vpop.f32.mrb[0].mxu0
      %630 = vmatprep.mubr.f32.mxu0 0.0
      %631 = vmatmul.mubr.f32.gmra.mrb[0].mxu0 %v426
      %v632 = vpop.f32.mrb[0].mxu0
      %v633 = vadd.f32 0.0, %v632
      %v634 = vpop.f32.mrb[0].mxu0
      %635 = vmatprep.mubr.f32.mxu0 0.0
      %636 = vmatmul.mubr.f32.gmra.mrb[0].mxu0 %v429
      %v637 = vpop.f32.mrb[0].mxu0
      %v638 = vadd.f32 0.0, %v637
      %v639 = vpop.f32.mrb[0].mxu0
      %640 = vdwg.mxu0
      %v641 = vmul.f32 %v498, %v498
      %v642 = vmul.f32 %v503, %v503
      %v643 = vmul.f32 %v508, %v508
      %v644 = vmul.f32 %v513, %v513
      %v645 = vmul.f32 %v518, %v518
      %v646 = vmul.f32 %v523, %v523
      %v647 = vmul.f32 %v528, %v528
      %v648 = vmul.f32 %v533, %v533
      %v649 = vsub.f32 %v603, %v641
      %v650 = vsub.f32 %v608, %v642
      %v651 = vsub.f32 %v613, %v643
      %v652 = vsub.f32 %v618, %v644
      %v653 = vsub.f32 %v623, %v645
      %v654 = vsub.f32 %v628, %v646
      %v655 = vsub.f32 %v633, %v647
      %v656 = vsub.f32 %v638, %v648
      %v657 = vmax.f32 %v649, 0.0
      %v658 = vmax.f32 %v650, 0.0
      %v659 = vmax.f32 %v651, 0.0
      %v660 = vmax.f32 %v652, 0.0
      %v661 = vmax.f32 %v653, 0.0
      %v662 = vmax.f32 %v654, 0.0
      %v663 = vmax.f32 %v655, 0.0
      %v664 = vmax.f32 %v656, 0.0
      %666 = vset.pattern.permute.xlu0 0
      %667 = vperm.xlu0 %666, %v498
      %v668 = vpop.permute.xlu0 %667
      %671 = vset.pattern.permute.xlu0 0
      %672 = vperm.xlu0 %671, %v503
      %v673 = vpop.permute.xlu0 %672
      %676 = vset.pattern.permute.xlu0 0
      %677 = vperm.xlu0 %676, %v508
      %v678 = vpop.permute.xlu0 %677
      %681 = vset.pattern.permute.xlu0 0
      %682 = vperm.xlu0 %681, %v513
      %v683 = vpop.permute.xlu0 %682
      %686 = vset.pattern.permute.xlu0 0
      %687 = vperm.xlu0 %686, %v518
      %v688 = vpop.permute.xlu0 %687
      %691 = vset.pattern.permute.xlu0 0
      %692 = vperm.xlu0 %691, %v523
      %v693 = vpop.permute.xlu0 %692
      %696 = vset.pattern.permute.xlu0 0
      %697 = vperm.xlu0 %696, %v528
      %v698 = vpop.permute.xlu0 %697
      %701 = vset.pattern.permute.xlu0 0
      %702 = vperm.xlu0 %701, %v533
      %v703 = vpop.permute.xlu0 %702
      %v705 = vsub.f32 %v254, %v668
      %v706 = vsub.f32 %v255, %v668
      %v707 = vsub.f32 %v256, %v668
      %v708 = vsub.f32 %v257, %v668
      %v709 = vsub.f32 %v258, %v673
      %v710 = vsub.f32 %v259, %v673
      %v711 = vsub.f32 %v260, %v673
      %v712 = vsub.f32 %v261, %v673
      %v713 = vsub.f32 %v262, %v678
      %v714 = vsub.f32 %v263, %v678
      %v715 = vsub.f32 %v264, %v678
      %v716 = vsub.f32 %v265, %v678
      %v717 = vsub.f32 %v266, %v683
      %v718 = vsub.f32 %v267, %v683
      %v719 = vsub.f32 %v268, %v683
      %v720 = vsub.f32 %v269, %v683
      %v721 = vsub.f32 %v270, %v688
      %v722 = vsub.f32 %v271, %v688
      %v723 = vsub.f32 %v272, %v688
      %v724 = vsub.f32 %v273, %v688
      %v725 = vsub.f32 %v274, %v693
      %v726 = vsub.f32 %v275, %v693
      %v727 = vsub.f32 %v276, %v693
      %v728 = vsub.f32 %v277, %v693
      %v729 = vsub.f32 %v278, %v698
      %v730 = vsub.f32 %v279, %v698
      %v731 = vsub.f32 %v280, %v698
      %v732 = vsub.f32 %v281, %v698
      %v733 = vsub.f32 %v282, %v703
      %v734 = vsub.f32 %v283, %v703
      %v735 = vsub.f32 %v284, %v703
      %v736 = vsub.f32 %v285, %v703
      %v737 = vadd.f32 %v657, 1e-05
      %v738 = vadd.f32 %v658, 1e-05
      %v739 = vadd.f32 %v659, 1e-05
      %v740 = vadd.f32 %v660, 1e-05
      %v741 = vadd.f32 %v661, 1e-05
      %v742 = vadd.f32 %v662, 1e-05
      %v743 = vadd.f32 %v663, 1e-05
      %v744 = vadd.f32 %v664, 1e-05
      %v745 = vrsqrt.pop %v737
      %v746 = vrsqrt.pop %v738
      %v747 = vrsqrt.pop %v739
      %v748 = vrsqrt.pop %v740
      %v749 = vrsqrt.pop %v741
      %v750 = vrsqrt.pop %v742
      %v751 = vrsqrt.pop %v743
      %v752 = vrsqrt.pop %v744
      %754 = vset.pattern.permute.xlu0 0
      %755 = vperm.xlu0 %754, %v745
      %v756 = vpop.permute.xlu0 %755
      %759 = vset.pattern.permute.xlu0 0
      %760 = vperm.xlu0 %759, %v746
      %v761 = vpop.permute.xlu0 %760
      %764 = vset.pattern.permute.xlu0 0
      %765 = vperm.xlu0 %764, %v747
      %v766 = vpop.permute.xlu0 %765
      %769 = vset.pattern.permute.xlu0 0
      %770 = vperm.xlu0 %769, %v748
      %v771 = vpop.permute.xlu0 %770
      %774 = vset.pattern.permute.xlu0 0
      %775 = vperm.xlu0 %774, %v749
      %v776 = vpop.permute.xlu0 %775
      %779 = vset.pattern.permute.xlu0 0
      %780 = vperm.xlu0 %779, %v750
      %v781 = vpop.permute.xlu0 %780
      %784 = vset.pattern.permute.xlu0 0
      %785 = vperm.xlu0 %784, %v751
      %v786 = vpop.permute.xlu0 %785
      %789 = vset.pattern.permute.xlu0 0
      %790 = vperm.xlu0 %789, %v752
      %v791 = vpop.permute.xlu0 %790
      %v793 = vmul.f32 %v705, %v756
      %v794 = vmul.f32 %v706, %v756
      %v795 = vmul.f32 %v707, %v756
      %v796 = vmul.f32 %v708, %v756
      %v797 = vmul.f32 %v709, %v761
      %v798 = vmul.f32 %v710, %v761
      %v799 = vmul.f32 %v711, %v761
      %v800 = vmul.f32 %v712, %v761
      %v801 = vmul.f32 %v713, %v766
      %v802 = vmul.f32 %v714, %v766
      %v803 = vmul.f32 %v715, %v766
      %v804 = vmul.f32 %v716, %v766
      %v805 = vmul.f32 %v717, %v771
      %v806 = vmul.f32 %v718, %v771
      %v807 = vmul.f32 %v719, %v771
      %v808 = vmul.f32 %v720, %v771
      %v809 = vmul.f32 %v721, %v776
      %v810 = vmul.f32 %v722, %v776
      %v811 = vmul.f32 %v723, %v776
      %v812 = vmul.f32 %v724, %v776
      %v813 = vmul.f32 %v725, %v781
      %v814 = vmul.f32 %v726, %v781
      %v815 = vmul.f32 %v727, %v781
      %v816 = vmul.f32 %v728, %v781
      %v817 = vmul.f32 %v729, %v786
      %v818 = vmul.f32 %v730, %v786
      %v819 = vmul.f32 %v731, %v786
      %v820 = vmul.f32 %v732, %v786
      %v821 = vmul.f32 %v733, %v791
      %v822 = vmul.f32 %v734, %v791
      %v823 = vmul.f32 %v735, %v791
      %v824 = vmul.f32 %v736, %v791
      %v825 = vpack.c.bf16 %v797, %v793
      %v826 = vpack.c.bf16 %v798, %v794
      %v827 = vpack.c.bf16 %v799, %v795
      %v828 = vpack.c.bf16 %v800, %v796
      %v829 = vpack.c.bf16 %v805, %v801
      %v830 = vpack.c.bf16 %v806, %v802
      %v831 = vpack.c.bf16 %v807, %v803
      %v832 = vpack.c.bf16 %v808, %v804
      %v833 = vpack.c.bf16 %v813, %v809
      %v834 = vpack.c.bf16 %v814, %v810
      %v835 = vpack.c.bf16 %v815, %v811
      %v836 = vpack.c.bf16 %v816, %v812
      %v837 = vpack.c.bf16 %v821, %v817
      %v838 = vpack.c.bf16 %v822, %v818
      %v839 = vpack.c.bf16 %v823, %v819
      %v840 = vpack.c.bf16 %v824, %v820
      %v841 = vld [vmem:[%s2] sm:$0xf]
      %v842 = vld [vmem:[%s2 + $0x4] sm:$0xf]
      %v843 = vld [vmem:[%s2 + $0x8] sm:$0xf]
      %v844 = vld [vmem:[%s2 + $0xc] sm:$0xf]
      %v845 = vld [vmem:[%s2 + $0x10] sm:$0xf]
      %v846 = vld [vmem:[%s2 + $0x14] sm:$0xf]
      %v847 = vld [vmem:[%s2 + $0x18] sm:$0xf]
      %v848 = vld [vmem:[%s2 + $0x1c] sm:$0xf]
      %v849 = vld [vmem:[%s2 + $0x20] sm:$0xf]
      %v850 = vld [vmem:[%s2 + $0x24] sm:$0xf]
      %v851 = vld [vmem:[%s2 + $0x28] sm:$0xf]
      %v852 = vld [vmem:[%s2 + $0x2c] sm:$0xf]
      %v853 = vld [vmem:[%s2 + $0x30] sm:$0xf]
      %v854 = vld [vmem:[%s2 + $0x34] sm:$0xf]
      %v855 = vld [vmem:[%s2 + $0x38] sm:$0xf]
      %v856 = vld [vmem:[%s2 + $0x3c] sm:$0xf]
      %v857 = vld [vmem:[%s2 + $0x40] sm:$0xf]
      %v858 = vld [vmem:[%s2 + $0x44] sm:$0xf]
      %v859 = vld [vmem:[%s2 + $0x48] sm:$0xf]
      %v860 = vld [vmem:[%s2 + $0x4c] sm:$0xf]
      %v861 = vld [vmem:[%s2 + $0x50] sm:$0xf]
      %v862 = vld [vmem:[%s2 + $0x54] sm:$0xf]
      %v863 = vld [vmem:[%s2 + $0x58] sm:$0xf]
      %v864 = vld [vmem:[%s2 + $0x5c] sm:$0xf]
      %v865 = vld [vmem:[%s3] sm:$0xff]
      %v866 = vld [vmem:[%s3 + $0x8] sm:$0xff]
      %v867 = vld [vmem:[%s3 + $0x10] sm:$0xff]
      %v868 = vld [vmem:[%s3 + $0x18] sm:$0xff]
      %v869 = vld [vmem:[%s3 + $0x20] sm:$0xff]
      %v870 = vld [vmem:[%s3 + $0x28] sm:$0xff]
      %v871 = vld [vmem:[%s3 + $0x30] sm:$0xff]
      %v872 = vld [vmem:[%s3 + $0x38] sm:$0xff]
      %v873 = vld [vmem:[%s3 + $0x40] sm:$0xff]
      %v874 = vld [vmem:[%s3 + $0x48] sm:$0xff]
      %v875 = vld [vmem:[%s3 + $0x50] sm:$0xff]
      %v876 = vld [vmem:[%s3 + $0x58] sm:$0xff]
      %v877 = vld [vmem:[%s3 + $0x60] sm:$0xff]
      %v878 = vld [vmem:[%s3 + $0x68] sm:$0xff]
      %v879 = vld [vmem:[%s3 + $0x70] sm:$0xff]
      %v880 = vld [vmem:[%s3 + $0x78] sm:$0xff]
      %v881 = vld [vmem:[%s3 + $0x80] sm:$0xff]
      %v882 = vld [vmem:[%s3 + $0x88] sm:$0xff]
      %v883 = vld [vmem:[%s3 + $0x90] sm:$0xff]
      %v884 = vld [vmem:[%s3 + $0x98] sm:$0xff]
      %v885 = vld [vmem:[%s3 + $0xa0] sm:$0xff]
      %v886 = vld [vmem:[%s3 + $0xa8] sm:$0xff]
      %v887 = vld [vmem:[%s3 + $0xb0] sm:$0xff]
      %v888 = vld [vmem:[%s3 + $0xb8] sm:$0xff]
      %890 = vset.pattern.permute.xlu0 0
      %891 = vperm.xlu0 %890, %v865
      %v892 = vpop.permute.xlu0 %891
      %895 = vset.pattern.permute.xlu0 0
      %896 = vperm.xlu0 %895, %v866
      %v897 = vpop.permute.xlu0 %896
      %900 = vset.pattern.permute.xlu0 0
      %901 = vperm.xlu0 %900, %v867
      %v902 = vpop.permute.xlu0 %901
      %905 = vset.pattern.permute.xlu0 0
      %906 = vperm.xlu0 %905, %v868
      %v907 = vpop.permute.xlu0 %906
      %910 = vset.pattern.permute.xlu0 0
      %911 = vperm.xlu0 %910, %v869
      %v912 = vpop.permute.xlu0 %911
      %915 = vset.pattern.permute.xlu0 0
      %916 = vperm.xlu0 %915, %v870
      %v917 = vpop.permute.xlu0 %916
      %920 = vset.pattern.permute.xlu0 0
      %921 = vperm.xlu0 %920, %v871
      %v922 = vpop.permute.xlu0 %921
      %925 = vset.pattern.permute.xlu0 0
      %926 = vperm.xlu0 %925, %v872
      %v927 = vpop.permute.xlu0 %926
      %930 = vset.pattern.permute.xlu0 0
      %931 = vperm.xlu0 %930, %v873
      %v932 = vpop.permute.xlu0 %931
      %935 = vset.pattern.permute.xlu0 0
      %936 = vperm.xlu0 %935, %v874
      %v937 = vpop.permute.xlu0 %936
      %940 = vset.pattern.permute.xlu0 0
      %941 = vperm.xlu0 %940, %v875
      %v942 = vpop.permute.xlu0 %941
      %945 = vset.pattern.permute.xlu0 0
      %946 = vperm.xlu0 %945, %v876
      %v947 = vpop.permute.xlu0 %946
      %950 = vset.pattern.permute.xlu0 0
      %951 = vperm.xlu0 %950, %v877
      %v952 = vpop.permute.xlu0 %951
      %955 = vset.pattern.permute.xlu0 0
      %956 = vperm.xlu0 %955, %v878
      %v957 = vpop.permute.xlu0 %956
      %960 = vset.pattern.permute.xlu0 0
      %961 = vperm.xlu0 %960, %v879
      %v962 = vpop.permute.xlu0 %961
      %965 = vset.pattern.permute.xlu0 0
      %966 = vperm.xlu0 %965, %v880
      %v967 = vpop.permute.xlu0 %966
      %970 = vset.pattern.permute.xlu0 0
      %971 = vperm.xlu0 %970, %v881
      %v972 = vpop.permute.xlu0 %971
      %975 = vset.pattern.permute.xlu0 0
      %976 = vperm.xlu0 %975, %v882
      %v977 = vpop.permute.xlu0 %976
      %980 = vset.pattern.permute.xlu0 0
      %981 = vperm.xlu0 %980, %v883
      %v982 = vpop.permute.xlu0 %981
      %985 = vset.pattern.permute.xlu0 0
      %986 = vperm.xlu0 %985, %v884
      %v987 = vpop.permute.xlu0 %986
      %990 = vset.pattern.permute.xlu0 0
      %991 = vperm.xlu0 %990, %v885
      %v992 = vpop.permute.xlu0 %991
      %995 = vset.pattern.permute.xlu0 0
      %996 = vperm.xlu0 %995, %v886
      %v997 = vpop.permute.xlu0 %996
      %1000 = vset.pattern.permute.xlu0 0
      %1001 = vperm.xlu0 %1000, %v887
      %v1002 = vpop.permute.xlu0 %1001
      %1005 = vset.pattern.permute.xlu0 0
      %1006 = vperm.xlu0 %1005, %v888
      %v1007 = vpop.permute.xlu0 %1006
      %v1033 = vunpack.c.l.b16 %v841
      %v1034 = vunpack.c.l.b16 %v842
      %v1035 = vunpack.c.l.b16 %v843
      %v1036 = vunpack.c.l.b16 %v844
      %v1037 = vunpack.c.l.b16 %v845
      %v1038 = vunpack.c.l.b16 %v846
      %v1039 = vunpack.c.l.b16 %v847
      %v1040 = vunpack.c.l.b16 %v848
      %v1041 = vunpack.c.l.b16 %v849
      %v1042 = vunpack.c.l.b16 %v850
      %v1043 = vunpack.c.l.b16 %v851
      %v1044 = vunpack.c.l.b16 %v852
      %v1045 = vunpack.c.l.b16 %v853
      %v1046 = vunpack.c.l.b16 %v854
      %v1047 = vunpack.c.l.b16 %v855
      %v1048 = vunpack.c.l.b16 %v856
      %v1049 = vunpack.c.l.b16 %v857
      %v1050 = vunpack.c.l.b16 %v858
      %v1051 = vunpack.c.l.b16 %v859
      %v1052 = vunpack.c.l.b16 %v860
      %v1053 = vunpack.c.l.b16 %v861
      %v1054 = vunpack.c.l.b16 %v862
      %v1055 = vunpack.c.l.b16 %v863
      %v1056 = vunpack.c.l.b16 %v864
      %v1057 = vpack.c.b16 %v1034, %v1033
      %v1058 = vpack.c.b16 %v1036, %v1035
      %v1059 = vpack.c.b16 %v1038, %v1037
      %v1060 = vpack.c.b16 %v1040, %v1039
      %v1061 = vpack.c.b16 %v1042, %v1041
      %v1062 = vpack.c.b16 %v1044, %v1043
      %v1063 = vpack.c.b16 %v1046, %v1045
      %v1064 = vpack.c.b16 %v1048, %v1047
      %v1065 = vpack.c.b16 %v1050, %v1049
      %v1066 = vpack.c.b16 %v1052, %v1051
      %v1067 = vpack.c.b16 %v1054, %v1053
      %v1068 = vpack.c.b16 %v1056, %v1055
      %v1070 = vsel %vm406, %v1057, 0
      %v1073 = vsel %vm406, %v1058, 0
      %v1076 = vsel %vm406, %v1059, 0
      %v1079 = vsel %vm406, %v1060, 0
      %v1082 = vsel %vm406, %v1061, 0
      %v1085 = vsel %vm406, %v1062, 0
      %v1088 = vsel %vm406, %v1063, 0
      %v1091 = vsel %vm406, %v1064, 0
      %v1094 = vsel %vm406, %v1065, 0
      %v1097 = vsel %vm406, %v1066, 0
      %v1100 = vsel %vm406, %v1067, 0
      %v1103 = vsel %vm406, %v1068, 0
      %1105 = vmatprep.subr.bf16.mxu0 %v826
      %1106 = vmatpush1.bf16.msra.mxu0 %v825
      %1107 = vmatprep.subr.bf16.mxu0 %v830
      %1108 = vmatpush1.bf16.msra.mxu0 %v829
      %1109 = vmatprep.subr.bf16.mxu0 %v834
      %1110 = vmatpush1.bf16.msra.mxu0 %v833
      %1111 = vmatprep.subr.bf16.mxu0 %v838
      %1112 = vmatpush1.bf16.msra.mxu0 %v837
      %1113 = vmatprep.subr.bf16.mxu0 0
      %1114 = vmatpush1.bf16.msra.mxu0 0
      %1115 = vmatprep.subr.bf16.mxu0 0
      %1116 = vmatpush1.bf16.msra.mxu0 0
      %1117 = vmatprep.subr.bf16.mxu0 0
      %1118 = vmatpush1.bf16.msra.mxu0 0
      %1119 = vmatprep.subr.bf16.mxu0 0
      %1120 = vmatpush1.bf16.msra.mxu0 0
      %1121 = vmatprep.subr.bf16.mxu0 0
      %1122 = vmatpush1.bf16.msra.mxu0 0
      %1123 = vmatprep.subr.bf16.mxu0 0
      %1124 = vmatpush1.bf16.msra.mxu0 0
      %1125 = vmatprep.subr.bf16.mxu0 0
      %1126 = vmatpush1.bf16.msra.mxu0 0
      %1127 = vmatprep.subr.bf16.mxu0 0
      %1128 = vmatpush1.bf16.msra.mxu0 0
      %1129 = vmatprep.subr.bf16.mxu0 0
      %1130 = vmatpush1.bf16.msra.mxu0 0
      %1131 = vmatprep.subr.bf16.mxu0 0
      %1132 = vmatpush1.bf16.msra.mxu0 0
      %1133 = vmatprep.subr.bf16.mxu0 0
      %1134 = vmatpush1.bf16.msra.mxu0 0
      %1135 = vmatprep.subr.bf16.mxu0 0
      %1136 = vmatpush1.bf16.msra.mxu0 0
      %1137 = vmatprep.mubr.bf16.mxu0 0
      %1138 = vmatmul.mubr.bf16.gmra.mrb[0].mxu0 %v1070
      %v1139 = vpop.f32.mrb[0].mxu0
      %v1140 = vadd.f32 %v892, %v1139
      %v1141 = vpop.f32.mrb[0].mxu0
      %v1142 = vadd.f32 %v892, %v1141
      %v1143 = vpop.f32.mrb[0].mxu0
      %v1144 = vadd.f32 %v897, %v1143
      %v1145 = vpop.f32.mrb[0].mxu0
      %v1146 = vadd.f32 %v897, %v1145
      %1147 = vmatprep.mubr.bf16.mxu0 0
      %1148 = vmatmul.mubr.bf16.gmra.mrb[0].mxu0 %v1073
      %v1149 = vpop.f32.mrb[0].mxu0
      %v1150 = vadd.f32 %v902, %v1149
      %v1151 = vpop.f32.mrb[0].mxu0
      %v1152 = vadd.f32 %v902, %v1151
      %v1153 = vpop.f32.mrb[0].mxu0
      %v1154 = vadd.f32 %v907, %v1153
      %v1155 = vpop.f32.mrb[0].mxu0
      %v1156 = vadd.f32 %v907, %v1155
      %1157 = vmatprep.mubr.bf16.mxu0 0
      %1158 = vmatmul.mubr.bf16.gmra.mrb[0].mxu0 %v1076
      %v1159 = vpop.f32.mrb[0].mxu0
      %v1160 = vadd.f32 %v912, %v1159
      %v1161 = vpop.f32.mrb[0].mxu0
      %v1162 = vadd.f32 %v912, %v1161
      %v1163 = vpop.f32.mrb[0].mxu0
      %v1164 = vadd.f32 %v917, %v1163
      %v1165 = vpop.f32.mrb[0].mxu0
      %v1166 = vadd.f32 %v917, %v1165
      %1167 = vmatprep.mubr.bf16.mxu0 0
      %1168 = vmatmul.mubr.bf16.gmra.mrb[0].mxu0 %v1079
      %v1169 = vpop.f32.mrb[0].mxu0
      %v1170 = vadd.f32 %v922, %v1169
      %v1171 = vpop.f32.mrb[0].mxu0
      %v1172 = vadd.f32 %v922, %v1171
      %v1173 = vpop.f32.mrb[0].mxu0
      %v1174 = vadd.f32 %v927, %v1173
      %v1175 = vpop.f32.mrb[0].mxu0
      %v1176 = vadd.f32 %v927, %v1175
      %1177 = vmatprep.mubr.bf16.mxu0 0
      %1178 = vmatmul.mubr.bf16.gmra.mrb[0].mxu0 %v1082
      %v1179 = vpop.f32.mrb[0].mxu0
      %v1180 = vadd.f32 %v932, %v1179
      %v1181 = vpop.f32.mrb[0].mxu0
      %v1182 = vadd.f32 %v932, %v1181
      %v1183 = vpop.f32.mrb[0].mxu0
      %v1184 = vadd.f32 %v937, %v1183
      %v1185 = vpop.f32.mrb[0].mxu0
      %v1186 = vadd.f32 %v937, %v1185
      %1187 = vmatprep.mubr.bf16.mxu0 0
      %1188 = vmatmul.mubr.bf16.gmra.mrb[0].mxu0 %v1085
      %v1189 = vpop.f32.mrb[0].mxu0
      %v1190 = vadd.f32 %v942, %v1189
      %v1191 = vpop.f32.mrb[0].mxu0
      %v1192 = vadd.f32 %v942, %v1191
      %v1193 = vpop.f32.mrb[0].mxu0
      %v1194 = vadd.f32 %v947, %v1193
      %v1195 = vpop.f32.mrb[0].mxu0
      %v1196 = vadd.f32 %v947, %v1195
      %1197 = vmatprep.mubr.bf16.mxu0 0
      %1198 = vmatmul.mubr.bf16.gmra.mrb[0].mxu0 %v1088
      %v1199 = vpop.f32.mrb[0].mxu0
      %v1200 = vadd.f32 %v952, %v1199
      %v1201 = vpop.f32.mrb[0].mxu0
      %v1202 = vadd.f32 %v952, %v1201
      %v1203 = vpop.f32.mrb[0].mxu0
      %v1204 = vadd.f32 %v957, %v1203
      %v1205 = vpop.f32.mrb[0].mxu0
      %v1206 = vadd.f32 %v957, %v1205
      %1207 = vmatprep.mubr.bf16.mxu0 0
      %1208 = vmatmul.mubr.bf16.gmra.mrb[0].mxu0 %v1091
      %v1209 = vpop.f32.mrb[0].mxu0
      %v1210 = vadd.f32 %v962, %v1209
      %v1211 = vpop.f32.mrb[0].mxu0
      %v1212 = vadd.f32 %v962, %v1211
      %v1213 = vpop.f32.mrb[0].mxu0
      %v1214 = vadd.f32 %v967, %v1213
      %v1215 = vpop.f32.mrb[0].mxu0
      %v1216 = vadd.f32 %v967, %v1215
      %1217 = vmatprep.mubr.bf16.mxu0 0
      %1218 = vmatmul.mubr.bf16.gmra.mrb[0].mxu0 %v1094
      %v1219 = vpop.f32.mrb[0].mxu0
      %v1220 = vadd.f32 %v972, %v1219
      %v1221 = vpop.f32.mrb[0].mxu0
      %v1222 = vadd.f32 %v972, %v1221
      %v1223 = vpop.f32.mrb[0].mxu0
      %v1224 = vadd.f32 %v977, %v1223
      %v1225 = vpop.f32.mrb[0].mxu0
      %v1226 = vadd.f32 %v977, %v1225
      %1227 = vmatprep.mubr.bf16.mxu0 0
      %1228 = vmatmul.mubr.bf16.gmra.mrb[0].mxu0 %v1097
      %v1229 = vpop.f32.mrb[0].mxu0
      %v1230 = vadd.f32 %v982, %v1229
      %v1231 = vpop.f32.mrb[0].mxu0
      %v1232 = vadd.f32 %v982, %v1231
      %v1233 = vpop.f32.mrb[0].mxu0
      %v1234 = vadd.f32 %v987, %v1233
      %v1235 = vpop.f32.mrb[0].mxu0
      %v1236 = vadd.f32 %v987, %v1235
      %1237 = vmatprep.mubr.bf16.mxu0 0
      %1238 = vmatmul.mubr.bf16.gmra.mrb[0].mxu0 %v1100
      %v1239 = vpop.f32.mrb[0].mxu0
      %v1240 = vadd.f32 %v992, %v1239
      %v1241 = vpop.f32.mrb[0].mxu0
      %v1242 = vadd.f32 %v992, %v1241
      %v1243 = vpop.f32.mrb[0].mxu0
      %v1244 = vadd.f32 %v997, %v1243
      %v1245 = vpop.f32.mrb[0].mxu0
      %v1246 = vadd.f32 %v997, %v1245
      %1247 = vmatprep.mubr.bf16.mxu0 0
      %1248 = vmatmul.mubr.bf16.gmra.mrb[0].mxu0 %v1103
      %v1249 = vpop.f32.mrb[0].mxu0
      %v1250 = vadd.f32 %v1002, %v1249
      %v1251 = vpop.f32.mrb[0].mxu0
      %v1252 = vadd.f32 %v1002, %v1251
      %v1253 = vpop.f32.mrb[0].mxu0
      %v1254 = vadd.f32 %v1007, %v1253
      %v1255 = vpop.f32.mrb[0].mxu0
      %v1256 = vadd.f32 %v1007, %v1255
      %1257 = vdwg.mxu0
      %1258 = vmatprep.subr.bf16.mxu0 %v828
      %1259 = vmatpush1.bf16.msra.mxu0 %v827
      %1260 = vmatprep.subr.bf16.mxu0 %v832
      %1261 = vmatpush1.bf16.msra.mxu0 %v831
      %1262 = vmatprep.subr.bf16.mxu0 %v836
      %1263 = vmatpush1.bf16.msra.mxu0 %v835
      %1264 = vmatprep.subr.bf16.mxu0 %v840
      %1265 = vmatpush1.bf16.msra.mxu0 %v839
      %1266 = vmatprep.subr.bf16.mxu0 0
      %1267 = vmatpush1.bf16.msra.mxu0 0
      %1268 = vmatprep.subr.bf16.mxu0 0
      %1269 = vmatpush1.bf16.msra.mxu0 0
      %1270 = vmatprep.subr.bf16.mxu0 0
      %1271 = vmatpush1.bf16.msra.mxu0 0
      %1272 = vmatprep.subr.bf16.mxu0 0
      %1273 = vmatpush1.bf16.msra.mxu0 0
      %1274 = vmatprep.subr.bf16.mxu0 0
      %1275 = vmatpush1.bf16.msra.mxu0 0
      %1276 = vmatprep.subr.bf16.mxu0 0
      %1277 = vmatpush1.bf16.msra.mxu0 0
      %1278 = vmatprep.subr.bf16.mxu0 0
      %1279 = vmatpush1.bf16.msra.mxu0 0
      %1280 = vmatprep.subr.bf16.mxu0 0
      %1281 = vmatpush1.bf16.msra.mxu0 0
      %1282 = vmatprep.subr.bf16.mxu0 0
      %1283 = vmatpush1.bf16.msra.mxu0 0
      %1284 = vmatprep.subr.bf16.mxu0 0
      %1285 = vmatpush1.bf16.msra.mxu0 0
      %1286 = vmatprep.subr.bf16.mxu0 0
      %1287 = vmatpush1.bf16.msra.mxu0 0
      %1288 = vmatprep.subr.bf16.mxu0 0
      %1289 = vmatpush1.bf16.msra.mxu0 0
      %1290 = vmatprep.mubr.bf16.mxu0 0
      %1291 = vmatmul.mubr.bf16.gmra.mrb[0].mxu0 %v1070
      %v1292 = vpop.f32.mrb[0].mxu0
      %v1293 = vadd.f32 %v892, %v1292
      %v1294 = vpop.f32.mrb[0].mxu0
      %v1295 = vadd.f32 %v892, %v1294
      %v1296 = vpop.f32.mrb[0].mxu0
      %v1297 = vadd.f32 %v897, %v1296
      %v1298 = vpop.f32.mrb[0].mxu0
      %v1299 = vadd.f32 %v897, %v1298
      %1300 = vmatprep.mubr.bf16.mxu0 0
      %1301 = vmatmul.mubr.bf16.gmra.mrb[0].mxu0 %v1073
      %v1302 = vpop.f32.mrb[0].mxu0
      %v1303 = vadd.f32 %v902, %v1302
      %v1304 = vpop.f32.mrb[0].mxu0
      %v1305 = vadd.f32 %v902, %v1304
      %v1306 = vpop.f32.mrb[0].mxu0
      %v1307 = vadd.f32 %v907, %v1306
      %v1308 = vpop.f32.mrb[0].mxu0
      %v1309 = vadd.f32 %v907, %v1308
      %1310 = vmatprep.mubr.bf16.mxu0 0
      %1311 = vmatmul.mubr.bf16.gmra.mrb[0].mxu0 %v1076
      %v1312 = vpop.f32.mrb[0].mxu0
      %v1313 = vadd.f32 %v912, %v1312
      %v1314 = vpop.f32.mrb[0].mxu0
      %v1315 = vadd.f32 %v912, %v1314
      %v1316 = vpop.f32.mrb[0].mxu0
      %v1317 = vadd.f32 %v917, %v1316
      %v1318 = vpop.f32.mrb[0].mxu0
      %v1319 = vadd.f32 %v917, %v1318
      %1320 = vmatprep.mubr.bf16.mxu0 0
      %1321 = vmatmul.mubr.bf16.gmra.mrb[0].mxu0 %v1079
      %v1322 = vpop.f32.mrb[0].mxu0
      %v1323 = vadd.f32 %v922, %v1322
      %v1324 = vpop.f32.mrb[0].mxu0
      %v1325 = vadd.f32 %v922, %v1324
      %v1326 = vpop.f32.mrb[0].mxu0
      %v1327 = vadd.f32 %v927, %v1326
      %v1328 = vpop.f32.mrb[0].mxu0
      %v1329 = vadd.f32 %v927, %v1328
      %1330 = vmatprep.mubr.bf16.mxu0 0
      %1331 = vmatmul.mubr.bf16.gmra.mrb[0].mxu0 %v1082
      %v1332 = vpop.f32.mrb[0].mxu0
      %v1333 = vadd.f32 %v932, %v1332
      %v1334 = vpop.f32.mrb[0].mxu0
      %v1335 = vadd.f32 %v932, %v1334
      %v1336 = vpop.f32.mrb[0].mxu0
      %v1337 = vadd.f32 %v937, %v1336
      %v1338 = vpop.f32.mrb[0].mxu0
      %v1339 = vadd.f32 %v937, %v1338
      %1340 = vmatprep.mubr.bf16.mxu0 0
      %1341 = vmatmul.mubr.bf16.gmra.mrb[0].mxu0 %v1085
      %v1342 = vpop.f32.mrb[0].mxu0
      %v1343 = vadd.f32 %v942, %v1342
      %v1344 = vpop.f32.mrb[0].mxu0
      %v1345 = vadd.f32 %v942, %v1344
      %v1346 = vpop.f32.mrb[0].mxu0
      %v1347 = vadd.f32 %v947, %v1346
      %v1348 = vpop.f32.mrb[0].mxu0
      %v1349 = vadd.f32 %v947, %v1348
      %1350 = vmatprep.mubr.bf16.mxu0 0
      %1351 = vmatmul.mubr.bf16.gmra.mrb[0].mxu0 %v1088
      %v1352 = vpop.f32.mrb[0].mxu0
      %v1353 = vadd.f32 %v952, %v1352
      %v1354 = vpop.f32.mrb[0].mxu0
      %v1355 = vadd.f32 %v952, %v1354
      %v1356 = vpop.f32.mrb[0].mxu0
      %v1357 = vadd.f32 %v957, %v1356
      %v1358 = vpop.f32.mrb[0].mxu0
      %v1359 = vadd.f32 %v957, %v1358
      %1360 = vmatprep.mubr.bf16.mxu0 0
      %1361 = vmatmul.mubr.bf16.gmra.mrb[0].mxu0 %v1091
      %v1362 = vpop.f32.mrb[0].mxu0
      %v1363 = vadd.f32 %v962, %v1362
      %v1364 = vpop.f32.mrb[0].mxu0
      %v1365 = vadd.f32 %v962, %v1364
      %v1366 = vpop.f32.mrb[0].mxu0
      %v1367 = vadd.f32 %v967, %v1366
      %v1368 = vpop.f32.mrb[0].mxu0
      %v1369 = vadd.f32 %v967, %v1368
      %1370 = vmatprep.mubr.bf16.mxu0 0
      %1371 = vmatmul.mubr.bf16.gmra.mrb[0].mxu0 %v1094
      %v1372 = vpop.f32.mrb[0].mxu0
      %v1373 = vadd.f32 %v972, %v1372
      %v1374 = vpop.f32.mrb[0].mxu0
      %v1375 = vadd.f32 %v972, %v1374
      %v1376 = vpop.f32.mrb[0].mxu0
      %v1377 = vadd.f32 %v977, %v1376
      %v1378 = vpop.f32.mrb[0].mxu0
      %v1379 = vadd.f32 %v977, %v1378
      %1380 = vmatprep.mubr.bf16.mxu0 0
      %1381 = vmatmul.mubr.bf16.gmra.mrb[0].mxu0 %v1097
      %v1382 = vpop.f32.mrb[0].mxu0
      %v1383 = vadd.f32 %v982, %v1382
      %v1384 = vpop.f32.mrb[0].mxu0
      %v1385 = vadd.f32 %v982, %v1384
      %v1386 = vpop.f32.mrb[0].mxu0
      %v1387 = vadd.f32 %v987, %v1386
      %v1388 = vpop.f32.mrb[0].mxu0
      %v1389 = vadd.f32 %v987, %v1388
      %1390 = vmatprep.mubr.bf16.mxu0 0
      %1391 = vmatmul.mubr.bf16.gmra.mrb[0].mxu0 %v1100
      %v1392 = vpop.f32.mrb[0].mxu0
      %v1393 = vadd.f32 %v992, %v1392
      %v1394 = vpop.f32.mrb[0].mxu0
      %v1395 = vadd.f32 %v992, %v1394
      %v1396 = vpop.f32.mrb[0].mxu0
      %v1397 = vadd.f32 %v997, %v1396
      %v1398 = vpop.f32.mrb[0].mxu0
      %v1399 = vadd.f32 %v997, %v1398
      %1400 = vmatprep.mubr.bf16.mxu0 0
      %1401 = vmatmul.mubr.bf16.gmra.mrb[0].mxu0 %v1103
      %v1402 = vpop.f32.mrb[0].mxu0
      %v1403 = vadd.f32 %v1002, %v1402
      %v1404 = vpop.f32.mrb[0].mxu0
      %v1405 = vadd.f32 %v1002, %v1404
      %v1406 = vpop.f32.mrb[0].mxu0
      %v1407 = vadd.f32 %v1007, %v1406
      %v1408 = vpop.f32.mrb[0].mxu0
      %v1409 = vadd.f32 %v1007, %v1408
      %1410 = vdwg.mxu0
      %v1411 = vpack.c.bf16 %v1144, %v1140
      %v1412 = vpack.c.bf16 %v1146, %v1142
      %v1413 = vpack.c.bf16 %v1297, %v1293
      %v1414 = vpack.c.bf16 %v1299, %v1295
      %v1415 = vpack.c.bf16 %v1154, %v1150
      %v1416 = vpack.c.bf16 %v1156, %v1152
      %v1417 = vpack.c.bf16 %v1307, %v1303
      %v1418 = vpack.c.bf16 %v1309, %v1305
      %v1419 = vpack.c.bf16 %v1164, %v1160
      %v1420 = vpack.c.bf16 %v1166, %v1162
      %v1421 = vpack.c.bf16 %v1317, %v1313
      %v1422 = vpack.c.bf16 %v1319, %v1315
      %v1423 = vpack.c.bf16 %v1174, %v1170
      %v1424 = vpack.c.bf16 %v1176, %v1172
      %v1425 = vpack.c.bf16 %v1327, %v1323
      %v1426 = vpack.c.bf16 %v1329, %v1325
      %v1427 = vpack.c.bf16 %v1184, %v1180
      %v1428 = vpack.c.bf16 %v1186, %v1182
      %v1429 = vpack.c.bf16 %v1337, %v1333
      %v1430 = vpack.c.bf16 %v1339, %v1335
      %v1431 = vpack.c.bf16 %v1194, %v1190
      %v1432 = vpack.c.bf16 %v1196, %v1192
      %v1433 = vpack.c.bf16 %v1347, %v1343
      %v1434 = vpack.c.bf16 %v1349, %v1345
      %v1435 = vpack.c.bf16 %v1204, %v1200
      %v1436 = vpack.c.bf16 %v1206, %v1202
      %v1437 = vpack.c.bf16 %v1357, %v1353
      %v1438 = vpack.c.bf16 %v1359, %v1355
      %v1439 = vpack.c.bf16 %v1214, %v1210
      %v1440 = vpack.c.bf16 %v1216, %v1212
      %v1441 = vpack.c.bf16 %v1367, %v1363
      %v1442 = vpack.c.bf16 %v1369, %v1365
      %v1443 = vpack.c.bf16 %v1224, %v1220
      %v1444 = vpack.c.bf16 %v1226, %v1222
      %v1445 = vpack.c.bf16 %v1377, %v1373
      %v1446 = vpack.c.bf16 %v1379, %v1375
      %v1447 = vpack.c.bf16 %v1234, %v1230
      %v1448 = vpack.c.bf16 %v1236, %v1232
      %v1449 = vpack.c.bf16 %v1387, %v1383
      %v1450 = vpack.c.bf16 %v1389, %v1385
      %v1451 = vpack.c.bf16 %v1244, %v1240
      %v1452 = vpack.c.bf16 %v1246, %v1242
      %v1453 = vpack.c.bf16 %v1397, %v1393
      %v1454 = vpack.c.bf16 %v1399, %v1395
      %v1455 = vpack.c.bf16 %v1254, %v1250
      %v1456 = vpack.c.bf16 %v1256, %v1252
      %v1457 = vpack.c.bf16 %v1407, %v1403
      %v1458 = vpack.c.bf16 %v1409, %v1405
      %1459 = vxpose.xlu0.c.b16.start [1/8] %v1411, 128
      %1460 = vxpose.xlu0.c.b16.cont [2/8] %v1415, 128
      %1461 = vxpose.xlu0.c.b16.cont [3/8] %v1419, 128
      %1462 = vxpose.xlu0.c.b16.cont [4/8] %v1423, 128
      %1463 = vxpose.xlu0.c.b16.cont [5/8] 0, 128
      %1464 = vxpose.xlu0.c.b16.cont [6/8] 0, 128
      %1465 = vxpose.xlu0.c.b16.cont [7/8] 0, 128
      %1466 = vxpose.xlu0.c.b16.end [8/8] 0, 128
      %v1467 = vpop.trf.xlu0
      %v1468 = vpop.trf.xlu0
      %v1469 = vpop.trf.xlu0
      %v1470 = vpop.trf.xlu0
      %v1471 = vpop.trf.xlu0
      %v1472 = vpop.trf.xlu0
      %v1473 = vpop.trf.xlu0
      %v1474 = vpop.trf.xlu0
      %1475 = vxpose.xlu0.c.b16.start [1/8] %v1412, 128
      %1476 = vxpose.xlu0.c.b16.cont [2/8] %v1416, 128
      %1477 = vxpose.xlu0.c.b16.cont [3/8] %v1420, 128
      %1478 = vxpose.xlu0.c.b16.cont [4/8] %v1424, 128
      %1479 = vxpose.xlu0.c.b16.cont [5/8] 0, 128
      %1480 = vxpose.xlu0.c.b16.cont [6/8] 0, 128
      %1481 = vxpose.xlu0.c.b16.cont [7/8] 0, 128
      %1482 = vxpose.xlu0.c.b16.end [8/8] 0, 128
      %v1483 = vpop.trf.xlu0
      %v1484 = vpop.trf.xlu0
      %v1485 = vpop.trf.xlu0
      %v1486 = vpop.trf.xlu0
      %v1487 = vpop.trf.xlu0
      %v1488 = vpop.trf.xlu0
      %v1489 = vpop.trf.xlu0
      %v1490 = vpop.trf.xlu0
      %1491 = vxpose.xlu0.c.b16.start [1/8] %v1413, 128
      %1492 = vxpose.xlu0.c.b16.cont [2/8] %v1417, 128
      %1493 = vxpose.xlu0.c.b16.cont [3/8] %v1421, 128
      %1494 = vxpose.xlu0.c.b16.cont [4/8] %v1425, 128
      %1495 = vxpose.xlu0.c.b16.cont [5/8] 0, 128
      %1496 = vxpose.xlu0.c.b16.cont [6/8] 0, 128
      %1497 = vxpose.xlu0.c.b16.cont [7/8] 0, 128
      %1498 = vxpose.xlu0.c.b16.end [8/8] 0, 128
      %v1499 = vpop.trf.xlu0
      %v1500 = vpop.trf.xlu0
      %v1501 = vpop.trf.xlu0
      %v1502 = vpop.trf.xlu0
      %v1503 = vpop.trf.xlu0
      %v1504 = vpop.trf.xlu0
      %v1505 = vpop.trf.xlu0
      %v1506 = vpop.trf.xlu0
      %1507 = vxpose.xlu0.c.b16.start [1/8] %v1414, 128
      %1508 = vxpose.xlu0.c.b16.cont [2/8] %v1418, 128
      %1509 = vxpose.xlu0.c.b16.cont [3/8] %v1422, 128
      %1510 = vxpose.xlu0.c.b16.cont [4/8] %v1426, 128
      %1511 = vxpose.xlu0.c.b16.cont [5/8] 0, 128
      %1512 = vxpose.xlu0.c.b16.cont [6/8] 0, 128
      %1513 = vxpose.xlu0.c.b16.cont [7/8] 0, 128
      %1514 = vxpose.xlu0.c.b16.end [8/8] 0, 128
      %v1515 = vpop.trf.xlu0
      %v1516 = vpop.trf.xlu0
      %v1517 = vpop.trf.xlu0
      %v1518 = vpop.trf.xlu0
      %v1519 = vpop.trf.xlu0
      %v1520 = vpop.trf.xlu0
      %v1521 = vpop.trf.xlu0
      %v1522 = vpop.trf.xlu0
      %v1524 = vsel %vm406, %v1467, 0
      %v1527 = vsel %vm406, %v1468, 0
      %v1530 = vsel %vm406, %v1469, 0
      %v1533 = vsel %vm406, %v1470, 0
      %v1536 = vsel %vm406, %v1471, 0
      %v1539 = vsel %vm406, %v1472, 0
      %v1542 = vsel %vm406, %v1473, 0
      %v1545 = vsel %vm406, %v1474, 0
      %v1548 = vsel %vm406, %v1483, 0
      %v1551 = vsel %vm406, %v1484, 0
      %v1554 = vsel %vm406, %v1485, 0
      %v1557 = vsel %vm406, %v1486, 0
      %v1560 = vsel %vm406, %v1487, 0
      %v1563 = vsel %vm406, %v1488, 0
      %v1566 = vsel %vm406, %v1489, 0
      %v1569 = vsel %vm406, %v1490, 0
      %v1572 = vsel %vm406, %v1499, 0
      %v1575 = vsel %vm406, %v1500, 0
      %v1578 = vsel %vm406, %v1501, 0
      %v1581 = vsel %vm406, %v1502, 0
      %v1584 = vsel %vm406, %v1503, 0
      %v1587 = vsel %vm406, %v1504, 0
      %v1590 = vsel %vm406, %v1505, 0
      %v1593 = vsel %vm406, %v1506, 0
      %v1596 = vsel %vm406, %v1515, 0
      %v1599 = vsel %vm406, %v1516, 0
      %v1602 = vsel %vm406, %v1517, 0
      %v1605 = vsel %vm406, %v1518, 0
      %v1608 = vsel %vm406, %v1519, 0
      %v1611 = vsel %vm406, %v1520, 0
      %v1614 = vsel %vm406, %v1521, 0
      %v1617 = vsel %vm406, %v1522, 0
      %1619 = vmatprep.subr.bf16.mxu0 %v1428
      %1620 = vmatpush1.bf16.msra.mxu0 %v1427
      %1621 = vmatprep.subr.bf16.mxu0 %v1432
      %1622 = vmatpush1.bf16.msra.mxu0 %v1431
      %1623 = vmatprep.subr.bf16.mxu0 %v1436
      %1624 = vmatpush1.bf16.msra.mxu0 %v1435
      %1625 = vmatprep.subr.bf16.mxu0 %v1440
      %1626 = vmatpush1.bf16.msra.mxu0 %v1439
      %1627 = vmatprep.subr.bf16.mxu0 0
      %1628 = vmatpush1.bf16.msra.mxu0 0
      %1629 = vmatprep.subr.bf16.mxu0 0
      %1630 = vmatpush1.bf16.msra.mxu0 0
      %1631 = vmatprep.subr.bf16.mxu0 0
      %1632 = vmatpush1.bf16.msra.mxu0 0
      %1633 = vmatprep.subr.bf16.mxu0 0
      %1634 = vmatpush1.bf16.msra.mxu0 0
      %1635 = vmatprep.subr.bf16.mxu0 0
      %1636 = vmatpush1.bf16.msra.mxu0 0
      %1637 = vmatprep.subr.bf16.mxu0 0
      %1638 = vmatpush1.bf16.msra.mxu0 0
      %1639 = vmatprep.subr.bf16.mxu0 0
      %1640 = vmatpush1.bf16.msra.mxu0 0
      %1641 = vmatprep.subr.bf16.mxu0 0
      %1642 = vmatpush1.bf16.msra.mxu0 0
      %1643 = vmatprep.subr.bf16.mxu0 0
      %1644 = vmatpush1.bf16.msra.mxu0 0
      %1645 = vmatprep.subr.bf16.mxu0 0
      %1646 = vmatpush1.bf16.msra.mxu0 0
      %1647 = vmatprep.subr.bf16.mxu0 0
      %1648 = vmatpush1.bf16.msra.mxu0 0
      %1649 = vmatprep.subr.bf16.mxu0 0
      %1650 = vmatpush1.bf16.msra.mxu0 0
      %1651 = vmatprep.mubr.bf16.mxu0 0
      %1652 = vmatmul.mubr.bf16.gmra.mrb[0].mxu0 %v1524
      %v1653 = vpop.f32.mrb[0].mxu0
      %v1654 = vadd.f32 0.0, %v1653
      %v1655 = vpop.f32.mrb[0].mxu0
      %v1656 = vadd.f32 0.0, %v1655
      %v1657 = vpop.f32.mrb[0].mxu0
      %v1658 = vadd.f32 0.0, %v1657
      %v1659 = vpop.f32.mrb[0].mxu0
      %v1660 = vadd.f32 0.0, %v1659
      %1661 = vmatprep.mubr.bf16.mxu0 0
      %1662 = vmatmul.mubr.bf16.gmra.mrb[0].mxu0 %v1527
      %v1663 = vpop.f32.mrb[0].mxu0
      %v1664 = vadd.f32 0.0, %v1663
      %v1665 = vpop.f32.mrb[0].mxu0
      %v1666 = vadd.f32 0.0, %v1665
      %v1667 = vpop.f32.mrb[0].mxu0
      %v1668 = vadd.f32 0.0, %v1667
      %v1669 = vpop.f32.mrb[0].mxu0
      %v1670 = vadd.f32 0.0, %v1669
      %1671 = vmatprep.mubr.bf16.mxu0 0
      %1672 = vmatmul.mubr.bf16.gmra.mrb[0].mxu0 %v1530
      %v1673 = vpop.f32.mrb[0].mxu0
      %v1674 = vadd.f32 0.0, %v1673
      %v1675 = vpop.f32.mrb[0].mxu0
      %v1676 = vadd.f32 0.0, %v1675
      %v1677 = vpop.f32.mrb[0].mxu0
      %v1678 = vadd.f32 0.0, %v1677
      %v1679 = vpop.f32.mrb[0].mxu0
      %v1680 = vadd.f32 0.0, %v1679
      %1681 = vmatprep.mubr.bf16.mxu0 0
      %1682 = vmatmul.mubr.bf16.gmra.mrb[0].mxu0 %v1533
      %v1683 = vpop.f32.mrb[0].mxu0
      %v1684 = vadd.f32 0.0, %v1683
      %v1685 = vpop.f32.mrb[0].mxu0
      %v1686 = vadd.f32 0.0, %v1685
      %v1687 = vpop.f32.mrb[0].mxu0
      %v1688 = vadd.f32 0.0, %v1687
      %v1689 = vpop.f32.mrb[0].mxu0
      %v1690 = vadd.f32 0.0, %v1689
      %1691 = vmatprep.mubr.bf16.mxu0 0
      %1692 = vmatmul.mubr.bf16.gmra.mrb[0].mxu0 %v1536
      %v1693 = vpop.f32.mrb[0].mxu0
      %v1694 = vadd.f32 0.0, %v1693
      %v1695 = vpop.f32.mrb[0].mxu0
      %v1696 = vadd.f32 0.0, %v1695
      %v1697 = vpop.f32.mrb[0].mxu0
      %v1698 = vadd.f32 0.0, %v1697
      %v1699 = vpop.f32.mrb[0].mxu0
      %v1700 = vadd.f32 0.0, %v1699
      %1701 = vmatprep.mubr.bf16.mxu0 0
      %1702 = vmatmul.mubr.bf16.gmra.mrb[0].mxu0 %v1539
      %v1703 = vpop.f32.mrb[0].mxu0
      %v1704 = vadd.f32 0.0, %v1703
      %v1705 = vpop.f32.mrb[0].mxu0
      %v1706 = vadd.f32 0.0, %v1705
      %v1707 = vpop.f32.mrb[0].mxu0
      %v1708 = vadd.f32 0.0, %v1707
      %v1709 = vpop.f32.mrb[0].mxu0
      %v1710 = vadd.f32 0.0, %v1709
      %1711 = vmatprep.mubr.bf16.mxu0 0
      %1712 = vmatmul.mubr.bf16.gmra.mrb[0].mxu0 %v1542
      %v1713 = vpop.f32.mrb[0].mxu0
      %v1714 = vadd.f32 0.0, %v1713
      %v1715 = vpop.f32.mrb[0].mxu0
      %v1716 = vadd.f32 0.0, %v1715
      %v1717 = vpop.f32.mrb[0].mxu0
      %v1718 = vadd.f32 0.0, %v1717
      %v1719 = vpop.f32.mrb[0].mxu0
      %v1720 = vadd.f32 0.0, %v1719
      %1721 = vmatprep.mubr.bf16.mxu0 0
      %1722 = vmatmul.mubr.bf16.gmra.mrb[0].mxu0 %v1545
      %v1723 = vpop.f32.mrb[0].mxu0
      %v1724 = vadd.f32 0.0, %v1723
      %v1725 = vpop.f32.mrb[0].mxu0
      %v1726 = vadd.f32 0.0, %v1725
      %v1727 = vpop.f32.mrb[0].mxu0
      %v1728 = vadd.f32 0.0, %v1727
      %v1729 = vpop.f32.mrb[0].mxu0
      %v1730 = vadd.f32 0.0, %v1729
      %1731 = vmatprep.mubr.bf16.mxu0 0
      %1732 = vmatmul.mubr.bf16.gmra.mrb[0].mxu0 %v1548
      %v1733 = vpop.f32.mrb[0].mxu0
      %v1734 = vadd.f32 0.0, %v1733
      %v1735 = vpop.f32.mrb[0].mxu0
      %v1736 = vadd.f32 0.0, %v1735
      %v1737 = vpop.f32.mrb[0].mxu0
      %v1738 = vadd.f32 0.0, %v1737
      %v1739 = vpop.f32.mrb[0].mxu0
      %v1740 = vadd.f32 0.0, %v1739
      %1741 = vmatprep.mubr.bf16.mxu0 0
      %1742 = vmatmul.mubr.bf16.gmra.mrb[0].mxu0 %v1551
      %v1743 = vpop.f32.mrb[0].mxu0
      %v1744 = vadd.f32 0.0, %v1743
      %v1745 = vpop.f32.mrb[0].mxu0
      %v1746 = vadd.f32 0.0, %v1745
      %v1747 = vpop.f32.mrb[0].mxu0
      %v1748 = vadd.f32 0.0, %v1747
      %v1749 = vpop.f32.mrb[0].mxu0
      %v1750 = vadd.f32 0.0, %v1749
      %1751 = vmatprep.mubr.bf16.mxu0 0
      %1752 = vmatmul.mubr.bf16.gmra.mrb[0].mxu0 %v1554
      %v1753 = vpop.f32.mrb[0].mxu0
      %v1754 = vadd.f32 0.0, %v1753
      %v1755 = vpop.f32.mrb[0].mxu0
      %v1756 = vadd.f32 0.0, %v1755
      %v1757 = vpop.f32.mrb[0].mxu0
      %v1758 = vadd.f32 0.0, %v1757
      %v1759 = vpop.f32.mrb[0].mxu0
      %v1760 = vadd.f32 0.0, %v1759
      %1761 = vmatprep.mubr.bf16.mxu0 0
      %1762 = vmatmul.mubr.bf16.gmra.mrb[0].mxu0 %v1557
      %v1763 = vpop.f32.mrb[0].mxu0
      %v1764 = vadd.f32 0.0, %v1763
      %v1765 = vpop.f32.mrb[0].mxu0
      %v1766 = vadd.f32 0.0, %v1765
      %v1767 = vpop.f32.mrb[0].mxu0
      %v1768 = vadd.f32 0.0, %v1767
      %v1769 = vpop.f32.mrb[0].mxu0
      %v1770 = vadd.f32 0.0, %v1769
      %1771 = vmatprep.mubr.bf16.mxu0 0
      %1772 = vmatmul.mubr.bf16.gmra.mrb[0].mxu0 %v1560
      %v1773 = vpop.f32.mrb[0].mxu0
      %v1774 = vadd.f32 0.0, %v1773
      %v1775 = vpop.f32.mrb[0].mxu0
      %v1776 = vadd.f32 0.0, %v1775
      %v1777 = vpop.f32.mrb[0].mxu0
      %v1778 = vadd.f32 0.0, %v1777
      %v1779 = vpop.f32.mrb[0].mxu0
      %v1780 = vadd.f32 0.0, %v1779
      %1781 = vmatprep.mubr.bf16.mxu0 0
      %1782 = vmatmul.mubr.bf16.gmra.mrb[0].mxu0 %v1563
      %v1783 = vpop.f32.mrb[0].mxu0
      %v1784 = vadd.f32 0.0, %v1783
      %v1785 = vpop.f32.mrb[0].mxu0
      %v1786 = vadd.f32 0.0, %v1785
      %v1787 = vpop.f32.mrb[0].mxu0
      %v1788 = vadd.f32 0.0, %v1787
      %v1789 = vpop.f32.mrb[0].mxu0
      %v1790 = vadd.f32 0.0, %v1789
      %1791 = vmatprep.mubr.bf16.mxu0 0
      %1792 = vmatmul.mubr.bf16.gmra.mrb[0].mxu0 %v1566
      %v1793 = vpop.f32.mrb[0].mxu0
      %v1794 = vadd.f32 0.0, %v1793
      %v1795 = vpop.f32.mrb[0].mxu0
      %v1796 = vadd.f32 0.0, %v1795
      %v1797 = vpop.f32.mrb[0].mxu0
      %v1798 = vadd.f32 0.0, %v1797
      %v1799 = vpop.f32.mrb[0].mxu0
      %v1800 = vadd.f32 0.0, %v1799
      %1801 = vmatprep.mubr.bf16.mxu0 0
      %1802 = vmatmul.mubr.bf16.gmra.mrb[0].mxu0 %v1569
      %v1803 = vpop.f32.mrb[0].mxu0
      %v1804 = vadd.f32 0.0, %v1803
      %v1805 = vpop.f32.mrb[0].mxu0
      %v1806 = vadd.f32 0.0, %v1805
      %v1807 = vpop.f32.mrb[0].mxu0
      %v1808 = vadd.f32 0.0, %v1807
      %v1809 = vpop.f32.mrb[0].mxu0
      %v1810 = vadd.f32 0.0, %v1809
      %1811 = vmatprep.mubr.bf16.mxu0 0
      %1812 = vmatmul.mubr.bf16.gmra.mrb[0].mxu0 %v1572
      %v1813 = vpop.f32.mrb[0].mxu0
      %v1814 = vadd.f32 0.0, %v1813
      %v1815 = vpop.f32.mrb[0].mxu0
      %v1816 = vadd.f32 0.0, %v1815
      %v1817 = vpop.f32.mrb[0].mxu0
      %v1818 = vadd.f32 0.0, %v1817
      %v1819 = vpop.f32.mrb[0].mxu0
      %v1820 = vadd.f32 0.0, %v1819
      %1821 = vmatprep.mubr.bf16.mxu0 0
      %1822 = vmatmul.mubr.bf16.gmra.mrb[0].mxu0 %v1575
      %v1823 = vpop.f32.mrb[0].mxu0
      %v1824 = vadd.f32 0.0, %v1823
      %v1825 = vpop.f32.mrb[0].mxu0
      %v1826 = vadd.f32 0.0, %v1825
      %v1827 = vpop.f32.mrb[0].mxu0
      %v1828 = vadd.f32 0.0, %v1827
      %v1829 = vpop.f32.mrb[0].mxu0
      %v1830 = vadd.f32 0.0, %v1829
      %1831 = vmatprep.mubr.bf16.mxu0 0
      %1832 = vmatmul.mubr.bf16.gmra.mrb[0].mxu0 %v1578
      %v1833 = vpop.f32.mrb[0].mxu0
      %v1834 = vadd.f32 0.0, %v1833
      %v1835 = vpop.f32.mrb[0].mxu0
      %v1836 = vadd.f32 0.0, %v1835
      %v1837 = vpop.f32.mrb[0].mxu0
      %v1838 = vadd.f32 0.0, %v1837
      %v1839 = vpop.f32.mrb[0].mxu0
      %v1840 = vadd.f32 0.0, %v1839
      %1841 = vmatprep.mubr.bf16.mxu0 0
      %1842 = vmatmul.mubr.bf16.gmra.mrb[0].mxu0 %v1581
      %v1843 = vpop.f32.mrb[0].mxu0
      %v1844 = vadd.f32 0.0, %v1843
      %v1845 = vpop.f32.mrb[0].mxu0
      %v1846 = vadd.f32 0.0, %v1845
      %v1847 = vpop.f32.mrb[0].mxu0
      %v1848 = vadd.f32 0.0, %v1847
      %v1849 = vpop.f32.mrb[0].mxu0
      %v1850 = vadd.f32 0.0, %v1849
      %1851 = vmatprep.mubr.bf16.mxu0 0
      %1852 = vmatmul.mubr.bf16.gmra.mrb[0].mxu0 %v1584
      %v1853 = vpop.f32.mrb[0].mxu0
      %v1854 = vadd.f32 0.0, %v1853
      %v1855 = vpop.f32.mrb[0].mxu0
      %v1856 = vadd.f32 0.0, %v1855
      %v1857 = vpop.f32.mrb[0].mxu0
      %v1858 = vadd.f32 0.0, %v1857
      %v1859 = vpop.f32.mrb[0].mxu0
      %v1860 = vadd.f32 0.0, %v1859
      %1861 = vmatprep.mubr.bf16.mxu0 0
      %1862 = vmatmul.mubr.bf16.gmra.mrb[0].mxu0 %v1587
      %v1863 = vpop.f32.mrb[0].mxu0
      %v1864 = vadd.f32 0.0, %v1863
      %v1865 = vpop.f32.mrb[0].mxu0
      %v1866 = vadd.f32 0.0, %v1865
      %v1867 = vpop.f32.mrb[0].mxu0
      %v1868 = vadd.f32 0.0, %v1867
      %v1869 = vpop.f32.mrb[0].mxu0
      %v1870 = vadd.f32 0.0, %v1869
      %1871 = vmatprep.mubr.bf16.mxu0 0
      %1872 = vmatmul.mubr.bf16.gmra.mrb[0].mxu0 %v1590
      %v1873 = vpop.f32.mrb[0].mxu0
      %v1874 = vadd.f32 0.0, %v1873
      %v1875 = vpop.f32.mrb[0].mxu0
      %v1876 = vadd.f32 0.0, %v1875
      %v1877 = vpop.f32.mrb[0].mxu0
      %v1878 = vadd.f32 0.0, %v1877
      %v1879 = vpop.f32.mrb[0].mxu0
      %v1880 = vadd.f32 0.0, %v1879
      %1881 = vmatprep.mubr.bf16.mxu0 0
      %1882 = vmatmul.mubr.bf16.gmra.mrb[0].mxu0 %v1593
      %v1883 = vpop.f32.mrb[0].mxu0
      %v1884 = vadd.f32 0.0, %v1883
      %v1885 = vpop.f32.mrb[0].mxu0
      %v1886 = vadd.f32 0.0, %v1885
      %v1887 = vpop.f32.mrb[0].mxu0
      %v1888 = vadd.f32 0.0, %v1887
      %v1889 = vpop.f32.mrb[0].mxu0
      %v1890 = vadd.f32 0.0, %v1889
      %1891 = vmatprep.mubr.bf16.mxu0 0
      %1892 = vmatmul.mubr.bf16.gmra.mrb[0].mxu0 %v1596
      %v1893 = vpop.f32.mrb[0].mxu0
      %v1894 = vadd.f32 0.0, %v1893
      %v1895 = vpop.f32.mrb[0].mxu0
      %v1896 = vadd.f32 0.0, %v1895
      %v1897 = vpop.f32.mrb[0].mxu0
      %v1898 = vadd.f32 0.0, %v1897
      %v1899 = vpop.f32.mrb[0].mxu0
      %v1900 = vadd.f32 0.0, %v1899
      %1901 = vmatprep.mubr.bf16.mxu0 0
      %1902 = vmatmul.mubr.bf16.gmra.mrb[0].mxu0 %v1599
      %v1903 = vpop.f32.mrb[0].mxu0
      %v1904 = vadd.f32 0.0, %v1903
      %v1905 = vpop.f32.mrb[0].mxu0
      %v1906 = vadd.f32 0.0, %v1905
      %v1907 = vpop.f32.mrb[0].mxu0
      %v1908 = vadd.f32 0.0, %v1907
      %v1909 = vpop.f32.mrb[0].mxu0
      %v1910 = vadd.f32 0.0, %v1909
      %1911 = vmatprep.mubr.bf16.mxu0 0
      %1912 = vmatmul.mubr.bf16.gmra.mrb[0].mxu0 %v1602
      %v1913 = vpop.f32.mrb[0].mxu0
      %v1914 = vadd.f32 0.0, %v1913
      %v1915 = vpop.f32.mrb[0].mxu0
      %v1916 = vadd.f32 0.0, %v1915
      %v1917 = vpop.f32.mrb[0].mxu0
      %v1918 = vadd.f32 0.0, %v1917
      %v1919 = vpop.f32.mrb[0].mxu0
      %v1920 = vadd.f32 0.0, %v1919
      %1921 = vmatprep.mubr.bf16.mxu0 0
      %1922 = vmatmul.mubr.bf16.gmra.mrb[0].mxu0 %v1605
      %v1923 = vpop.f32.mrb[0].mxu0
      %v1924 = vadd.f32 0.0, %v1923
      %v1925 = vpop.f32.mrb[0].mxu0
      %v1926 = vadd.f32 0.0, %v1925
      %v1927 = vpop.f32.mrb[0].mxu0
      %v1928 = vadd.f32 0.0, %v1927
      %v1929 = vpop.f32.mrb[0].mxu0
      %v1930 = vadd.f32 0.0, %v1929
      %1931 = vmatprep.mubr.bf16.mxu0 0
      %1932 = vmatmul.mubr.bf16.gmra.mrb[0].mxu0 %v1608
      %v1933 = vpop.f32.mrb[0].mxu0
      %v1934 = vadd.f32 0.0, %v1933
      %v1935 = vpop.f32.mrb[0].mxu0
      %v1936 = vadd.f32 0.0, %v1935
      %v1937 = vpop.f32.mrb[0].mxu0
      %v1938 = vadd.f32 0.0, %v1937
      %v1939 = vpop.f32.mrb[0].mxu0
      %v1940 = vadd.f32 0.0, %v1939
      %1941 = vmatprep.mubr.bf16.mxu0 0
      %1942 = vmatmul.mubr.bf16.gmra.mrb[0].mxu0 %v1611
      %v1943 = vpop.f32.mrb[0].mxu0
      %v1944 = vadd.f32 0.0, %v1943
      %v1945 = vpop.f32.mrb[0].mxu0
      %v1946 = vadd.f32 0.0, %v1945
      %v1947 = vpop.f32.mrb[0].mxu0
      %v1948 = vadd.f32 0.0, %v1947
      %v1949 = vpop.f32.mrb[0].mxu0
      %v1950 = vadd.f32 0.0, %v1949
      %1951 = vmatprep.mubr.bf16.mxu0 0
      %1952 = vmatmul.mubr.bf16.gmra.mrb[0].mxu0 %v1614
      %v1953 = vpop.f32.mrb[0].mxu0
      %v1954 = vadd.f32 0.0, %v1953
      %v1955 = vpop.f32.mrb[0].mxu0
      %v1956 = vadd.f32 0.0, %v1955
      %v1957 = vpop.f32.mrb[0].mxu0
      %v1958 = vadd.f32 0.0, %v1957
      %v1959 = vpop.f32.mrb[0].mxu0
      %v1960 = vadd.f32 0.0, %v1959
      %1961 = vmatprep.mubr.bf16.mxu0 0
      %1962 = vmatmul.mubr.bf16.gmra.mrb[0].mxu0 %v1617
      %v1963 = vpop.f32.mrb[0].mxu0
      %v1964 = vadd.f32 0.0, %v1963
      %v1965 = vpop.f32.mrb[0].mxu0
      %v1966 = vadd.f32 0.0, %v1965
      %v1967 = vpop.f32.mrb[0].mxu0
      %v1968 = vadd.f32 0.0, %v1967
      %v1969 = vpop.f32.mrb[0].mxu0
      %v1970 = vadd.f32 0.0, %v1969
      %1971 = vdwg.mxu0
      %1972 = vmatprep.subr.bf16.mxu0 %v1430
      %1973 = vmatpush1.bf16.msra.mxu0 %v1429
      %1974 = vmatprep.subr.bf16.mxu0 %v1434
      %1975 = vmatpush1.bf16.msra.mxu0 %v1433
      %1976 = vmatprep.subr.bf16.mxu0 %v1438
      %1977 = vmatpush1.bf16.msra.mxu0 %v1437
      %1978 = vmatprep.subr.bf16.mxu0 %v1442
      %1979 = vmatpush1.bf16.msra.mxu0 %v1441
      %1980 = vmatprep.subr.bf16.mxu0 0
      %1981 = vmatpush1.bf16.msra.mxu0 0
      %1982 = vmatprep.subr.bf16.mxu0 0
      %1983 = vmatpush1.bf16.msra.mxu0 0
      %1984 = vmatprep.subr.bf16.mxu0 0
      %1985 = vmatpush1.bf16.msra.mxu0 0
      %1986 = vmatprep.subr.bf16.mxu0 0
      %1987 = vmatpush1.bf16.msra.mxu0 0
      %1988 = vmatprep.subr.bf16.mxu0 0
      %1989 = vmatpush1.bf16.msra.mxu0 0
      %1990 = vmatprep.subr.bf16.mxu0 0
      %1991 = vmatpush1.bf16.msra.mxu0 0
      %1992 = vmatprep.subr.bf16.mxu0 0
      %1993 = vmatpush1.bf16.msra.mxu0 0
      %1994 = vmatprep.subr.bf16.mxu0 0
      %1995 = vmatpush1.bf16.msra.mxu0 0
      %1996 = vmatprep.subr.bf16.mxu0 0
      %1997 = vmatpush1.bf16.msra.mxu0 0
      %1998 = vmatprep.subr.bf16.mxu0 0
      %1999 = vmatpush1.bf16.msra.mxu0 0
      %2000 = vmatprep.subr.bf16.mxu0 0
      %2001 = vmatpush1.bf16.msra.mxu0 0
      %2002 = vmatprep.subr.bf16.mxu0 0
      %2003 = vmatpush1.bf16.msra.mxu0 0
      %2004 = vmatprep.mubr.bf16.mxu0 0
      %2005 = vmatmul.mubr.bf16.gmra.mrb[0].mxu0 %v1524
      %v2006 = vpop.f32.mrb[0].mxu0
      %v2007 = vadd.f32 0.0, %v2006
      %v2008 = vpop.f32.mrb[0].mxu0
      %v2009 = vadd.f32 0.0, %v2008
      %v2010 = vpop.f32.mrb[0].mxu0
      %v2011 = vadd.f32 0.0, %v2010
      %v2012 = vpop.f32.mrb[0].mxu0
      %v2013 = vadd.f32 0.0, %v2012
      %2014 = vmatprep.mubr.bf16.mxu0 0
      %2015 = vmatmul.mubr.bf16.gmra.mrb[0].mxu0 %v1527
      %v2016 = vpop.f32.mrb[0].mxu0
      %v2017 = vadd.f32 0.0, %v2016
      %v2018 = vpop.f32.mrb[0].mxu0
      %v2019 = vadd.f32 0.0, %v2018
      %v2020 = vpop.f32.mrb[0].mxu0
      %v2021 = vadd.f32 0.0, %v2020
      %v2022 = vpop.f32.mrb[0].mxu0
      %v2023 = vadd.f32 0.0, %v2022
      %2024 = vmatprep.mubr.bf16.mxu0 0
      %2025 = vmatmul.mubr.bf16.gmra.mrb[0].mxu0 %v1530
      %v2026 = vpop.f32.mrb[0].mxu0
      %v2027 = vadd.f32 0.0, %v2026
      %v2028 = vpop.f32.mrb[0].mxu0
      %v2029 = vadd.f32 0.0, %v2028
      %v2030 = vpop.f32.mrb[0].mxu0
      %v2031 = vadd.f32 0.0, %v2030
      %v2032 = vpop.f32.mrb[0].mxu0
      %v2033 = vadd.f32 0.0, %v2032
      %2034 = vmatprep.mubr.bf16.mxu0 0
      %2035 = vmatmul.mubr.bf16.gmra.mrb[0].mxu0 %v1533
      %v2036 = vpop.f32.mrb[0].mxu0
      %v2037 = vadd.f32 0.0, %v2036
      %v2038 = vpop.f32.mrb[0].mxu0
      %v2039 = vadd.f32 0.0, %v2038
      %v2040 = vpop.f32.mrb[0].mxu0
      %v2041 = vadd.f32 0.0, %v2040
      %v2042 = vpop.f32.mrb[0].mxu0
      %v2043 = vadd.f32 0.0, %v2042
      %2044 = vmatprep.mubr.bf16.mxu0 0
      %2045 = vmatmul.mubr.bf16.gmra.mrb[0].mxu0 %v1536
      %v2046 = vpop.f32.mrb[0].mxu0
      %v2047 = vadd.f32 0.0, %v2046
      %v2048 = vpop.f32.mrb[0].mxu0
      %v2049 = vadd.f32 0.0, %v2048
      %v2050 = vpop.f32.mrb[0].mxu0
      %v2051 = vadd.f32 0.0, %v2050
      %v2052 = vpop.f32.mrb[0].mxu0
      %v2053 = vadd.f32 0.0, %v2052
      %2054 = vmatprep.mubr.bf16.mxu0 0
      %2055 = vmatmul.mubr.bf16.gmra.mrb[0].mxu0 %v1539
      %v2056 = vpop.f32.mrb[0].mxu0
      %v2057 = vadd.f32 0.0, %v2056
      %v2058 = vpop.f32.mrb[0].mxu0
      %v2059 = vadd.f32 0.0, %v2058
      %v2060 = vpop.f32.mrb[0].mxu0
      %v2061 = vadd.f32 0.0, %v2060
      %v2062 = vpop.f32.mrb[0].mxu0
      %v2063 = vadd.f32 0.0, %v2062
      %2064 = vmatprep.mubr.bf16.mxu0 0
      %2065 = vmatmul.mubr.bf16.gmra.mrb[0].mxu0 %v1542
      %v2066 = vpop.f32.mrb[0].mxu0
      %v2067 = vadd.f32 0.0, %v2066
      %v2068 = vpop.f32.mrb[0].mxu0
      %v2069 = vadd.f32 0.0, %v2068
      %v2070 = vpop.f32.mrb[0].mxu0
      %v2071 = vadd.f32 0.0, %v2070
      %v2072 = vpop.f32.mrb[0].mxu0
      %v2073 = vadd.f32 0.0, %v2072
      %2074 = vmatprep.mubr.bf16.mxu0 0
      %2075 = vmatmul.mubr.bf16.gmra.mrb[0].mxu0 %v1545
      %v2076 = vpop.f32.mrb[0].mxu0
      %v2077 = vadd.f32 0.0, %v2076
      %v2078 = vpop.f32.mrb[0].mxu0
      %v2079 = vadd.f32 0.0, %v2078
      %v2080 = vpop.f32.mrb[0].mxu0
      %v2081 = vadd.f32 0.0, %v2080
      %v2082 = vpop.f32.mrb[0].mxu0
      %v2083 = vadd.f32 0.0, %v2082
      %2084 = vmatprep.mubr.bf16.mxu0 0
      %2085 = vmatmul.mubr.bf16.gmra.mrb[0].mxu0 %v1548
      %v2086 = vpop.f32.mrb[0].mxu0
      %v2087 = vadd.f32 0.0, %v2086
      %v2088 = vpop.f32.mrb[0].mxu0
      %v2089 = vadd.f32 0.0, %v2088
      %v2090 = vpop.f32.mrb[0].mxu0
      %v2091 = vadd.f32 0.0, %v2090
      %v2092 = vpop.f32.mrb[0].mxu0
      %v2093 = vadd.f32 0.0, %v2092
      %2094 = vmatprep.mubr.bf16.mxu0 0
      %2095 = vmatmul.mubr.bf16.gmra.mrb[0].mxu0 %v1551
      %v2096 = vpop.f32.mrb[0].mxu0
      %v2097 = vadd.f32 0.0, %v2096
      %v2098 = vpop.f32.mrb[0].mxu0
      %v2099 = vadd.f32 0.0, %v2098
      %v2100 = vpop.f32.mrb[0].mxu0
      %v2101 = vadd.f32 0.0, %v2100
      %v2102 = vpop.f32.mrb[0].mxu0
      %v2103 = vadd.f32 0.0, %v2102
      %2104 = vmatprep.mubr.bf16.mxu0 0
      %2105 = vmatmul.mubr.bf16.gmra.mrb[0].mxu0 %v1554
      %v2106 = vpop.f32.mrb[0].mxu0
      %v2107 = vadd.f32 0.0, %v2106
      %v2108 = vpop.f32.mrb[0].mxu0
      %v2109 = vadd.f32 0.0, %v2108
      %v2110 = vpop.f32.mrb[0].mxu0
      %v2111 = vadd.f32 0.0, %v2110
      %v2112 = vpop.f32.mrb[0].mxu0
      %v2113 = vadd.f32 0.0, %v2112
      %2114 = vmatprep.mubr.bf16.mxu0 0
      %2115 = vmatmul.mubr.bf16.gmra.mrb[0].mxu0 %v1557
      %v2116 = vpop.f32.mrb[0].mxu0
      %v2117 = vadd.f32 0.0, %v2116
      %v2118 = vpop.f32.mrb[0].mxu0
      %v2119 = vadd.f32 0.0, %v2118
      %v2120 = vpop.f32.mrb[0].mxu0
      %v2121 = vadd.f32 0.0, %v2120
      %v2122 = vpop.f32.mrb[0].mxu0
      %v2123 = vadd.f32 0.0, %v2122
      %2124 = vmatprep.mubr.bf16.mxu0 0
      %2125 = vmatmul.mubr.bf16.gmra.mrb[0].mxu0 %v1560
      %v2126 = vpop.f32.mrb[0].mxu0
      %v2127 = vadd.f32 0.0, %v2126
      %v2128 = vpop.f32.mrb[0].mxu0
      %v2129 = vadd.f32 0.0, %v2128
      %v2130 = vpop.f32.mrb[0].mxu0
      %v2131 = vadd.f32 0.0, %v2130
      %v2132 = vpop.f32.mrb[0].mxu0
      %v2133 = vadd.f32 0.0, %v2132
      %2134 = vmatprep.mubr.bf16.mxu0 0
      %2135 = vmatmul.mubr.bf16.gmra.mrb[0].mxu0 %v1563
      %v2136 = vpop.f32.mrb[0].mxu0
      %v2137 = vadd.f32 0.0, %v2136
      %v2138 = vpop.f32.mrb[0].mxu0
      %v2139 = vadd.f32 0.0, %v2138
      %v2140 = vpop.f32.mrb[0].mxu0
      %v2141 = vadd.f32 0.0, %v2140
      %v2142 = vpop.f32.mrb[0].mxu0
      %v2143 = vadd.f32 0.0, %v2142
      %2144 = vmatprep.mubr.bf16.mxu0 0
      %2145 = vmatmul.mubr.bf16.gmra.mrb[0].mxu0 %v1566
      %v2146 = vpop.f32.mrb[0].mxu0
      %v2147 = vadd.f32 0.0, %v2146
      %v2148 = vpop.f32.mrb[0].mxu0
      %v2149 = vadd.f32 0.0, %v2148
      %v2150 = vpop.f32.mrb[0].mxu0
      %v2151 = vadd.f32 0.0, %v2150
      %v2152 = vpop.f32.mrb[0].mxu0
      %v2153 = vadd.f32 0.0, %v2152
      %2154 = vmatprep.mubr.bf16.mxu0 0
      %2155 = vmatmul.mubr.bf16.gmra.mrb[0].mxu0 %v1569
      %v2156 = vpop.f32.mrb[0].mxu0
      %v2157 = vadd.f32 0.0, %v2156
      %v2158 = vpop.f32.mrb[0].mxu0
      %v2159 = vadd.f32 0.0, %v2158
      %v2160 = vpop.f32.mrb[0].mxu0
      %v2161 = vadd.f32 0.0, %v2160
      %v2162 = vpop.f32.mrb[0].mxu0
      %v2163 = vadd.f32 0.0, %v2162
      %2164 = vmatprep.mubr.bf16.mxu0 0
      %2165 = vmatmul.mubr.bf16.gmra.mrb[0].mxu0 %v1572
      %v2166 = vpop.f32.mrb[0].mxu0
      %v2167 = vadd.f32 0.0, %v2166
      %v2168 = vpop.f32.mrb[0].mxu0
      %v2169 = vadd.f32 0.0, %v2168
      %v2170 = vpop.f32.mrb[0].mxu0
      %v2171 = vadd.f32 0.0, %v2170
      %v2172 = vpop.f32.mrb[0].mxu0
      %v2173 = vadd.f32 0.0, %v2172
      %2174 = vmatprep.mubr.bf16.mxu0 0
      %2175 = vmatmul.mubr.bf16.gmra.mrb[0].mxu0 %v1575
      %v2176 = vpop.f32.mrb[0].mxu0
      %v2177 = vadd.f32 0.0, %v2176
      %v2178 = vpop.f32.mrb[0].mxu0
      %v2179 = vadd.f32 0.0, %v2178
      %v2180 = vpop.f32.mrb[0].mxu0
      %v2181 = vadd.f32 0.0, %v2180
      %v2182 = vpop.f32.mrb[0].mxu0
      %v2183 = vadd.f32 0.0, %v2182
      %2184 = vmatprep.mubr.bf16.mxu0 0
      %2185 = vmatmul.mubr.bf16.gmra.mrb[0].mxu0 %v1578
      %v2186 = vpop.f32.mrb[0].mxu0
      %v2187 = vadd.f32 0.0, %v2186
      %v2188 = vpop.f32.mrb[0].mxu0
      %v2189 = vadd.f32 0.0, %v2188
      %v2190 = vpop.f32.mrb[0].mxu0
      %v2191 = vadd.f32 0.0, %v2190
      %v2192 = vpop.f32.mrb[0].mxu0
      %v2193 = vadd.f32 0.0, %v2192
      %2194 = vmatprep.mubr.bf16.mxu0 0
      %2195 = vmatmul.mubr.bf16.gmra.mrb[0].mxu0 %v1581
      %v2196 = vpop.f32.mrb[0].mxu0
      %v2197 = vadd.f32 0.0, %v2196
      %v2198 = vpop.f32.mrb[0].mxu0
      %v2199 = vadd.f32 0.0, %v2198
      %v2200 = vpop.f32.mrb[0].mxu0
      %v2201 = vadd.f32 0.0, %v2200
      %v2202 = vpop.f32.mrb[0].mxu0
      %v2203 = vadd.f32 0.0, %v2202
      %2204 = vmatprep.mubr.bf16.mxu0 0
      %2205 = vmatmul.mubr.bf16.gmra.mrb[0].mxu0 %v1584
      %v2206 = vpop.f32.mrb[0].mxu0
      %v2207 = vadd.f32 0.0, %v2206
      %v2208 = vpop.f32.mrb[0].mxu0
      %v2209 = vadd.f32 0.0, %v2208
      %v2210 = vpop.f32.mrb[0].mxu0
      %v2211 = vadd.f32 0.0, %v2210
      %v2212 = vpop.f32.mrb[0].mxu0
      %v2213 = vadd.f32 0.0, %v2212
      %2214 = vmatprep.mubr.bf16.mxu0 0
      %2215 = vmatmul.mubr.bf16.gmra.mrb[0].mxu0 %v1587
      %v2216 = vpop.f32.mrb[0].mxu0
      %v2217 = vadd.f32 0.0, %v2216
      %v2218 = vpop.f32.mrb[0].mxu0
      %v2219 = vadd.f32 0.0, %v2218
      %v2220 = vpop.f32.mrb[0].mxu0
      %v2221 = vadd.f32 0.0, %v2220
      %v2222 = vpop.f32.mrb[0].mxu0
      %v2223 = vadd.f32 0.0, %v2222
      %2224 = vmatprep.mubr.bf16.mxu0 0
      %2225 = vmatmul.mubr.bf16.gmra.mrb[0].mxu0 %v1590
      %v2226 = vpop.f32.mrb[0].mxu0
      %v2227 = vadd.f32 0.0, %v2226
      %v2228 = vpop.f32.mrb[0].mxu0
      %v2229 = vadd.f32 0.0, %v2228
      %v2230 = vpop.f32.mrb[0].mxu0
      %v2231 = vadd.f32 0.0, %v2230
      %v2232 = vpop.f32.mrb[0].mxu0
      %v2233 = vadd.f32 0.0, %v2232
      %2234 = vmatprep.mubr.bf16.mxu0 0
      %2235 = vmatmul.mubr.bf16.gmra.mrb[0].mxu0 %v1593
      %v2236 = vpop.f32.mrb[0].mxu0
      %v2237 = vadd.f32 0.0, %v2236
      %v2238 = vpop.f32.mrb[0].mxu0
      %v2239 = vadd.f32 0.0, %v2238
      %v2240 = vpop.f32.mrb[0].mxu0
      %v2241 = vadd.f32 0.0, %v2240
      %v2242 = vpop.f32.mrb[0].mxu0
      %v2243 = vadd.f32 0.0, %v2242
      %2244 = vmatprep.mubr.bf16.mxu0 0
      %2245 = vmatmul.mubr.bf16.gmra.mrb[0].mxu0 %v1596
      %v2246 = vpop.f32.mrb[0].mxu0
      %v2247 = vadd.f32 0.0, %v2246
      %v2248 = vpop.f32.mrb[0].mxu0
      %v2249 = vadd.f32 0.0, %v2248
      %v2250 = vpop.f32.mrb[0].mxu0
      %v2251 = vadd.f32 0.0, %v2250
      %v2252 = vpop.f32.mrb[0].mxu0
      %v2253 = vadd.f32 0.0, %v2252
      %2254 = vmatprep.mubr.bf16.mxu0 0
      %2255 = vmatmul.mubr.bf16.gmra.mrb[0].mxu0 %v1599
      %v2256 = vpop.f32.mrb[0].mxu0
      %v2257 = vadd.f32 0.0, %v2256
      %v2258 = vpop.f32.mrb[0].mxu0
      %v2259 = vadd.f32 0.0, %v2258
      %v2260 = vpop.f32.mrb[0].mxu0
      %v2261 = vadd.f32 0.0, %v2260
      %v2262 = vpop.f32.mrb[0].mxu0
      %v2263 = vadd.f32 0.0, %v2262
      %2264 = vmatprep.mubr.bf16.mxu0 0
      %2265 = vmatmul.mubr.bf16.gmra.mrb[0].mxu0 %v1602
      %v2266 = vpop.f32.mrb[0].mxu0
      %v2267 = vadd.f32 0.0, %v2266
      %v2268 = vpop.f32.mrb[0].mxu0
      %v2269 = vadd.f32 0.0, %v2268
      %v2270 = vpop.f32.mrb[0].mxu0
      %v2271 = vadd.f32 0.0, %v2270
      %v2272 = vpop.f32.mrb[0].mxu0
      %v2273 = vadd.f32 0.0, %v2272
      %2274 = vmatprep.mubr.bf16.mxu0 0
      %2275 = vmatmul.mubr.bf16.gmra.mrb[0].mxu0 %v1605
      %v2276 = vpop.f32.mrb[0].mxu0
      %v2277 = vadd.f32 0.0, %v2276
      %v2278 = vpop.f32.mrb[0].mxu0
      %v2279 = vadd.f32 0.0, %v2278
      %v2280 = vpop.f32.mrb[0].mxu0
      %v2281 = vadd.f32 0.0, %v2280
      %v2282 = vpop.f32.mrb[0].mxu0
      %v2283 = vadd.f32 0.0, %v2282
      %2284 = vmatprep.mubr.bf16.mxu0 0
      %2285 = vmatmul.mubr.bf16.gmra.mrb[0].mxu0 %v1608
      %v2286 = vpop.f32.mrb[0].mxu0
      %v2287 = vadd.f32 0.0, %v2286
      %v2288 = vpop.f32.mrb[0].mxu0
      %v2289 = vadd.f32 0.0, %v2288
      %v2290 = vpop.f32.mrb[0].mxu0
      %v2291 = vadd.f32 0.0, %v2290
      %v2292 = vpop.f32.mrb[0].mxu0
      %v2293 = vadd.f32 0.0, %v2292
      %2294 = vmatprep.mubr.bf16.mxu0 0
      %2295 = vmatmul.mubr.bf16.gmra.mrb[0].mxu0 %v1611
      %v2296 = vpop.f32.mrb[0].mxu0
      %v2297 = vadd.f32 0.0, %v2296
      %v2298 = vpop.f32.mrb[0].mxu0
      %v2299 = vadd.f32 0.0, %v2298
      %v2300 = vpop.f32.mrb[0].mxu0
      %v2301 = vadd.f32 0.0, %v2300
      %v2302 = vpop.f32.mrb[0].mxu0
      %v2303 = vadd.f32 0.0, %v2302
      %2304 = vmatprep.mubr.bf16.mxu0 0
      %2305 = vmatmul.mubr.bf16.gmra.mrb[0].mxu0 %v1614
      %v2306 = vpop.f32.mrb[0].mxu0
      %v2307 = vadd.f32 0.0, %v2306
      %v2308 = vpop.f32.mrb[0].mxu0
      %v2309 = vadd.f32 0.0, %v2308
      %v2310 = vpop.f32.mrb[0].mxu0
      %v2311 = vadd.f32 0.0, %v2310
      %v2312 = vpop.f32.mrb[0].mxu0
      %v2313 = vadd.f32 0.0, %v2312
      %2314 = vmatprep.mubr.bf16.mxu0 0
      %2315 = vmatmul.mubr.bf16.gmra.mrb[0].mxu0 %v1617
      %v2316 = vpop.f32.mrb[0].mxu0
      %v2317 = vadd.f32 0.0, %v2316
      %v2318 = vpop.f32.mrb[0].mxu0
      %v2319 = vadd.f32 0.0, %v2318
      %v2320 = vpop.f32.mrb[0].mxu0
      %v2321 = vadd.f32 0.0, %v2320
      %v2322 = vpop.f32.mrb[0].mxu0
      %v2323 = vadd.f32 0.0, %v2322
      %2324 = vdwg.mxu0
      %v2325 = vmax.f32 %v1654, %v1656
      %v2326 = vmax.f32 %v2325, %v2007
      %v2327 = vmax.f32 %v2326, %v2009
      %2328 = vmax.xlane.f32.xlu0 %v2327
      %v2329 = vpop.xlane.xlu0 %2328
      %v2330 = vmax.f32 %v1658, %v1660
      %v2331 = vmax.f32 %v2330, %v2011
      %v2332 = vmax.f32 %v2331, %v2013
      %2333 = vmax.xlane.f32.xlu0 %v2332
      %v2334 = vpop.xlane.xlu0 %2333
      %v2335 = vmax.f32 %v1664, %v1666
      %v2336 = vmax.f32 %v2335, %v2017
      %v2337 = vmax.f32 %v2336, %v2019
      %2338 = vmax.xlane.f32.xlu0 %v2337
      %v2339 = vpop.xlane.xlu0 %2338
      %v2340 = vmax.f32 %v1668, %v1670
      %v2341 = vmax.f32 %v2340, %v2021
      %v2342 = vmax.f32 %v2341, %v2023
      %2343 = vmax.xlane.f32.xlu0 %v2342
      %v2344 = vpop.xlane.xlu0 %2343
      %v2345 = vmax.f32 %v1674, %v1676
      %v2346 = vmax.f32 %v2345, %v2027
      %v2347 = vmax.f32 %v2346, %v2029
      %2348 = vmax.xlane.f32.xlu0 %v2347
      %v2349 = vpop.xlane.xlu0 %2348
      %v2350 = vmax.f32 %v1678, %v1680
      %v2351 = vmax.f32 %v2350, %v2031
      %v2352 = vmax.f32 %v2351, %v2033
      %2353 = vmax.xlane.f32.xlu0 %v2352
      %v2354 = vpop.xlane.xlu0 %2353
      %v2355 = vmax.f32 %v1684, %v1686
      %v2356 = vmax.f32 %v2355, %v2037
      %v2357 = vmax.f32 %v2356, %v2039
      %2358 = vmax.xlane.f32.xlu0 %v2357
      %v2359 = vpop.xlane.xlu0 %2358
      %v2360 = vmax.f32 %v1688, %v1690
      %v2361 = vmax.f32 %v2360, %v2041
      %v2362 = vmax.f32 %v2361, %v2043
      %2363 = vmax.xlane.f32.xlu0 %v2362
      %v2364 = vpop.xlane.xlu0 %2363
      %v2365 = vmax.f32 %v1694, %v1696
      %v2366 = vmax.f32 %v2365, %v2047
      %v2367 = vmax.f32 %v2366, %v2049
      %2368 = vmax.xlane.f32.xlu0 %v2367
      %v2369 = vpop.xlane.xlu0 %2368
      %v2370 = vmax.f32 %v1698, %v1700
      %v2371 = vmax.f32 %v2370, %v2051
      %v2372 = vmax.f32 %v2371, %v2053
      %2373 = vmax.xlane.f32.xlu0 %v2372
      %v2374 = vpop.xlane.xlu0 %2373
      %v2375 = vmax.f32 %v1704, %v1706
      %v2376 = vmax.f32 %v2375, %v2057
      %v2377 = vmax.f32 %v2376, %v2059
      %2378 = vmax.xlane.f32.xlu0 %v2377
      %v2379 = vpop.xlane.xlu0 %2378
      %v2380 = vmax.f32 %v1708, %v1710
      %v2381 = vmax.f32 %v2380, %v2061
      %v2382 = vmax.f32 %v2381, %v2063
      %2383 = vmax.xlane.f32.xlu0 %v2382
      %v2384 = vpop.xlane.xlu0 %2383
      %v2385 = vmax.f32 %v1714, %v1716
      %v2386 = vmax.f32 %v2385, %v2067
      %v2387 = vmax.f32 %v2386, %v2069
      %2388 = vmax.xlane.f32.xlu0 %v2387
      %v2389 = vpop.xlane.xlu0 %2388
      %v2390 = vmax.f32 %v1718, %v1720
      %v2391 = vmax.f32 %v2390, %v2071
      %v2392 = vmax.f32 %v2391, %v2073
      %2393 = vmax.xlane.f32.xlu0 %v2392
      %v2394 = vpop.xlane.xlu0 %2393
      %v2395 = vmax.f32 %v1724, %v1726
      %v2396 = vmax.f32 %v2395, %v2077
      %v2397 = vmax.f32 %v2396, %v2079
      %2398 = vmax.xlane.f32.xlu0 %v2397
      %v2399 = vpop.xlane.xlu0 %2398
      %v2400 = vmax.f32 %v1728, %v1730
      %v2401 = vmax.f32 %v2400, %v2081
      %v2402 = vmax.f32 %v2401, %v2083
      %2403 = vmax.xlane.f32.xlu0 %v2402
      %v2404 = vpop.xlane.xlu0 %2403
      %v2405 = vmax.f32 %v1734, %v1736
      %v2406 = vmax.f32 %v2405, %v2087
      %v2407 = vmax.f32 %v2406, %v2089
      %2408 = vmax.xlane.f32.xlu0 %v2407
      %v2409 = vpop.xlane.xlu0 %2408
      %v2410 = vmax.f32 %v1738, %v1740
      %v2411 = vmax.f32 %v2410, %v2091
      %v2412 = vmax.f32 %v2411, %v2093
      %2413 = vmax.xlane.f32.xlu0 %v2412
      %v2414 = vpop.xlane.xlu0 %2413
      %v2415 = vmax.f32 %v1744, %v1746
      %v2416 = vmax.f32 %v2415, %v2097
      %v2417 = vmax.f32 %v2416, %v2099
      %2418 = vmax.xlane.f32.xlu0 %v2417
      %v2419 = vpop.xlane.xlu0 %2418
      %v2420 = vmax.f32 %v1748, %v1750
      %v2421 = vmax.f32 %v2420, %v2101
      %v2422 = vmax.f32 %v2421, %v2103
      %2423 = vmax.xlane.f32.xlu0 %v2422
      %v2424 = vpop.xlane.xlu0 %2423
      %v2425 = vmax.f32 %v1754, %v1756
      %v2426 = vmax.f32 %v2425, %v2107
      %v2427 = vmax.f32 %v2426, %v2109
      %2428 = vmax.xlane.f32.xlu0 %v2427
      %v2429 = vpop.xlane.xlu0 %2428
      %v2430 = vmax.f32 %v1758, %v1760
      %v2431 = vmax.f32 %v2430, %v2111
      %v2432 = vmax.f32 %v2431, %v2113
      %2433 = vmax.xlane.f32.xlu0 %v2432
      %v2434 = vpop.xlane.xlu0 %2433
      %v2435 = vmax.f32 %v1764, %v1766
      %v2436 = vmax.f32 %v2435, %v2117
      %v2437 = vmax.f32 %v2436, %v2119
      %2438 = vmax.xlane.f32.xlu0 %v2437
      %v2439 = vpop.xlane.xlu0 %2438
      %v2440 = vmax.f32 %v1768, %v1770
      %v2441 = vmax.f32 %v2440, %v2121
      %v2442 = vmax.f32 %v2441, %v2123
      %2443 = vmax.xlane.f32.xlu0 %v2442
      %v2444 = vpop.xlane.xlu0 %2443
      %v2445 = vmax.f32 %v1774, %v1776
      %v2446 = vmax.f32 %v2445, %v2127
      %v2447 = vmax.f32 %v2446, %v2129
      %2448 = vmax.xlane.f32.xlu0 %v2447
      %v2449 = vpop.xlane.xlu0 %2448
      %v2450 = vmax.f32 %v1778, %v1780
      %v2451 = vmax.f32 %v2450, %v2131
      %v2452 = vmax.f32 %v2451, %v2133
      %2453 = vmax.xlane.f32.xlu0 %v2452
      %v2454 = vpop.xlane.xlu0 %2453
      %v2455 = vmax.f32 %v1784, %v1786
      %v2456 = vmax.f32 %v2455, %v2137
      %v2457 = vmax.f32 %v2456, %v2139
      %2458 = vmax.xlane.f32.xlu0 %v2457
      %v2459 = vpop.xlane.xlu0 %2458
      %v2460 = vmax.f32 %v1788, %v1790
      %v2461 = vmax.f32 %v2460, %v2141
      %v2462 = vmax.f32 %v2461, %v2143
      %2463 = vmax.xlane.f32.xlu0 %v2462
      %v2464 = vpop.xlane.xlu0 %2463
      %v2465 = vmax.f32 %v1794, %v1796
      %v2466 = vmax.f32 %v2465, %v2147
      %v2467 = vmax.f32 %v2466, %v2149
      %2468 = vmax.xlane.f32.xlu0 %v2467
      %v2469 = vpop.xlane.xlu0 %2468
      %v2470 = vmax.f32 %v1798, %v1800
      %v2471 = vmax.f32 %v2470, %v2151
      %v2472 = vmax.f32 %v2471, %v2153
      %2473 = vmax.xlane.f32.xlu0 %v2472
      %v2474 = vpop.xlane.xlu0 %2473
      %v2475 = vmax.f32 %v1804, %v1806
      %v2476 = vmax.f32 %v2475, %v2157
      %v2477 = vmax.f32 %v2476, %v2159
      %2478 = vmax.xlane.f32.xlu0 %v2477
      %v2479 = vpop.xlane.xlu0 %2478
      %v2480 = vmax.f32 %v1808, %v1810
      %v2481 = vmax.f32 %v2480, %v2161
      %v2482 = vmax.f32 %v2481, %v2163
      %2483 = vmax.xlane.f32.xlu0 %v2482
      %v2484 = vpop.xlane.xlu0 %2483
      %v2485 = vmax.f32 %v1814, %v1816
      %v2486 = vmax.f32 %v2485, %v2167
      %v2487 = vmax.f32 %v2486, %v2169
      %2488 = vmax.xlane.f32.xlu0 %v2487
      %v2489 = vpop.xlane.xlu0 %2488
      %v2490 = vmax.f32 %v1818, %v1820
      %v2491 = vmax.f32 %v2490, %v2171
      %v2492 = vmax.f32 %v2491, %v2173
      %2493 = vmax.xlane.f32.xlu0 %v2492
      %v2494 = vpop.xlane.xlu0 %2493
      %v2495 = vmax.f32 %v1824, %v1826
      %v2496 = vmax.f32 %v2495, %v2177
      %v2497 = vmax.f32 %v2496, %v2179
      %2498 = vmax.xlane.f32.xlu0 %v2497
      %v2499 = vpop.xlane.xlu0 %2498
      %v2500 = vmax.f32 %v1828, %v1830
      %v2501 = vmax.f32 %v2500, %v2181
      %v2502 = vmax.f32 %v2501, %v2183
      %2503 = vmax.xlane.f32.xlu0 %v2502
      %v2504 = vpop.xlane.xlu0 %2503
      %v2505 = vmax.f32 %v1834, %v1836
      %v2506 = vmax.f32 %v2505, %v2187
      %v2507 = vmax.f32 %v2506, %v2189
      %2508 = vmax.xlane.f32.xlu0 %v2507
      %v2509 = vpop.xlane.xlu0 %2508
      %v2510 = vmax.f32 %v1838, %v1840
      %v2511 = vmax.f32 %v2510, %v2191
      %v2512 = vmax.f32 %v2511, %v2193
      %2513 = vmax.xlane.f32.xlu0 %v2512
      %v2514 = vpop.xlane.xlu0 %2513
      %v2515 = vmax.f32 %v1844, %v1846
      %v2516 = vmax.f32 %v2515, %v2197
      %v2517 = vmax.f32 %v2516, %v2199
      %2518 = vmax.xlane.f32.xlu0 %v2517
      %v2519 = vpop.xlane.xlu0 %2518
      %v2520 = vmax.f32 %v1848, %v1850
      %v2521 = vmax.f32 %v2520, %v2201
      %v2522 = vmax.f32 %v2521, %v2203
      %2523 = vmax.xlane.f32.xlu0 %v2522
      %v2524 = vpop.xlane.xlu0 %2523
      %v2525 = vmax.f32 %v1854, %v1856
      %v2526 = vmax.f32 %v2525, %v2207
      %v2527 = vmax.f32 %v2526, %v2209
      %2528 = vmax.xlane.f32.xlu0 %v2527
      %v2529 = vpop.xlane.xlu0 %2528
      %v2530 = vmax.f32 %v1858, %v1860
      %v2531 = vmax.f32 %v2530, %v2211
      %v2532 = vmax.f32 %v2531, %v2213
      %2533 = vmax.xlane.f32.xlu0 %v2532
      %v2534 = vpop.xlane.xlu0 %2533
      %v2535 = vmax.f32 %v1864, %v1866
      %v2536 = vmax.f32 %v2535, %v2217
      %v2537 = vmax.f32 %v2536, %v2219
      %2538 = vmax.xlane.f32.xlu0 %v2537
      %v2539 = vpop.xlane.xlu0 %2538
      %v2540 = vmax.f32 %v1868, %v1870
      %v2541 = vmax.f32 %v2540, %v2221
      %v2542 = vmax.f32 %v2541, %v2223
      %2543 = vmax.xlane.f32.xlu0 %v2542
      %v2544 = vpop.xlane.xlu0 %2543
      %v2545 = vmax.f32 %v1874, %v1876
      %v2546 = vmax.f32 %v2545, %v2227
      %v2547 = vmax.f32 %v2546, %v2229
      %2548 = vmax.xlane.f32.xlu0 %v2547
      %v2549 = vpop.xlane.xlu0 %2548
      %v2550 = vmax.f32 %v1878, %v1880
      %v2551 = vmax.f32 %v2550, %v2231
      %v2552 = vmax.f32 %v2551, %v2233
      %2553 = vmax.xlane.f32.xlu0 %v2552
      %v2554 = vpop.xlane.xlu0 %2553
      %v2555 = vmax.f32 %v1884, %v1886
      %v2556 = vmax.f32 %v2555, %v2237
      %v2557 = vmax.f32 %v2556, %v2239
      %2558 = vmax.xlane.f32.xlu0 %v2557
      %v2559 = vpop.xlane.xlu0 %2558
      %v2560 = vmax.f32 %v1888, %v1890
      %v2561 = vmax.f32 %v2560, %v2241
      %v2562 = vmax.f32 %v2561, %v2243
      %2563 = vmax.xlane.f32.xlu0 %v2562
      %v2564 = vpop.xlane.xlu0 %2563
      %v2565 = vmax.f32 %v1894, %v1896
      %v2566 = vmax.f32 %v2565, %v2247
      %v2567 = vmax.f32 %v2566, %v2249
      %2568 = vmax.xlane.f32.xlu0 %v2567
      %v2569 = vpop.xlane.xlu0 %2568
      %v2570 = vmax.f32 %v1898, %v1900
      %v2571 = vmax.f32 %v2570, %v2251
      %v2572 = vmax.f32 %v2571, %v2253
      %2573 = vmax.xlane.f32.xlu0 %v2572
      %v2574 = vpop.xlane.xlu0 %2573
      %v2575 = vmax.f32 %v1904, %v1906
      %v2576 = vmax.f32 %v2575, %v2257
      %v2577 = vmax.f32 %v2576, %v2259
      %2578 = vmax.xlane.f32.xlu0 %v2577
      %v2579 = vpop.xlane.xlu0 %2578
      %v2580 = vmax.f32 %v1908, %v1910
      %v2581 = vmax.f32 %v2580, %v2261
      %v2582 = vmax.f32 %v2581, %v2263
      %2583 = vmax.xlane.f32.xlu0 %v2582
      %v2584 = vpop.xlane.xlu0 %2583
      %v2585 = vmax.f32 %v1914, %v1916
      %v2586 = vmax.f32 %v2585, %v2267
      %v2587 = vmax.f32 %v2586, %v2269
      %2588 = vmax.xlane.f32.xlu0 %v2587
      %v2589 = vpop.xlane.xlu0 %2588
      %v2590 = vmax.f32 %v1918, %v1920
      %v2591 = vmax.f32 %v2590, %v2271
      %v2592 = vmax.f32 %v2591, %v2273
      %2593 = vmax.xlane.f32.xlu0 %v2592
      %v2594 = vpop.xlane.xlu0 %2593
      %v2595 = vmax.f32 %v1924, %v1926
      %v2596 = vmax.f32 %v2595, %v2277
      %v2597 = vmax.f32 %v2596, %v2279
      %2598 = vmax.xlane.f32.xlu0 %v2597
      %v2599 = vpop.xlane.xlu0 %2598
      %v2600 = vmax.f32 %v1928, %v1930
      %v2601 = vmax.f32 %v2600, %v2281
      %v2602 = vmax.f32 %v2601, %v2283
      %2603 = vmax.xlane.f32.xlu0 %v2602
      %v2604 = vpop.xlane.xlu0 %2603
      %v2605 = vmax.f32 %v1934, %v1936
      %v2606 = vmax.f32 %v2605, %v2287
      %v2607 = vmax.f32 %v2606, %v2289
      %2608 = vmax.xlane.f32.xlu0 %v2607
      %v2609 = vpop.xlane.xlu0 %2608
      %v2610 = vmax.f32 %v1938, %v1940
      %v2611 = vmax.f32 %v2610, %v2291
      %v2612 = vmax.f32 %v2611, %v2293
      %2613 = vmax.xlane.f32.xlu0 %v2612
      %v2614 = vpop.xlane.xlu0 %2613
      %v2615 = vmax.f32 %v1944, %v1946
      %v2616 = vmax.f32 %v2615, %v2297
      %v2617 = vmax.f32 %v2616, %v2299
      %2618 = vmax.xlane.f32.xlu0 %v2617
      %v2619 = vpop.xlane.xlu0 %2618
      %v2620 = vmax.f32 %v1948, %v1950
      %v2621 = vmax.f32 %v2620, %v2301
      %v2622 = vmax.f32 %v2621, %v2303
      %2623 = vmax.xlane.f32.xlu0 %v2622
      %v2624 = vpop.xlane.xlu0 %2623
      %v2625 = vmax.f32 %v1954, %v1956
      %v2626 = vmax.f32 %v2625, %v2307
      %v2627 = vmax.f32 %v2626, %v2309
      %2628 = vmax.xlane.f32.xlu0 %v2627
      %v2629 = vpop.xlane.xlu0 %2628
      %v2630 = vmax.f32 %v1958, %v1960
      %v2631 = vmax.f32 %v2630, %v2311
      %v2632 = vmax.f32 %v2631, %v2313
      %2633 = vmax.xlane.f32.xlu0 %v2632
      %v2634 = vpop.xlane.xlu0 %2633
      %v2635 = vmax.f32 %v1964, %v1966
      %v2636 = vmax.f32 %v2635, %v2317
      %v2637 = vmax.f32 %v2636, %v2319
      %2638 = vmax.xlane.f32.xlu0 %v2637
      %v2639 = vpop.xlane.xlu0 %2638
      %v2640 = vmax.f32 %v1968, %v1970
      %v2641 = vmax.f32 %v2640, %v2321
      %v2642 = vmax.f32 %v2641, %v2323
      %2643 = vmax.xlane.f32.xlu0 %v2642
      %v2644 = vpop.xlane.xlu0 %2643
      %v2645 = vsub.f32 %v1654, %v2329
      %v2646 = vsub.f32 %v1656, %v2329
      %v2647 = vsub.f32 %v2007, %v2329
      %v2648 = vsub.f32 %v2009, %v2329
      %v2649 = vsub.f32 %v1658, %v2334
      %v2650 = vsub.f32 %v1660, %v2334
      %v2651 = vsub.f32 %v2011, %v2334
      %v2652 = vsub.f32 %v2013, %v2334
      %v2653 = vsub.f32 %v1664, %v2339
      %v2654 = vsub.f32 %v1666, %v2339
      %v2655 = vsub.f32 %v2017, %v2339
      %v2656 = vsub.f32 %v2019, %v2339
      %v2657 = vsub.f32 %v1668, %v2344
      %v2658 = vsub.f32 %v1670, %v2344
      %v2659 = vsub.f32 %v2021, %v2344
      %v2660 = vsub.f32 %v2023, %v2344
      %v2661 = vsub.f32 %v1674, %v2349
      %v2662 = vsub.f32 %v1676, %v2349
      %v2663 = vsub.f32 %v2027, %v2349
      %v2664 = vsub.f32 %v2029, %v2349
      %v2665 = vsub.f32 %v1678, %v2354
      %v2666 = vsub.f32 %v1680, %v2354
      %v2667 = vsub.f32 %v2031, %v2354
      %v2668 = vsub.f32 %v2033, %v2354
      %v2669 = vsub.f32 %v1684, %v2359
      %v2670 = vsub.f32 %v1686, %v2359
      %v2671 = vsub.f32 %v2037, %v2359
      %v2672 = vsub.f32 %v2039, %v2359
      %v2673 = vsub.f32 %v1688, %v2364
      %v2674 = vsub.f32 %v1690, %v2364
      %v2675 = vsub.f32 %v2041, %v2364
      %v2676 = vsub.f32 %v2043, %v2364
      %v2677 = vsub.f32 %v1694, %v2369
      %v2678 = vsub.f32 %v1696, %v2369
      %v2679 = vsub.f32 %v2047, %v2369
      %v2680 = vsub.f32 %v2049, %v2369
      %v2681 = vsub.f32 %v1698, %v2374
      %v2682 = vsub.f32 %v1700, %v2374
      %v2683 = vsub.f32 %v2051, %v2374
      %v2684 = vsub.f32 %v2053, %v2374
      %v2685 = vsub.f32 %v1704, %v2379
      %v2686 = vsub.f32 %v1706, %v2379
      %v2687 = vsub.f32 %v2057, %v2379
      %v2688 = vsub.f32 %v2059, %v2379
      %v2689 = vsub.f32 %v1708, %v2384
      %v2690 = vsub.f32 %v1710, %v2384
      %v2691 = vsub.f32 %v2061, %v2384
      %v2692 = vsub.f32 %v2063, %v2384
      %v2693 = vsub.f32 %v1714, %v2389
      %v2694 = vsub.f32 %v1716, %v2389
      %v2695 = vsub.f32 %v2067, %v2389
      %v2696 = vsub.f32 %v2069, %v2389
      %v2697 = vsub.f32 %v1718, %v2394
      %v2698 = vsub.f32 %v1720, %v2394
      %v2699 = vsub.f32 %v2071, %v2394
      %v2700 = vsub.f32 %v2073, %v2394
      %v2701 = vsub.f32 %v1724, %v2399
      %v2702 = vsub.f32 %v1726, %v2399
      %v2703 = vsub.f32 %v2077, %v2399
      %v2704 = vsub.f32 %v2079, %v2399
      %v2705 = vsub.f32 %v1728, %v2404
      %v2706 = vsub.f32 %v1730, %v2404
      %v2707 = vsub.f32 %v2081, %v2404
      %v2708 = vsub.f32 %v2083, %v2404
      %v2709 = vsub.f32 %v1734, %v2409
      %v2710 = vsub.f32 %v1736, %v2409
      %v2711 = vsub.f32 %v2087, %v2409
      %v2712 = vsub.f32 %v2089, %v2409
      %v2713 = vsub.f32 %v1738, %v2414
      %v2714 = vsub.f32 %v1740, %v2414
      %v2715 = vsub.f32 %v2091, %v2414
      %v2716 = vsub.f32 %v2093, %v2414
      %v2717 = vsub.f32 %v1744, %v2419
      %v2718 = vsub.f32 %v1746, %v2419
      %v2719 = vsub.f32 %v2097, %v2419
      %v2720 = vsub.f32 %v2099, %v2419
      %v2721 = vsub.f32 %v1748, %v2424
      %v2722 = vsub.f32 %v1750, %v2424
      %v2723 = vsub.f32 %v2101, %v2424
      %v2724 = vsub.f32 %v2103, %v2424
      %v2725 = vsub.f32 %v1754, %v2429
      %v2726 = vsub.f32 %v1756, %v2429
      %v2727 = vsub.f32 %v2107, %v2429
      %v2728 = vsub.f32 %v2109, %v2429
      %v2729 = vsub.f32 %v1758, %v2434
      %v2730 = vsub.f32 %v1760, %v2434
      %v2731 = vsub.f32 %v2111, %v2434
      %v2732 = vsub.f32 %v2113, %v2434
      %v2733 = vsub.f32 %v1764, %v2439
      %v2734 = vsub.f32 %v1766, %v2439
      %v2735 = vsub.f32 %v2117, %v2439
      %v2736 = vsub.f32 %v2119, %v2439
      %v2737 = vsub.f32 %v1768, %v2444
      %v2738 = vsub.f32 %v1770, %v2444
      %v2739 = vsub.f32 %v2121, %v2444
      %v2740 = vsub.f32 %v2123, %v2444
      %v2741 = vsub.f32 %v1774, %v2449
      %v2742 = vsub.f32 %v1776, %v2449
      %v2743 = vsub.f32 %v2127, %v2449
      %v2744 = vsub.f32 %v2129, %v2449
      %v2745 = vsub.f32 %v1778, %v2454
      %v2746 = vsub.f32 %v1780, %v2454
      %v2747 = vsub.f32 %v2131, %v2454
      %v2748 = vsub.f32 %v2133, %v2454
      %v2749 = vsub.f32 %v1784, %v2459
      %v2750 = vsub.f32 %v1786, %v2459
      %v2751 = vsub.f32 %v2137, %v2459
      %v2752 = vsub.f32 %v2139, %v2459
      %v2753 = vsub.f32 %v1788, %v2464
      %v2754 = vsub.f32 %v1790, %v2464
      %v2755 = vsub.f32 %v2141, %v2464
      %v2756 = vsub.f32 %v2143, %v2464
      %v2757 = vsub.f32 %v1794, %v2469
      %v2758 = vsub.f32 %v1796, %v2469
      %v2759 = vsub.f32 %v2147, %v2469
      %v2760 = vsub.f32 %v2149, %v2469
      %v2761 = vsub.f32 %v1798, %v2474
      %v2762 = vsub.f32 %v1800, %v2474
      %v2763 = vsub.f32 %v2151, %v2474
      %v2764 = vsub.f32 %v2153, %v2474
      %v2765 = vsub.f32 %v1804, %v2479
      %v2766 = vsub.f32 %v1806, %v2479
      %v2767 = vsub.f32 %v2157, %v2479
      %v2768 = vsub.f32 %v2159, %v2479
      %v2769 = vsub.f32 %v1808, %v2484
      %v2770 = vsub.f32 %v1810, %v2484
      %v2771 = vsub.f32 %v2161, %v2484
      %v2772 = vsub.f32 %v2163, %v2484
      %v2773 = vsub.f32 %v1814, %v2489
      %v2774 = vsub.f32 %v1816, %v2489
      %v2775 = vsub.f32 %v2167, %v2489
      %v2776 = vsub.f32 %v2169, %v2489
      %v2777 = vsub.f32 %v1818, %v2494
      %v2778 = vsub.f32 %v1820, %v2494
      %v2779 = vsub.f32 %v2171, %v2494
      %v2780 = vsub.f32 %v2173, %v2494
      %v2781 = vsub.f32 %v1824, %v2499
      %v2782 = vsub.f32 %v1826, %v2499
      %v2783 = vsub.f32 %v2177, %v2499
      %v2784 = vsub.f32 %v2179, %v2499
      %v2785 = vsub.f32 %v1828, %v2504
      %v2786 = vsub.f32 %v1830, %v2504
      %v2787 = vsub.f32 %v2181, %v2504
      %v2788 = vsub.f32 %v2183, %v2504
      %v2789 = vsub.f32 %v1834, %v2509
      %v2790 = vsub.f32 %v1836, %v2509
      %v2791 = vsub.f32 %v2187, %v2509
      %v2792 = vsub.f32 %v2189, %v2509
      %v2793 = vsub.f32 %v1838, %v2514
      %v2794 = vsub.f32 %v1840, %v2514
      %v2795 = vsub.f32 %v2191, %v2514
      %v2796 = vsub.f32 %v2193, %v2514
      %v2797 = vsub.f32 %v1844, %v2519
      %v2798 = vsub.f32 %v1846, %v2519
      %v2799 = vsub.f32 %v2197, %v2519
      %v2800 = vsub.f32 %v2199, %v2519
      %v2801 = vsub.f32 %v1848, %v2524
      %v2802 = vsub.f32 %v1850, %v2524
      %v2803 = vsub.f32 %v2201, %v2524
      %v2804 = vsub.f32 %v2203, %v2524
      %v2805 = vsub.f32 %v1854, %v2529
      %v2806 = vsub.f32 %v1856, %v2529
      %v2807 = vsub.f32 %v2207, %v2529
      %v2808 = vsub.f32 %v2209, %v2529
      %v2809 = vsub.f32 %v1858, %v2534
      %v2810 = vsub.f32 %v1860, %v2534
      %v2811 = vsub.f32 %v2211, %v2534
      %v2812 = vsub.f32 %v2213, %v2534
      %v2813 = vsub.f32 %v1864, %v2539
      %v2814 = vsub.f32 %v1866, %v2539
      %v2815 = vsub.f32 %v2217, %v2539
      %v2816 = vsub.f32 %v2219, %v2539
      %v2817 = vsub.f32 %v1868, %v2544
      %v2818 = vsub.f32 %v1870, %v2544
      %v2819 = vsub.f32 %v2221, %v2544
      %v2820 = vsub.f32 %v2223, %v2544
      %v2821 = vsub.f32 %v1874, %v2549
      %v2822 = vsub.f32 %v1876, %v2549
      %v2823 = vsub.f32 %v2227, %v2549
      %v2824 = vsub.f32 %v2229, %v2549
      %v2825 = vsub.f32 %v1878, %v2554
      %v2826 = vsub.f32 %v1880, %v2554
      %v2827 = vsub.f32 %v2231, %v2554
      %v2828 = vsub.f32 %v2233, %v2554
      %v2829 = vsub.f32 %v1884, %v2559
      %v2830 = vsub.f32 %v1886, %v2559
      %v2831 = vsub.f32 %v2237, %v2559
      %v2832 = vsub.f32 %v2239, %v2559
      %v2833 = vsub.f32 %v1888, %v2564
      %v2834 = vsub.f32 %v1890, %v2564
      %v2835 = vsub.f32 %v2241, %v2564
      %v2836 = vsub.f32 %v2243, %v2564
      %v2837 = vsub.f32 %v1894, %v2569
      %v2838 = vsub.f32 %v1896, %v2569
      %v2839 = vsub.f32 %v2247, %v2569
      %v2840 = vsub.f32 %v2249, %v2569
      %v2841 = vsub.f32 %v1898, %v2574
      %v2842 = vsub.f32 %v1900, %v2574
      %v2843 = vsub.f32 %v2251, %v2574
      %v2844 = vsub.f32 %v2253, %v2574
      %v2845 = vsub.f32 %v1904, %v2579
      %v2846 = vsub.f32 %v1906, %v2579
      %v2847 = vsub.f32 %v2257, %v2579
      %v2848 = vsub.f32 %v2259, %v2579
      %v2849 = vsub.f32 %v1908, %v2584
      %v2850 = vsub.f32 %v1910, %v2584
      %v2851 = vsub.f32 %v2261, %v2584
      %v2852 = vsub.f32 %v2263, %v2584
      %v2853 = vsub.f32 %v1914, %v2589
      %v2854 = vsub.f32 %v1916, %v2589
      %v2855 = vsub.f32 %v2267, %v2589
      %v2856 = vsub.f32 %v2269, %v2589
      %v2857 = vsub.f32 %v1918, %v2594
      %v2858 = vsub.f32 %v1920, %v2594
      %v2859 = vsub.f32 %v2271, %v2594
      %v2860 = vsub.f32 %v2273, %v2594
      %v2861 = vsub.f32 %v1924, %v2599
      %v2862 = vsub.f32 %v1926, %v2599
      %v2863 = vsub.f32 %v2277, %v2599
      %v2864 = vsub.f32 %v2279, %v2599
      %v2865 = vsub.f32 %v1928, %v2604
      %v2866 = vsub.f32 %v1930, %v2604
      %v2867 = vsub.f32 %v2281, %v2604
      %v2868 = vsub.f32 %v2283, %v2604
      %v2869 = vsub.f32 %v1934, %v2609
      %v2870 = vsub.f32 %v1936, %v2609
      %v2871 = vsub.f32 %v2287, %v2609
      %v2872 = vsub.f32 %v2289, %v2609
      %v2873 = vsub.f32 %v1938, %v2614
      %v2874 = vsub.f32 %v1940, %v2614
      %v2875 = vsub.f32 %v2291, %v2614
      %v2876 = vsub.f32 %v2293, %v2614
      %v2877 = vsub.f32 %v1944, %v2619
      %v2878 = vsub.f32 %v1946, %v2619
      %v2879 = vsub.f32 %v2297, %v2619
      %v2880 = vsub.f32 %v2299, %v2619
      %v2881 = vsub.f32 %v1948, %v2624
      %v2882 = vsub.f32 %v1950, %v2624
      %v2883 = vsub.f32 %v2301, %v2624
      %v2884 = vsub.f32 %v2303, %v2624
      %v2885 = vsub.f32 %v1954, %v2629
      %v2886 = vsub.f32 %v1956, %v2629
      %v2887 = vsub.f32 %v2307, %v2629
      %v2888 = vsub.f32 %v2309, %v2629
      %v2889 = vsub.f32 %v1958, %v2634
      %v2890 = vsub.f32 %v1960, %v2634
      %v2891 = vsub.f32 %v2311, %v2634
      %v2892 = vsub.f32 %v2313, %v2634
      %v2893 = vsub.f32 %v1964, %v2639
      %v2894 = vsub.f32 %v1966, %v2639
      %v2895 = vsub.f32 %v2317, %v2639
      %v2896 = vsub.f32 %v2319, %v2639
      %v2897 = vsub.f32 %v1968, %v2644
      %v2898 = vsub.f32 %v1970, %v2644
      %v2899 = vsub.f32 %v2321, %v2644
      %v2900 = vsub.f32 %v2323, %v2644
      %v2901 = vmul.f32 %v2645, 1.442695
      %v2902 = vpow.pop %v2901
      %v2903 = vmul.f32 %v2646, 1.442695
      %v2904 = vpow.pop %v2903
      %v2905 = vmul.f32 %v2647, 1.442695
      %v2906 = vpow.pop %v2905
      %v2907 = vmul.f32 %v2648, 1.442695
      %v2908 = vpow.pop %v2907
      %v2909 = vmul.f32 %v2649, 1.442695
      %v2910 = vpow.pop %v2909
      %v2911 = vmul.f32 %v2650, 1.442695
      %v2912 = vpow.pop %v2911
      %v2913 = vmul.f32 %v2651, 1.442695
      %v2914 = vpow.pop %v2913
      %v2915 = vmul.f32 %v2652, 1.442695
      %v2916 = vpow.pop %v2915
      %v2917 = vmul.f32 %v2653, 1.442695
      %v2918 = vpow.pop %v2917
      %v2919 = vmul.f32 %v2654, 1.442695
      %v2920 = vpow.pop %v2919
      %v2921 = vmul.f32 %v2655, 1.442695
      %v2922 = vpow.pop %v2921
      %v2923 = vmul.f32 %v2656, 1.442695
      %v2924 = vpow.pop %v2923
      %v2925 = vmul.f32 %v2657, 1.442695
      %v2926 = vpow.pop %v2925
      %v2927 = vmul.f32 %v2658, 1.442695
      %v2928 = vpow.pop %v2927
      %v2929 = vmul.f32 %v2659, 1.442695
      %v2930 = vpow.pop %v2929
      %v2931 = vmul.f32 %v2660, 1.442695
      %v2932 = vpow.pop %v2931
      %v2933 = vmul.f32 %v2661, 1.442695
      %v2934 = vpow.pop %v2933
      %v2935 = vmul.f32 %v2662, 1.442695
      %v2936 = vpow.pop %v2935
      %v2937 = vmul.f32 %v2663, 1.442695
      %v2938 = vpow.pop %v2937
      %v2939 = vmul.f32 %v2664, 1.442695
      %v2940 = vpow.pop %v2939
      %v2941 = vmul.f32 %v2665, 1.442695
      %v2942 = vpow.pop %v2941
      %v2943 = vmul.f32 %v2666, 1.442695
      %v2944 = vpow.pop %v2943
      %v2945 = vmul.f32 %v2667, 1.442695
      %v2946 = vpow.pop %v2945
      %v2947 = vmul.f32 %v2668, 1.442695
      %v2948 = vpow.pop %v2947
      %v2949 = vmul.f32 %v2669, 1.442695
      %v2950 = vpow.pop %v2949
      %v2951 = vmul.f32 %v2670, 1.442695
      %v2952 = vpow.pop %v2951
      %v2953 = vmul.f32 %v2671, 1.442695
      %v2954 = vpow.pop %v2953
      %v2955 = vmul.f32 %v2672, 1.442695
      %v2956 = vpow.pop %v2955
      %v2957 = vmul.f32 %v2673, 1.442695
      %v2958 = vpow.pop %v2957
      %v2959 = vmul.f32 %v2674, 1.442695
      %v2960 = vpow.pop %v2959
      %v2961 = vmul.f32 %v2675, 1.442695
      %v2962 = vpow.pop %v2961
      %v2963 = vmul.f32 %v2676, 1.442695
      %v2964 = vpow.pop %v2963
      %v2965 = vmul.f32 %v2677, 1.442695
      %v2966 = vpow.pop %v2965
      %v2967 = vmul.f32 %v2678, 1.442695
      %v2968 = vpow.pop %v2967
      %v2969 = vmul.f32 %v2679, 1.442695
      %v2970 = vpow.pop %v2969
      %v2971 = vmul.f32 %v2680, 1.442695
      %v2972 = vpow.pop %v2971
      %v2973 = vmul.f32 %v2681, 1.442695
      %v2974 = vpow.pop %v2973
      %v2975 = vmul.f32 %v2682, 1.442695
      %v2976 = vpow.pop %v2975
      %v2977 = vmul.f32 %v2683, 1.442695
      %v2978 = vpow.pop %v2977
      %v2979 = vmul.f32 %v2684, 1.442695
      %v2980 = vpow.pop %v2979
      %v2981 = vmul.f32 %v2685, 1.442695
      %v2982 = vpow.pop %v2981
      %v2983 = vmul.f32 %v2686, 1.442695
      %v2984 = vpow.pop %v2983
      %v2985 = vmul.f32 %v2687, 1.442695
      %v2986 = vpow.pop %v2985
      %v2987 = vmul.f32 %v2688, 1.442695
      %v2988 = vpow.pop %v2987
      %v2989 = vmul.f32 %v2689, 1.442695
      %v2990 = vpow.pop %v2989
      %v2991 = vmul.f32 %v2690, 1.442695
      %v2992 = vpow.pop %v2991
      %v2993 = vmul.f32 %v2691, 1.442695
      %v2994 = vpow.pop %v2993
      %v2995 = vmul.f32 %v2692, 1.442695
      %v2996 = vpow.pop %v2995
      %v2997 = vmul.f32 %v2693, 1.442695
      %v2998 = vpow.pop %v2997
      %v2999 = vmul.f32 %v2694, 1.442695
      %v3000 = vpow.pop %v2999
      %v3001 = vmul.f32 %v2695, 1.442695
      %v3002 = vpow.pop %v3001
      %v3003 = vmul.f32 %v2696, 1.442695
      %v3004 = vpow.pop %v3003
      %v3005 = vmul.f32 %v2697, 1.442695
      %v3006 = vpow.pop %v3005
      %v3007 = vmul.f32 %v2698, 1.442695
      %v3008 = vpow.pop %v3007
      %v3009 = vmul.f32 %v2699, 1.442695
      %v3010 = vpow.pop %v3009
      %v3011 = vmul.f32 %v2700, 1.442695
      %v3012 = vpow.pop %v3011
      %v3013 = vmul.f32 %v2701, 1.442695
      %v3014 = vpow.pop %v3013
      %v3015 = vmul.f32 %v2702, 1.442695
      %v3016 = vpow.pop %v3015
      %v3017 = vmul.f32 %v2703, 1.442695
      %v3018 = vpow.pop %v3017
      %v3019 = vmul.f32 %v2704, 1.442695
      %v3020 = vpow.pop %v3019
      %v3021 = vmul.f32 %v2705, 1.442695
      %v3022 = vpow.pop %v3021
      %v3023 = vmul.f32 %v2706, 1.442695
      %v3024 = vpow.pop %v3023
      %v3025 = vmul.f32 %v2707, 1.442695
      %v3026 = vpow.pop %v3025
      %v3027 = vmul.f32 %v2708, 1.442695
      %v3028 = vpow.pop %v3027
      %v3029 = vmul.f32 %v2709, 1.442695
      %v3030 = vpow.pop %v3029
      %v3031 = vmul.f32 %v2710, 1.442695
      %v3032 = vpow.pop %v3031
      %v3033 = vmul.f32 %v2711, 1.442695
      %v3034 = vpow.pop %v3033
      %v3035 = vmul.f32 %v2712, 1.442695
      %v3036 = vpow.pop %v3035
      %v3037 = vmul.f32 %v2713, 1.442695
      %v3038 = vpow.pop %v3037
      %v3039 = vmul.f32 %v2714, 1.442695
      %v3040 = vpow.pop %v3039
      %v3041 = vmul.f32 %v2715, 1.442695
      %v3042 = vpow.pop %v3041
      %v3043 = vmul.f32 %v2716, 1.442695
      %v3044 = vpow.pop %v3043
      %v3045 = vmul.f32 %v2717, 1.442695
      %v3046 = vpow.pop %v3045
      %v3047 = vmul.f32 %v2718, 1.442695
      %v3048 = vpow.pop %v3047
      %v3049 = vmul.f32 %v2719, 1.442695
      %v3050 = vpow.pop %v3049
      %v3051 = vmul.f32 %v2720, 1.442695
      %v3052 = vpow.pop %v3051
      %v3053 = vmul.f32 %v2721, 1.442695
      %v3054 = vpow.pop %v3053
      %v3055 = vmul.f32 %v2722, 1.442695
      %v3056 = vpow.pop %v3055
      %v3057 = vmul.f32 %v2723, 1.442695
      %v3058 = vpow.pop %v3057
      %v3059 = vmul.f32 %v2724, 1.442695
      %v3060 = vpow.pop %v3059
      %v3061 = vmul.f32 %v2725, 1.442695
      %v3062 = vpow.pop %v3061
      %v3063 = vmul.f32 %v2726, 1.442695
      %v3064 = vpow.pop %v3063
      %v3065 = vmul.f32 %v2727, 1.442695
      %v3066 = vpow.pop %v3065
      %v3067 = vmul.f32 %v2728, 1.442695
      %v3068 = vpow.pop %v3067
      %v3069 = vmul.f32 %v2729, 1.442695
      %v3070 = vpow.pop %v3069
      %v3071 = vmul.f32 %v2730, 1.442695
      %v3072 = vpow.pop %v3071
      %v3073 = vmul.f32 %v2731, 1.442695
      %v3074 = vpow.pop %v3073
      %v3075 = vmul.f32 %v2732, 1.442695
      %v3076 = vpow.pop %v3075
      %v3077 = vmul.f32 %v2733, 1.442695
      %v3078 = vpow.pop %v3077
      %v3079 = vmul.f32 %v2734, 1.442695
      %v3080 = vpow.pop %v3079
      %v3081 = vmul.f32 %v2735, 1.442695
      %v3082 = vpow.pop %v3081
      %v3083 = vmul.f32 %v2736, 1.442695
      %v3084 = vpow.pop %v3083
      %v3085 = vmul.f32 %v2737, 1.442695
      %v3086 = vpow.pop %v3085
      %v3087 = vmul.f32 %v2738, 1.442695
      %v3088 = vpow.pop %v3087
      %v3089 = vmul.f32 %v2739, 1.442695
      %v3090 = vpow.pop %v3089
      %v3091 = vmul.f32 %v2740, 1.442695
      %v3092 = vpow.pop %v3091
      %v3093 = vmul.f32 %v2741, 1.442695
      %v3094 = vpow.pop %v3093
      %v3095 = vmul.f32 %v2742, 1.442695
      %v3096 = vpow.pop %v3095
      %v3097 = vmul.f32 %v2743, 1.442695
      %v3098 = vpow.pop %v3097
      %v3099 = vmul.f32 %v2744, 1.442695
      %v3100 = vpow.pop %v3099
      %v3101 = vmul.f32 %v2745, 1.442695
      %v3102 = vpow.pop %v3101
      %v3103 = vmul.f32 %v2746, 1.442695
      %v3104 = vpow.pop %v3103
      %v3105 = vmul.f32 %v2747, 1.442695
      %v3106 = vpow.pop %v3105
      %v3107 = vmul.f32 %v2748, 1.442695
      %v3108 = vpow.pop %v3107
      %v3109 = vmul.f32 %v2749, 1.442695
      %v3110 = vpow.pop %v3109
      %v3111 = vmul.f32 %v2750, 1.442695
      %v3112 = vpow.pop %v3111
      %v3113 = vmul.f32 %v2751, 1.442695
      %v3114 = vpow.pop %v3113
      %v3115 = vmul.f32 %v2752, 1.442695
      %v3116 = vpow.pop %v3115
      %v3117 = vmul.f32 %v2753, 1.442695
      %v3118 = vpow.pop %v3117
      %v3119 = vmul.f32 %v2754, 1.442695
      %v3120 = vpow.pop %v3119
      %v3121 = vmul.f32 %v2755, 1.442695
      %v3122 = vpow.pop %v3121
      %v3123 = vmul.f32 %v2756, 1.442695
      %v3124 = vpow.pop %v3123
      %v3125 = vmul.f32 %v2757, 1.442695
      %v3126 = vpow.pop %v3125
      %v3127 = vmul.f32 %v2758, 1.442695
      %v3128 = vpow.pop %v3127
      %v3129 = vmul.f32 %v2759, 1.442695
      %v3130 = vpow.pop %v3129
      %v3131 = vmul.f32 %v2760, 1.442695
      %v3132 = vpow.pop %v3131
      %v3133 = vmul.f32 %v2761, 1.442695
      %v3134 = vpow.pop %v3133
      %v3135 = vmul.f32 %v2762, 1.442695
      %v3136 = vpow.pop %v3135
      %v3137 = vmul.f32 %v2763, 1.442695
      %v3138 = vpow.pop %v3137
      %v3139 = vmul.f32 %v2764, 1.442695
      %v3140 = vpow.pop %v3139
      %v3141 = vmul.f32 %v2765, 1.442695
      %v3142 = vpow.pop %v3141
      %v3143 = vmul.f32 %v2766, 1.442695
      %v3144 = vpow.pop %v3143
      %v3145 = vmul.f32 %v2767, 1.442695
      %v3146 = vpow.pop %v3145
      %v3147 = vmul.f32 %v2768, 1.442695
      %v3148 = vpow.pop %v3147
      %v3149 = vmul.f32 %v2769, 1.442695
      %v3150 = vpow.pop %v3149
      %v3151 = vmul.f32 %v2770, 1.442695
      %v3152 = vpow.pop %v3151
      %v3153 = vmul.f32 %v2771, 1.442695
      %v3154 = vpow.pop %v3153
      %v3155 = vmul.f32 %v2772, 1.442695
      %v3156 = vpow.pop %v3155
      %v3157 = vmul.f32 %v2773, 1.442695
      %v3158 = vpow.pop %v3157
      %v3159 = vmul.f32 %v2774, 1.442695
      %v3160 = vpow.pop %v3159
      %v3161 = vmul.f32 %v2775, 1.442695
      %v3162 = vpow.pop %v3161
      %v3163 = vmul.f32 %v2776, 1.442695
      %v3164 = vpow.pop %v3163
      %v3165 = vmul.f32 %v2777, 1.442695
      %v3166 = vpow.pop %v3165
      %v3167 = vmul.f32 %v2778, 1.442695
      %v3168 = vpow.pop %v3167
      %v3169 = vmul.f32 %v2779, 1.442695
      %v3170 = vpow.pop %v3169
      %v3171 = vmul.f32 %v2780, 1.442695
      %v3172 = vpow.pop %v3171
      %v3173 = vmul.f32 %v2781, 1.442695
      %v3174 = vpow.pop %v3173
      %v3175 = vmul.f32 %v2782, 1.442695
      %v3176 = vpow.pop %v3175
      %v3177 = vmul.f32 %v2783, 1.442695
      %v3178 = vpow.pop %v3177
      %v3179 = vmul.f32 %v2784, 1.442695
      %v3180 = vpow.pop %v3179
      %v3181 = vmul.f32 %v2785, 1.442695
      %v3182 = vpow.pop %v3181
      %v3183 = vmul.f32 %v2786, 1.442695
      %v3184 = vpow.pop %v3183
      %v3185 = vmul.f32 %v2787, 1.442695
      %v3186 = vpow.pop %v3185
      %v3187 = vmul.f32 %v2788, 1.442695
      %v3188 = vpow.pop %v3187
      %v3189 = vmul.f32 %v2789, 1.442695
      %v3190 = vpow.pop %v3189
      %v3191 = vmul.f32 %v2790, 1.442695
      %v3192 = vpow.pop %v3191
      %v3193 = vmul.f32 %v2791, 1.442695
      %v3194 = vpow.pop %v3193
      %v3195 = vmul.f32 %v2792, 1.442695
      %v3196 = vpow.pop %v3195
      %v3197 = vmul.f32 %v2793, 1.442695
      %v3198 = vpow.pop %v3197
      %v3199 = vmul.f32 %v2794, 1.442695
      %v3200 = vpow.pop %v3199
      %v3201 = vmul.f32 %v2795, 1.442695
      %v3202 = vpow.pop %v3201
      %v3203 = vmul.f32 %v2796, 1.442695
      %v3204 = vpow.pop %v3203
      %v3205 = vmul.f32 %v2797, 1.442695
      %v3206 = vpow.pop %v3205
      %v3207 = vmul.f32 %v2798, 1.442695
      %v3208 = vpow.pop %v3207
      %v3209 = vmul.f32 %v2799, 1.442695
      %v3210 = vpow.pop %v3209
      %v3211 = vmul.f32 %v2800, 1.442695
      %v3212 = vpow.pop %v3211
      %v3213 = vmul.f32 %v2801, 1.442695
      %v3214 = vpow.pop %v3213
      %v3215 = vmul.f32 %v2802, 1.442695
      %v3216 = vpow.pop %v3215
      %v3217 = vmul.f32 %v2803, 1.442695
      %v3218 = vpow.pop %v3217
      %v3219 = vmul.f32 %v2804, 1.442695
      %v3220 = vpow.pop %v3219
      %v3221 = vmul.f32 %v2805, 1.442695
      %v3222 = vpow.pop %v3221
      %v3223 = vmul.f32 %v2806, 1.442695
      %v3224 = vpow.pop %v3223
      %v3225 = vmul.f32 %v2807, 1.442695
      %v3226 = vpow.pop %v3225
      %v3227 = vmul.f32 %v2808, 1.442695
      %v3228 = vpow.pop %v3227
      %v3229 = vmul.f32 %v2809, 1.442695
      %v3230 = vpow.pop %v3229
      %v3231 = vmul.f32 %v2810, 1.442695
      %v3232 = vpow.pop %v3231
      %v3233 = vmul.f32 %v2811, 1.442695
      %v3234 = vpow.pop %v3233
      %v3235 = vmul.f32 %v2812, 1.442695
      %v3236 = vpow.pop %v3235
      %v3237 = vmul.f32 %v2813, 1.442695
      %v3238 = vpow.pop %v3237
      %v3239 = vmul.f32 %v2814, 1.442695
      %v3240 = vpow.pop %v3239
      %v3241 = vmul.f32 %v2815, 1.442695
      %v3242 = vpow.pop %v3241
      %v3243 = vmul.f32 %v2816, 1.442695
      %v3244 = vpow.pop %v3243
      %v3245 = vmul.f32 %v2817, 1.442695
      %v3246 = vpow.pop %v3245
      %v3247 = vmul.f32 %v2818, 1.442695
      %v3248 = vpow.pop %v3247
      %v3249 = vmul.f32 %v2819, 1.442695
      %v3250 = vpow.pop %v3249
      %v3251 = vmul.f32 %v2820, 1.442695
      %v3252 = vpow.pop %v3251
      %v3253 = vmul.f32 %v2821, 1.442695
      %v3254 = vpow.pop %v3253
      %v3255 = vmul.f32 %v2822, 1.442695
      %v3256 = vpow.pop %v3255
      %v3257 = vmul.f32 %v2823, 1.442695
      %v3258 = vpow.pop %v3257
      %v3259 = vmul.f32 %v2824, 1.442695
      %v3260 = vpow.pop %v3259
      %v3261 = vmul.f32 %v2825, 1.442695
      %v3262 = vpow.pop %v3261
      %v3263 = vmul.f32 %v2826, 1.442695
      %v3264 = vpow.pop %v3263
      %v3265 = vmul.f32 %v2827, 1.442695
      %v3266 = vpow.pop %v3265
      %v3267 = vmul.f32 %v2828, 1.442695
      %v3268 = vpow.pop %v3267
      %v3269 = vmul.f32 %v2829, 1.442695
      %v3270 = vpow.pop %v3269
      %v3271 = vmul.f32 %v2830, 1.442695
      %v3272 = vpow.pop %v3271
      %v3273 = vmul.f32 %v2831, 1.442695
      %v3274 = vpow.pop %v3273
      %v3275 = vmul.f32 %v2832, 1.442695
      %v3276 = vpow.pop %v3275
      %v3277 = vmul.f32 %v2833, 1.442695
      %v3278 = vpow.pop %v3277
      %v3279 = vmul.f32 %v2834, 1.442695
      %v3280 = vpow.pop %v3279
      %v3281 = vmul.f32 %v2835, 1.442695
      %v3282 = vpow.pop %v3281
      %v3283 = vmul.f32 %v2836, 1.442695
      %v3284 = vpow.pop %v3283
      %v3285 = vmul.f32 %v2837, 1.442695
      %v3286 = vpow.pop %v3285
      %v3287 = vmul.f32 %v2838, 1.442695
      %v3288 = vpow.pop %v3287
      %v3289 = vmul.f32 %v2839, 1.442695
      %v3290 = vpow.pop %v3289
      %v3291 = vmul.f32 %v2840, 1.442695
      %v3292 = vpow.pop %v3291
      %v3293 = vmul.f32 %v2841, 1.442695
      %v3294 = vpow.pop %v3293
      %v3295 = vmul.f32 %v2842, 1.442695
      %v3296 = vpow.pop %v3295
      %v3297 = vmul.f32 %v2843, 1.442695
      %v3298 = vpow.pop %v3297
      %v3299 = vmul.f32 %v2844, 1.442695
      %v3300 = vpow.pop %v3299
      %v3301 = vmul.f32 %v2845, 1.442695
      %v3302 = vpow.pop %v3301
      %v3303 = vmul.f32 %v2846, 1.442695
      %v3304 = vpow.pop %v3303
      %v3305 = vmul.f32 %v2847, 1.442695
      %v3306 = vpow.pop %v3305
      %v3307 = vmul.f32 %v2848, 1.442695
      %v3308 = vpow.pop %v3307
      %v3309 = vmul.f32 %v2849, 1.442695
      %v3310 = vpow.pop %v3309
      %v3311 = vmul.f32 %v2850, 1.442695
      %v3312 = vpow.pop %v3311
      %v3313 = vmul.f32 %v2851, 1.442695
      %v3314 = vpow.pop %v3313
      %v3315 = vmul.f32 %v2852, 1.442695
      %v3316 = vpow.pop %v3315
      %v3317 = vmul.f32 %v2853, 1.442695
      %v3318 = vpow.pop %v3317
      %v3319 = vmul.f32 %v2854, 1.442695
      %v3320 = vpow.pop %v3319
      %v3321 = vmul.f32 %v2855, 1.442695
      %v3322 = vpow.pop %v3321
      %v3323 = vmul.f32 %v2856, 1.442695
      %v3324 = vpow.pop %v3323
      %v3325 = vmul.f32 %v2857, 1.442695
      %v3326 = vpow.pop %v3325
      %v3327 = vmul.f32 %v2858, 1.442695
      %v3328 = vpow.pop %v3327
      %v3329 = vmul.f32 %v2859, 1.442695
      %v3330 = vpow.pop %v3329
      %v3331 = vmul.f32 %v2860, 1.442695
      %v3332 = vpow.pop %v3331
      %v3333 = vmul.f32 %v2861, 1.442695
      %v3334 = vpow.pop %v3333
      %v3335 = vmul.f32 %v2862, 1.442695
      %v3336 = vpow.pop %v3335
      %v3337 = vmul.f32 %v2863, 1.442695
      %v3338 = vpow.pop %v3337
      %v3339 = vmul.f32 %v2864, 1.442695
      %v3340 = vpow.pop %v3339
      %v3341 = vmul.f32 %v2865, 1.442695
      %v3342 = vpow.pop %v3341
      %v3343 = vmul.f32 %v2866, 1.442695
      %v3344 = vpow.pop %v3343
      %v3345 = vmul.f32 %v2867, 1.442695
      %v3346 = vpow.pop %v3345
      %v3347 = vmul.f32 %v2868, 1.442695
      %v3348 = vpow.pop %v3347
      %v3349 = vmul.f32 %v2869, 1.442695
      %v3350 = vpow.pop %v3349
      %v3351 = vmul.f32 %v2870, 1.442695
      %v3352 = vpow.pop %v3351
      %v3353 = vmul.f32 %v2871, 1.442695
      %v3354 = vpow.pop %v3353
      %v3355 = vmul.f32 %v2872, 1.442695
      %v3356 = vpow.pop %v3355
      %v3357 = vmul.f32 %v2873, 1.442695
      %v3358 = vpow.pop %v3357
      %v3359 = vmul.f32 %v2874, 1.442695
      %v3360 = vpow.pop %v3359
      %v3361 = vmul.f32 %v2875, 1.442695
      %v3362 = vpow.pop %v3361
      %v3363 = vmul.f32 %v2876, 1.442695
      %v3364 = vpow.pop %v3363
      %v3365 = vmul.f32 %v2877, 1.442695
      %v3366 = vpow.pop %v3365
      %v3367 = vmul.f32 %v2878, 1.442695
      %v3368 = vpow.pop %v3367
      %v3369 = vmul.f32 %v2879, 1.442695
      %v3370 = vpow.pop %v3369
      %v3371 = vmul.f32 %v2880, 1.442695
      %v3372 = vpow.pop %v3371
      %v3373 = vmul.f32 %v2881, 1.442695
      %v3374 = vpow.pop %v3373
      %v3375 = vmul.f32 %v2882, 1.442695
      %v3376 = vpow.pop %v3375
      %v3377 = vmul.f32 %v2883, 1.442695
      %v3378 = vpow.pop %v3377
      %v3379 = vmul.f32 %v2884, 1.442695
      %v3380 = vpow.pop %v3379
      %v3381 = vmul.f32 %v2885, 1.442695
      %v3382 = vpow.pop %v3381
      %v3383 = vmul.f32 %v2886, 1.442695
      %v3384 = vpow.pop %v3383
      %v3385 = vmul.f32 %v2887, 1.442695
      %v3386 = vpow.pop %v3385
      %v3387 = vmul.f32 %v2888, 1.442695
      %v3388 = vpow.pop %v3387
      %v3389 = vmul.f32 %v2889, 1.442695
      %v3390 = vpow.pop %v3389
      %v3391 = vmul.f32 %v2890, 1.442695
      %v3392 = vpow.pop %v3391
      %v3393 = vmul.f32 %v2891, 1.442695
      %v3394 = vpow.pop %v3393
      %v3395 = vmul.f32 %v2892, 1.442695
      %v3396 = vpow.pop %v3395
      %v3397 = vmul.f32 %v2893, 1.442695
      %v3398 = vpow.pop %v3397
      %v3399 = vmul.f32 %v2894, 1.442695
      %v3400 = vpow.pop %v3399
      %v3401 = vmul.f32 %v2895, 1.442695
      %v3402 = vpow.pop %v3401
      %v3403 = vmul.f32 %v2896, 1.442695
      %v3404 = vpow.pop %v3403
      %v3405 = vmul.f32 %v2897, 1.442695
      %v3406 = vpow.pop %v3405
      %v3407 = vmul.f32 %v2898, 1.442695
      %v3408 = vpow.pop %v3407
      %v3409 = vmul.f32 %v2899, 1.442695
      %v3410 = vpow.pop %v3409
      %v3411 = vmul.f32 %v2900, 1.442695
      %v3412 = vpow.pop %v3411
      %v3413 = vpack.c.bf16 %v2910, %v2902
      %v3414 = vpack.c.bf16 %v2912, %v2904
      %v3415 = vpack.c.bf16 %v2914, %v2906
      %v3416 = vpack.c.bf16 %v2916, %v2908
      %v3417 = vpack.c.bf16 %v2926, %v2918
      %v3418 = vpack.c.bf16 %v2928, %v2920
      %v3419 = vpack.c.bf16 %v2930, %v2922
      %v3420 = vpack.c.bf16 %v2932, %v2924
      %v3421 = vpack.c.bf16 %v2942, %v2934
      %v3422 = vpack.c.bf16 %v2944, %v2936
      %v3423 = vpack.c.bf16 %v2946, %v2938
      %v3424 = vpack.c.bf16 %v2948, %v2940
      %v3425 = vpack.c.bf16 %v2958, %v2950
      %v3426 = vpack.c.bf16 %v2960, %v2952
      %v3427 = vpack.c.bf16 %v2962, %v2954
      %v3428 = vpack.c.bf16 %v2964, %v2956
      %v3429 = vpack.c.bf16 %v2974, %v2966
      %v3430 = vpack.c.bf16 %v2976, %v2968
      %v3431 = vpack.c.bf16 %v2978, %v2970
      %v3432 = vpack.c.bf16 %v2980, %v2972
      %v3433 = vpack.c.bf16 %v2990, %v2982
      %v3434 = vpack.c.bf16 %v2992, %v2984
      %v3435 = vpack.c.bf16 %v2994, %v2986
      %v3436 = vpack.c.bf16 %v2996, %v2988
      %v3437 = vpack.c.bf16 %v3006, %v2998
      %v3438 = vpack.c.bf16 %v3008, %v3000
      %v3439 = vpack.c.bf16 %v3010, %v3002
      %v3440 = vpack.c.bf16 %v3012, %v3004
      %v3441 = vpack.c.bf16 %v3022, %v3014
      %v3442 = vpack.c.bf16 %v3024, %v3016
      %v3443 = vpack.c.bf16 %v3026, %v3018
      %v3444 = vpack.c.bf16 %v3028, %v3020
      %v3445 = vpack.c.bf16 %v3038, %v3030
      %v3446 = vpack.c.bf16 %v3040, %v3032
      %v3447 = vpack.c.bf16 %v3042, %v3034
      %v3448 = vpack.c.bf16 %v3044, %v3036
      %v3449 = vpack.c.bf16 %v3054, %v3046
      %v3450 = vpack.c.bf16 %v3056, %v3048
      %v3451 = vpack.c.bf16 %v3058, %v3050
      %v3452 = vpack.c.bf16 %v3060, %v3052
      %v3453 = vpack.c.bf16 %v3070, %v3062
      %v3454 = vpack.c.bf16 %v3072, %v3064
      %v3455 = vpack.c.bf16 %v3074, %v3066
      %v3456 = vpack.c.bf16 %v3076, %v3068
      %v3457 = vpack.c.bf16 %v3086, %v3078
      %v3458 = vpack.c.bf16 %v3088, %v3080
      %v3459 = vpack.c.bf16 %v3090, %v3082
      %v3460 = vpack.c.bf16 %v3092, %v3084
      %v3461 = vpack.c.bf16 %v3102, %v3094
      %v3462 = vpack.c.bf16 %v3104, %v3096
      %v3463 = vpack.c.bf16 %v3106, %v3098
      %v3464 = vpack.c.bf16 %v3108, %v3100
      %v3465 = vpack.c.bf16 %v3118, %v3110
      %v3466 = vpack.c.bf16 %v3120, %v3112
      %v3467 = vpack.c.bf16 %v3122, %v3114
      %v3468 = vpack.c.bf16 %v3124, %v3116
      %v3469 = vpack.c.bf16 %v3134, %v3126
      %v3470 = vpack.c.bf16 %v3136, %v3128
      %v3471 = vpack.c.bf16 %v3138, %v3130
      %v3472 = vpack.c.bf16 %v3140, %v3132
      %v3473 = vpack.c.bf16 %v3150, %v3142
      %v3474 = vpack.c.bf16 %v3152, %v3144
      %v3475 = vpack.c.bf16 %v3154, %v3146
      %v3476 = vpack.c.bf16 %v3156, %v3148
      %v3477 = vpack.c.bf16 %v3166, %v3158
      %v3478 = vpack.c.bf16 %v3168, %v3160
      %v3479 = vpack.c.bf16 %v3170, %v3162
      %v3480 = vpack.c.bf16 %v3172, %v3164
      %v3481 = vpack.c.bf16 %v3182, %v3174
      %v3482 = vpack.c.bf16 %v3184, %v3176
      %v3483 = vpack.c.bf16 %v3186, %v3178
      %v3484 = vpack.c.bf16 %v3188, %v3180
      %v3485 = vpack.c.bf16 %v3198, %v3190
      %v3486 = vpack.c.bf16 %v3200, %v3192
      %v3487 = vpack.c.bf16 %v3202, %v3194
      %v3488 = vpack.c.bf16 %v3204, %v3196
      %v3489 = vpack.c.bf16 %v3214, %v3206
      %v3490 = vpack.c.bf16 %v3216, %v3208
      %v3491 = vpack.c.bf16 %v3218, %v3210
      %v3492 = vpack.c.bf16 %v3220, %v3212
      %v3493 = vpack.c.bf16 %v3230, %v3222
      %v3494 = vpack.c.bf16 %v3232, %v3224
      %v3495 = vpack.c.bf16 %v3234, %v3226
      %v3496 = vpack.c.bf16 %v3236, %v3228
      %v3497 = vpack.c.bf16 %v3246, %v3238
      %v3498 = vpack.c.bf16 %v3248, %v3240
      %v3499 = vpack.c.bf16 %v3250, %v3242
      %v3500 = vpack.c.bf16 %v3252, %v3244
      %v3501 = vpack.c.bf16 %v3262, %v3254
      %v3502 = vpack.c.bf16 %v3264, %v3256
      %v3503 = vpack.c.bf16 %v3266, %v3258
      %v3504 = vpack.c.bf16 %v3268, %v3260
      %v3505 = vpack.c.bf16 %v3278, %v3270
      %v3506 = vpack.c.bf16 %v3280, %v3272
      %v3507 = vpack.c.bf16 %v3282, %v3274
      %v3508 = vpack.c.bf16 %v3284, %v3276
      %v3509 = vpack.c.bf16 %v3294, %v3286
      %v3510 = vpack.c.bf16 %v3296, %v3288
      %v3511 = vpack.c.bf16 %v3298, %v3290
      %v3512 = vpack.c.bf16 %v3300, %v3292
      %v3513 = vpack.c.bf16 %v3310, %v3302
      %v3514 = vpack.c.bf16 %v3312, %v3304
      %v3515 = vpack.c.bf16 %v3314, %v3306
      %v3516 = vpack.c.bf16 %v3316, %v3308
      %v3517 = vpack.c.bf16 %v3326, %v3318
      %v3518 = vpack.c.bf16 %v3328, %v3320
      %v3519 = vpack.c.bf16 %v3330, %v3322
      %v3520 = vpack.c.bf16 %v3332, %v3324
      %v3521 = vpack.c.bf16 %v3342, %v3334
      %v3522 = vpack.c.bf16 %v3344, %v3336
      %v3523 = vpack.c.bf16 %v3346, %v3338
      %v3524 = vpack.c.bf16 %v3348, %v3340
      %v3525 = vpack.c.bf16 %v3358, %v3350
      %v3526 = vpack.c.bf16 %v3360, %v3352
      %v3527 = vpack.c.bf16 %v3362, %v3354
      %v3528 = vpack.c.bf16 %v3364, %v3356
      %v3529 = vpack.c.bf16 %v3374, %v3366
      %v3530 = vpack.c.bf16 %v3376, %v3368
      %v3531 = vpack.c.bf16 %v3378, %v3370
      %v3532 = vpack.c.bf16 %v3380, %v3372
      %v3533 = vpack.c.bf16 %v3390, %v3382
      %v3534 = vpack.c.bf16 %v3392, %v3384
      %v3535 = vpack.c.bf16 %v3394, %v3386
      %v3536 = vpack.c.bf16 %v3396, %v3388
      %v3537 = vpack.c.bf16 %v3406, %v3398
      %v3538 = vpack.c.bf16 %v3408, %v3400
      %v3539 = vpack.c.bf16 %v3410, %v3402
      %v3540 = vpack.c.bf16 %v3412, %v3404
      %3541 = vmatprep.subr.bf16.mxu0 %v3414
      %3542 = vmatpush1.bf16.xpose.msra.mxu0 %v3413
      %3543 = vmatprep.subr.bf16.mxu0 %v3418
      %3544 = vmatpush1.bf16.xpose.msra.mxu0 %v3417
      %3545 = vmatprep.subr.bf16.mxu0 %v3422
      %3546 = vmatpush1.bf16.xpose.msra.mxu0 %v3421
      %3547 = vmatprep.subr.bf16.mxu0 %v3426
      %3548 = vmatpush1.bf16.xpose.msra.mxu0 %v3425
      %3549 = vmatprep.subr.bf16.mxu0 %v3430
      %3550 = vmatpush1.bf16.xpose.msra.mxu0 %v3429
      %3551 = vmatprep.subr.bf16.mxu0 %v3434
      %3552 = vmatpush1.bf16.xpose.msra.mxu0 %v3433
      %3553 = vmatprep.subr.bf16.mxu0 %v3438
      %3554 = vmatpush1.bf16.xpose.msra.mxu0 %v3437
      %3555 = vmatprep.subr.bf16.mxu0 %v3442
      %3556 = vmatpush1.bf16.xpose.msra.mxu0 %v3441
      %3557 = vmatprep.subr.bf16.mxu0 %v3446
      %3558 = vmatpush1.bf16.xpose.msra.mxu0 %v3445
      %3559 = vmatprep.subr.bf16.mxu0 %v3450
      %3560 = vmatpush1.bf16.xpose.msra.mxu0 %v3449
      %3561 = vmatprep.subr.bf16.mxu0 %v3454
      %3562 = vmatpush1.bf16.xpose.msra.mxu0 %v3453
      %3563 = vmatprep.subr.bf16.mxu0 %v3458
      %3564 = vmatpush1.bf16.xpose.msra.mxu0 %v3457
      %3565 = vmatprep.subr.bf16.mxu0 %v3462
      %3566 = vmatpush1.bf16.xpose.msra.mxu0 %v3461
      %3567 = vmatprep.subr.bf16.mxu0 %v3466
      %3568 = vmatpush1.bf16.xpose.msra.mxu0 %v3465
      %3569 = vmatprep.subr.bf16.mxu0 %v3470
      %3570 = vmatpush1.bf16.xpose.msra.mxu0 %v3469
      %3571 = vmatprep.subr.bf16.mxu0 %v3474
      %3572 = vmatpush1.bf16.xpose.msra.mxu0 %v3473
      %3573 = vmatprep.mubr.bf16.mxu0 %v1444
      %3574 = vmatmul.mubr.bf16.gmra.mrb[0].mxu0 %v1443
      %v3575 = vpop.f32.mrb[0].mxu0
      %v3576 = vadd.f32 0.0, %v3575
      %v3577 = vpop.f32.mrb[0].mxu0
      %v3578 = vadd.f32 0.0, %v3577
      %v3579 = vpop.f32.mrb[0].mxu0
      %v3580 = vadd.f32 0.0, %v3579
      %v3581 = vpop.f32.mrb[0].mxu0
      %v3582 = vadd.f32 0.0, %v3581
      %3583 = vmatprep.mubr.bf16.mxu0 %v1448
      %3584 = vmatmul.mubr.bf16.gmra.mrb[0].mxu0 %v1447
      %v3585 = vpop.f32.mrb[0].mxu0
      %v3586 = vadd.f32 0.0, %v3585
      %v3587 = vpop.f32.mrb[0].mxu0
      %v3588 = vadd.f32 0.0, %v3587
      %v3589 = vpop.f32.mrb[0].mxu0
      %v3590 = vadd.f32 0.0, %v3589
      %v3591 = vpop.f32.mrb[0].mxu0
      %v3592 = vadd.f32 0.0, %v3591
      %3593 = vmatprep.mubr.bf16.mxu0 %v1452
      %3594 = vmatmul.mubr.bf16.gmra.mrb[0].mxu0 %v1451
      %v3595 = vpop.f32.mrb[0].mxu0
      %v3596 = vadd.f32 0.0, %v3595
      %v3597 = vpop.f32.mrb[0].mxu0
      %v3598 = vadd.f32 0.0, %v3597
      %v3599 = vpop.f32.mrb[0].mxu0
      %v3600 = vadd.f32 0.0, %v3599
      %v3601 = vpop.f32.mrb[0].mxu0
      %v3602 = vadd.f32 0.0, %v3601
      %3603 = vmatprep.mubr.bf16.mxu0 %v1456
      %3604 = vmatmul.mubr.bf16.gmra.mrb[0].mxu0 %v1455
      %v3605 = vpop.f32.mrb[0].mxu0
      %v3606 = vadd.f32 0.0, %v3605
      %v3607 = vpop.f32.mrb[0].mxu0
      %v3608 = vadd.f32 0.0, %v3607
      %v3609 = vpop.f32.mrb[0].mxu0
      %v3610 = vadd.f32 0.0, %v3609
      %v3611 = vpop.f32.mrb[0].mxu0
      %v3612 = vadd.f32 0.0, %v3611
      %3613 = vdwg.mxu0
      %3614 = vmatprep.subr.bf16.mxu0 %v3416
      %3615 = vmatpush1.bf16.xpose.msra.mxu0 %v3415
      %3616 = vmatprep.subr.bf16.mxu0 %v3420
      %3617 = vmatpush1.bf16.xpose.msra.mxu0 %v3419
      %3618 = vmatprep.subr.bf16.mxu0 %v3424
      %3619 = vmatpush1.bf16.xpose.msra.mxu0 %v3423
      %3620 = vmatprep.subr.bf16.mxu0 %v3428
      %3621 = vmatpush1.bf16.xpose.msra.mxu0 %v3427
      %3622 = vmatprep.subr.bf16.mxu0 %v3432
      %3623 = vmatpush1.bf16.xpose.msra.mxu0 %v3431
      %3624 = vmatprep.subr.bf16.mxu0 %v3436
      %3625 = vmatpush1.bf16.xpose.msra.mxu0 %v3435
      %3626 = vmatprep.subr.bf16.mxu0 %v3440
      %3627 = vmatpush1.bf16.xpose.msra.mxu0 %v3439
      %3628 = vmatprep.subr.bf16.mxu0 %v3444
      %3629 = vmatpush1.bf16.xpose.msra.mxu0 %v3443
      %3630 = vmatprep.subr.bf16.mxu0 %v3448
      %3631 = vmatpush1.bf16.xpose.msra.mxu0 %v3447
      %3632 = vmatprep.subr.bf16.mxu0 %v3452
      %3633 = vmatpush1.bf16.xpose.msra.mxu0 %v3451
      %3634 = vmatprep.subr.bf16.mxu0 %v3456
      %3635 = vmatpush1.bf16.xpose.msra.mxu0 %v3455
      %3636 = vmatprep.subr.bf16.mxu0 %v3460
      %3637 = vmatpush1.bf16.xpose.msra.mxu0 %v3459
      %3638 = vmatprep.subr.bf16.mxu0 %v3464
      %3639 = vmatpush1.bf16.xpose.msra.mxu0 %v3463
      %3640 = vmatprep.subr.bf16.mxu0 %v3468
      %3641 = vmatpush1.bf16.xpose.msra.mxu0 %v3467
      %3642 = vmatprep.subr.bf16.mxu0 %v3472
      %3643 = vmatpush1.bf16.xpose.msra.mxu0 %v3471
      %3644 = vmatprep.subr.bf16.mxu0 %v3476
      %3645 = vmatpush1.bf16.xpose.msra.mxu0 %v3475
      %3646 = vmatprep.mubr.bf16.mxu0 %v1446
      %3647 = vmatmul.mubr.bf16.gmra.mrb[0].mxu0 %v1445
      %v3648 = vpop.f32.mrb[0].mxu0
      %v3649 = vadd.f32 %v3576, %v3648
      %v3650 = vpop.f32.mrb[0].mxu0
      %v3651 = vadd.f32 %v3578, %v3650
      %v3652 = vpop.f32.mrb[0].mxu0
      %v3653 = vadd.f32 %v3580, %v3652
      %v3654 = vpop.f32.mrb[0].mxu0
      %v3655 = vadd.f32 %v3582, %v3654
      %3656 = vmatprep.mubr.bf16.mxu0 %v1450
      %3657 = vmatmul.mubr.bf16.gmra.mrb[0].mxu0 %v1449
      %v3658 = vpop.f32.mrb[0].mxu0
      %v3659 = vadd.f32 %v3586, %v3658
      %v3660 = vpop.f32.mrb[0].mxu0
      %v3661 = vadd.f32 %v3588, %v3660
      %v3662 = vpop.f32.mrb[0].mxu0
      %v3663 = vadd.f32 %v3590, %v3662
      %v3664 = vpop.f32.mrb[0].mxu0
      %v3665 = vadd.f32 %v3592, %v3664
      %3666 = vmatprep.mubr.bf16.mxu0 %v1454
      %3667 = vmatmul.mubr.bf16.gmra.mrb[0].mxu0 %v1453
      %v3668 = vpop.f32.mrb[0].mxu0
      %v3669 = vadd.f32 %v3596, %v3668
      %v3670 = vpop.f32.mrb[0].mxu0
      %v3671 = vadd.f32 %v3598, %v3670
      %v3672 = vpop.f32.mrb[0].mxu0
      %v3673 = vadd.f32 %v3600, %v3672
      %v3674 = vpop.f32.mrb[0].mxu0
      %v3675 = vadd.f32 %v3602, %v3674
      %3676 = vmatprep.mubr.bf16.mxu0 %v1458
      %3677 = vmatmul.mubr.bf16.gmra.mrb[0].mxu0 %v1457
      %v3678 = vpop.f32.mrb[0].mxu0
      %v3679 = vadd.f32 %v3606, %v3678
      %v3680 = vpop.f32.mrb[0].mxu0
      %v3681 = vadd.f32 %v3608, %v3680
      %v3682 = vpop.f32.mrb[0].mxu0
      %v3683 = vadd.f32 %v3610, %v3682
      %v3684 = vpop.f32.mrb[0].mxu0
      %v3685 = vadd.f32 %v3612, %v3684
      %3686 = vdwg.mxu0
      %3687 = vmatprep.subr.bf16.mxu0 %v3478
      %3688 = vmatpush1.bf16.xpose.msra.mxu0 %v3477
      %3689 = vmatprep.subr.bf16.mxu0 %v3482
      %3690 = vmatpush1.bf16.xpose.msra.mxu0 %v3481
      %3691 = vmatprep.subr.bf16.mxu0 %v3486
      %3692 = vmatpush1.bf16.xpose.msra.mxu0 %v3485
      %3693 = vmatprep.subr.bf16.mxu0 %v3490
      %3694 = vmatpush1.bf16.xpose.msra.mxu0 %v3489
      %3695 = vmatprep.subr.bf16.mxu0 %v3494
      %3696 = vmatpush1.bf16.xpose.msra.mxu0 %v3493
      %3697 = vmatprep.subr.bf16.mxu0 %v3498
      %3698 = vmatpush1.bf16.xpose.msra.mxu0 %v3497
      %3699 = vmatprep.subr.bf16.mxu0 %v3502
      %3700 = vmatpush1.bf16.xpose.msra.mxu0 %v3501
      %3701 = vmatprep.subr.bf16.mxu0 %v3506
      %3702 = vmatpush1.bf16.xpose.msra.mxu0 %v3505
      %3703 = vmatprep.subr.bf16.mxu0 %v3510
      %3704 = vmatpush1.bf16.xpose.msra.mxu0 %v3509
      %3705 = vmatprep.subr.bf16.mxu0 %v3514
      %3706 = vmatpush1.bf16.xpose.msra.mxu0 %v3513
      %3707 = vmatprep.subr.bf16.mxu0 %v3518
      %3708 = vmatpush1.bf16.xpose.msra.mxu0 %v3517
      %3709 = vmatprep.subr.bf16.mxu0 %v3522
      %3710 = vmatpush1.bf16.xpose.msra.mxu0 %v3521
      %3711 = vmatprep.subr.bf16.mxu0 %v3526
      %3712 = vmatpush1.bf16.xpose.msra.mxu0 %v3525
      %3713 = vmatprep.subr.bf16.mxu0 %v3530
      %3714 = vmatpush1.bf16.xpose.msra.mxu0 %v3529
      %3715 = vmatprep.subr.bf16.mxu0 %v3534
      %3716 = vmatpush1.bf16.xpose.msra.mxu0 %v3533
      %3717 = vmatprep.subr.bf16.mxu0 %v3538
      %3718 = vmatpush1.bf16.xpose.msra.mxu0 %v3537
      %3719 = vmatprep.mubr.bf16.mxu0 %v1444
      %3720 = vmatmul.mubr.bf16.gmra.mrb[0].mxu0 %v1443
      %v3721 = vpop.f32.mrb[0].mxu0
      %v3722 = vadd.f32 0.0, %v3721
      %v3723 = vpop.f32.mrb[0].mxu0
      %v3724 = vadd.f32 0.0, %v3723
      %v3725 = vpop.f32.mrb[0].mxu0
      %v3726 = vadd.f32 0.0, %v3725
      %v3727 = vpop.f32.mrb[0].mxu0
      %v3728 = vadd.f32 0.0, %v3727
      %3729 = vmatprep.mubr.bf16.mxu0 %v1448
      %3730 = vmatmul.mubr.bf16.gmra.mrb[0].mxu0 %v1447
      %v3731 = vpop.f32.mrb[0].mxu0
      %v3732 = vadd.f32 0.0, %v3731
      %v3733 = vpop.f32.mrb[0].mxu0
      %v3734 = vadd.f32 0.0, %v3733
      %v3735 = vpop.f32.mrb[0].mxu0
      %v3736 = vadd.f32 0.0, %v3735
      %v3737 = vpop.f32.mrb[0].mxu0
      %v3738 = vadd.f32 0.0, %v3737
      %3739 = vmatprep.mubr.bf16.mxu0 %v1452
      %3740 = vmatmul.mubr.bf16.gmra.mrb[0].mxu0 %v1451
      %v3741 = vpop.f32.mrb[0].mxu0
      %v3742 = vadd.f32 0.0, %v3741
      %v3743 = vpop.f32.mrb[0].mxu0
      %v3744 = vadd.f32 0.0, %v3743
      %v3745 = vpop.f32.mrb[0].mxu0
      %v3746 = vadd.f32 0.0, %v3745
      %v3747 = vpop.f32.mrb[0].mxu0
      %v3748 = vadd.f32 0.0, %v3747
      %3749 = vmatprep.mubr.bf16.mxu0 %v1456
      %3750 = vmatmul.mubr.bf16.gmra.mrb[0].mxu0 %v1455
      %v3751 = vpop.f32.mrb[0].mxu0
      %v3752 = vadd.f32 0.0, %v3751
      %v3753 = vpop.f32.mrb[0].mxu0
      %v3754 = vadd.f32 0.0, %v3753
      %v3755 = vpop.f32.mrb[0].mxu0
      %v3756 = vadd.f32 0.0, %v3755
      %v3757 = vpop.f32.mrb[0].mxu0
      %v3758 = vadd.f32 0.0, %v3757
      %3759 = vdwg.mxu0
      %3760 = vmatprep.subr.bf16.mxu0 %v3480
      %3761 = vmatpush1.bf16.xpose.msra.mxu0 %v3479
      %3762 = vmatprep.subr.bf16.mxu0 %v3484
      %3763 = vmatpush1.bf16.xpose.msra.mxu0 %v3483
      %3764 = vmatprep.subr.bf16.mxu0 %v3488
      %3765 = vmatpush1.bf16.xpose.msra.mxu0 %v3487
      %3766 = vmatprep.subr.bf16.mxu0 %v3492
      %3767 = vmatpush1.bf16.xpose.msra.mxu0 %v3491
      %3768 = vmatprep.subr.bf16.mxu0 %v3496
      %3769 = vmatpush1.bf16.xpose.msra.mxu0 %v3495
      %3770 = vmatprep.subr.bf16.mxu0 %v3500
      %3771 = vmatpush1.bf16.xpose.msra.mxu0 %v3499
      %3772 = vmatprep.subr.bf16.mxu0 %v3504
      %3773 = vmatpush1.bf16.xpose.msra.mxu0 %v3503
      %3774 = vmatprep.subr.bf16.mxu0 %v3508
      %3775 = vmatpush1.bf16.xpose.msra.mxu0 %v3507
      %3776 = vmatprep.subr.bf16.mxu0 %v3512
      %3777 = vmatpush1.bf16.xpose.msra.mxu0 %v3511
      %3778 = vmatprep.subr.bf16.mxu0 %v3516
      %3779 = vmatpush1.bf16.xpose.msra.mxu0 %v3515
      %3780 = vmatprep.subr.bf16.mxu0 %v3520
      %3781 = vmatpush1.bf16.xpose.msra.mxu0 %v3519
      %3782 = vmatprep.subr.bf16.mxu0 %v3524
      %3783 = vmatpush1.bf16.xpose.msra.mxu0 %v3523
      %3784 = vmatprep.subr.bf16.mxu0 %v3528
      %3785 = vmatpush1.bf16.xpose.msra.mxu0 %v3527
      %3786 = vmatprep.subr.bf16.mxu0 %v3532
      %3787 = vmatpush1.bf16.xpose.msra.mxu0 %v3531
      %3788 = vmatprep.subr.bf16.mxu0 %v3536
      %3789 = vmatpush1.bf16.xpose.msra.mxu0 %v3535
      %3790 = vmatprep.subr.bf16.mxu0 %v3540
      %3791 = vmatpush1.bf16.xpose.msra.mxu0 %v3539
      %3792 = vmatprep.mubr.bf16.mxu0 %v1446
      %3793 = vmatmul.mubr.bf16.gmra.mrb[0].mxu0 %v1445
      %v3794 = vpop.f32.mrb[0].mxu0
      %v3795 = vadd.f32 %v3722, %v3794
      %v3796 = vpop.f32.mrb[0].mxu0
      %v3797 = vadd.f32 %v3724, %v3796
      %v3798 = vpop.f32.mrb[0].mxu0
      %v3799 = vadd.f32 %v3726, %v3798
      %v3800 = vpop.f32.mrb[0].mxu0
      %v3801 = vadd.f32 %v3728, %v3800
      %3802 = vmatprep.mubr.bf16.mxu0 %v1450
      %3803 = vmatmul.mubr.bf16.gmra.mrb[0].mxu0 %v1449
      %v3804 = vpop.f32.mrb[0].mxu0
      %v3805 = vadd.f32 %v3732, %v3804
      %v3806 = vpop.f32.mrb[0].mxu0
      %v3807 = vadd.f32 %v3734, %v3806
      %v3808 = vpop.f32.mrb[0].mxu0
      %v3809 = vadd.f32 %v3736, %v3808
      %v3810 = vpop.f32.mrb[0].mxu0
      %v3811 = vadd.f32 %v3738, %v3810
      %3812 = vmatprep.mubr.bf16.mxu0 %v1454
      %3813 = vmatmul.mubr.bf16.gmra.mrb[0].mxu0 %v1453
      %v3814 = vpop.f32.mrb[0].mxu0
      %v3815 = vadd.f32 %v3742, %v3814
      %v3816 = vpop.f32.mrb[0].mxu0
      %v3817 = vadd.f32 %v3744, %v3816
      %v3818 = vpop.f32.mrb[0].mxu0
      %v3819 = vadd.f32 %v3746, %v3818
      %v3820 = vpop.f32.mrb[0].mxu0
      %v3821 = vadd.f32 %v3748, %v3820
      %3822 = vmatprep.mubr.bf16.mxu0 %v1458
      %3823 = vmatmul.mubr.bf16.gmra.mrb[0].mxu0 %v1457
      %v3824 = vpop.f32.mrb[0].mxu0
      %v3825 = vadd.f32 %v3752, %v3824
      %v3826 = vpop.f32.mrb[0].mxu0
      %v3827 = vadd.f32 %v3754, %v3826
      %v3828 = vpop.f32.mrb[0].mxu0
      %v3829 = vadd.f32 %v3756, %v3828
      %v3830 = vpop.f32.mrb[0].mxu0
      %v3831 = vadd.f32 %v3758, %v3830
      %3832 = vdwg.mxu0
      %3833 = vmatprep.subr.bf16.mxu0 %v3414
      %3834 = vmatpush1.bf16.xpose.msra.mxu0 %v3413
      %3835 = vmatprep.subr.bf16.mxu0 %v3418
      %3836 = vmatpush1.bf16.xpose.msra.mxu0 %v3417
      %3837 = vmatprep.subr.bf16.mxu0 %v3422
      %3838 = vmatpush1.bf16.xpose.msra.mxu0 %v3421
      %3839 = vmatprep.subr.bf16.mxu0 %v3426
      %3840 = vmatpush1.bf16.xpose.msra.mxu0 %v3425
      %3841 = vmatprep.subr.bf16.mxu0 %v3430
      %3842 = vmatpush1.bf16.xpose.msra.mxu0 %v3429
      %3843 = vmatprep.subr.bf16.mxu0 %v3434
      %3844 = vmatpush1.bf16.xpose.msra.mxu0 %v3433
      %3845 = vmatprep.subr.bf16.mxu0 %v3438
      %3846 = vmatpush1.bf16.xpose.msra.mxu0 %v3437
      %3847 = vmatprep.subr.bf16.mxu0 %v3442
      %3848 = vmatpush1.bf16.xpose.msra.mxu0 %v3441
      %3849 = vmatprep.subr.bf16.mxu0 %v3446
      %3850 = vmatpush1.bf16.xpose.msra.mxu0 %v3445
      %3851 = vmatprep.subr.bf16.mxu0 %v3450
      %3852 = vmatpush1.bf16.xpose.msra.mxu0 %v3449
      %3853 = vmatprep.subr.bf16.mxu0 %v3454
      %3854 = vmatpush1.bf16.xpose.msra.mxu0 %v3453
      %3855 = vmatprep.subr.bf16.mxu0 %v3458
      %3856 = vmatpush1.bf16.xpose.msra.mxu0 %v3457
      %3857 = vmatprep.subr.bf16.mxu0 %v3462
      %3858 = vmatpush1.bf16.xpose.msra.mxu0 %v3461
      %3859 = vmatprep.subr.bf16.mxu0 %v3466
      %3860 = vmatpush1.bf16.xpose.msra.mxu0 %v3465
      %3861 = vmatprep.subr.bf16.mxu0 %v3470
      %3862 = vmatpush1.bf16.xpose.msra.mxu0 %v3469
      %3863 = vmatprep.subr.bf16.mxu0 %v3474
      %3864 = vmatpush1.bf16.xpose.msra.mxu0 %v3473
      %3865 = vmatprep.mubr.bf16.mxu0 1065369472
      %3866 = vmatmul.mubr.bf16.gmra.mrb[0].mxu0 1065369472
      %v3867 = vpop.f32.mrb[0].mxu0
      %v3868 = vadd.f32 0.0, %v3867
      %v3869 = vpop.f32.mrb[0].mxu0
      %v3870 = vadd.f32 0.0, %v3869
      %v3871 = vpop.f32.mrb[0].mxu0
      %v3872 = vpop.f32.mrb[0].mxu0
      %3873 = vdwg.mxu0
      %3874 = vmatprep.subr.bf16.mxu0 %v3416
      %3875 = vmatpush1.bf16.xpose.msra.mxu0 %v3415
      %3876 = vmatprep.subr.bf16.mxu0 %v3420
      %3877 = vmatpush1.bf16.xpose.msra.mxu0 %v3419
      %3878 = vmatprep.subr.bf16.mxu0 %v3424
      %3879 = vmatpush1.bf16.xpose.msra.mxu0 %v3423
      %3880 = vmatprep.subr.bf16.mxu0 %v3428
      %3881 = vmatpush1.bf16.xpose.msra.mxu0 %v3427
      %3882 = vmatprep.subr.bf16.mxu0 %v3432
      %3883 = vmatpush1.bf16.xpose.msra.mxu0 %v3431
      %3884 = vmatprep.subr.bf16.mxu0 %v3436
      %3885 = vmatpush1.bf16.xpose.msra.mxu0 %v3435
      %3886 = vmatprep.subr.bf16.mxu0 %v3440
      %3887 = vmatpush1.bf16.xpose.msra.mxu0 %v3439
      %3888 = vmatprep.subr.bf16.mxu0 %v3444
      %3889 = vmatpush1.bf16.xpose.msra.mxu0 %v3443
      %3890 = vmatprep.subr.bf16.mxu0 %v3448
      %3891 = vmatpush1.bf16.xpose.msra.mxu0 %v3447
      %3892 = vmatprep.subr.bf16.mxu0 %v3452
      %3893 = vmatpush1.bf16.xpose.msra.mxu0 %v3451
      %3894 = vmatprep.subr.bf16.mxu0 %v3456
      %3895 = vmatpush1.bf16.xpose.msra.mxu0 %v3455
      %3896 = vmatprep.subr.bf16.mxu0 %v3460
      %3897 = vmatpush1.bf16.xpose.msra.mxu0 %v3459
      %3898 = vmatprep.subr.bf16.mxu0 %v3464
      %3899 = vmatpush1.bf16.xpose.msra.mxu0 %v3463
      %3900 = vmatprep.subr.bf16.mxu0 %v3468
      %3901 = vmatpush1.bf16.xpose.msra.mxu0 %v3467
      %3902 = vmatprep.subr.bf16.mxu0 %v3472
      %3903 = vmatpush1.bf16.xpose.msra.mxu0 %v3471
      %3904 = vmatprep.subr.bf16.mxu0 %v3476
      %3905 = vmatpush1.bf16.xpose.msra.mxu0 %v3475
      %3906 = vmatprep.mubr.bf16.mxu0 1065369472
      %3907 = vmatmul.mubr.bf16.gmra.mrb[0].mxu0 1065369472
      %v3908 = vpop.f32.mrb[0].mxu0
      %v3909 = vadd.f32 %v3868, %v3908
      %v3910 = vpop.f32.mrb[0].mxu0
      %v3911 = vadd.f32 %v3870, %v3910
      %v3912 = vpop.f32.mrb[0].mxu0
      %v3913 = vpop.f32.mrb[0].mxu0
      %3914 = vdwg.mxu0
      %3915 = vmatprep.subr.bf16.mxu0 %v3478
      %3916 = vmatpush1.bf16.xpose.msra.mxu0 %v3477
      %3917 = vmatprep.subr.bf16.mxu0 %v3482
      %3918 = vmatpush1.bf16.xpose.msra.mxu0 %v3481
      %3919 = vmatprep.subr.bf16.mxu0 %v3486
      %3920 = vmatpush1.bf16.xpose.msra.mxu0 %v3485
      %3921 = vmatprep.subr.bf16.mxu0 %v3490
      %3922 = vmatpush1.bf16.xpose.msra.mxu0 %v3489
      %3923 = vmatprep.subr.bf16.mxu0 %v3494
      %3924 = vmatpush1.bf16.xpose.msra.mxu0 %v3493
      %3925 = vmatprep.subr.bf16.mxu0 %v3498
      %3926 = vmatpush1.bf16.xpose.msra.mxu0 %v3497
      %3927 = vmatprep.subr.bf16.mxu0 %v3502
      %3928 = vmatpush1.bf16.xpose.msra.mxu0 %v3501
      %3929 = vmatprep.subr.bf16.mxu0 %v3506
      %3930 = vmatpush1.bf16.xpose.msra.mxu0 %v3505
      %3931 = vmatprep.subr.bf16.mxu0 %v3510
      %3932 = vmatpush1.bf16.xpose.msra.mxu0 %v3509
      %3933 = vmatprep.subr.bf16.mxu0 %v3514
      %3934 = vmatpush1.bf16.xpose.msra.mxu0 %v3513
      %3935 = vmatprep.subr.bf16.mxu0 %v3518
      %3936 = vmatpush1.bf16.xpose.msra.mxu0 %v3517
      %3937 = vmatprep.subr.bf16.mxu0 %v3522
      %3938 = vmatpush1.bf16.xpose.msra.mxu0 %v3521
      %3939 = vmatprep.subr.bf16.mxu0 %v3526
      %3940 = vmatpush1.bf16.xpose.msra.mxu0 %v3525
      %3941 = vmatprep.subr.bf16.mxu0 %v3530
      %3942 = vmatpush1.bf16.xpose.msra.mxu0 %v3529
      %3943 = vmatprep.subr.bf16.mxu0 %v3534
      %3944 = vmatpush1.bf16.xpose.msra.mxu0 %v3533
      %3945 = vmatprep.subr.bf16.mxu0 %v3538
      %3946 = vmatpush1.bf16.xpose.msra.mxu0 %v3537
      %3947 = vmatprep.mubr.bf16.mxu0 1065369472
      %3948 = vmatmul.mubr.bf16.gmra.mrb[0].mxu0 1065369472
      %v3949 = vpop.f32.mrb[0].mxu0
      %v3950 = vadd.f32 0.0, %v3949
      %v3951 = vpop.f32.mrb[0].mxu0
      %v3952 = vadd.f32 0.0, %v3951
      %v3953 = vpop.f32.mrb[0].mxu0
      %v3954 = vpop.f32.mrb[0].mxu0
      %3955 = vdwg.mxu0
      %3956 = vmatprep.subr.bf16.mxu0 %v3480
      %3957 = vmatpush1.bf16.xpose.msra.mxu0 %v3479
      %3958 = vmatprep.subr.bf16.mxu0 %v3484
      %3959 = vmatpush1.bf16.xpose.msra.mxu0 %v3483
      %3960 = vmatprep.subr.bf16.mxu0 %v3488
      %3961 = vmatpush1.bf16.xpose.msra.mxu0 %v3487
      %3962 = vmatprep.subr.bf16.mxu0 %v3492
      %3963 = vmatpush1.bf16.xpose.msra.mxu0 %v3491
      %3964 = vmatprep.subr.bf16.mxu0 %v3496
      %3965 = vmatpush1.bf16.xpose.msra.mxu0 %v3495
      %3966 = vmatprep.subr.bf16.mxu0 %v3500
      %3967 = vmatpush1.bf16.xpose.msra.mxu0 %v3499
      %3968 = vmatprep.subr.bf16.mxu0 %v3504
      %3969 = vmatpush1.bf16.xpose.msra.mxu0 %v3503
      %3970 = vmatprep.subr.bf16.mxu0 %v3508
      %3971 = vmatpush1.bf16.xpose.msra.mxu0 %v3507
      %3972 = vmatprep.subr.bf16.mxu0 %v3512
      %3973 = vmatpush1.bf16.xpose.msra.mxu0 %v3511
      %3974 = vmatprep.subr.bf16.mxu0 %v3516
      %3975 = vmatpush1.bf16.xpose.msra.mxu0 %v3515
      %3976 = vmatprep.subr.bf16.mxu0 %v3520
      %3977 = vmatpush1.bf16.xpose.msra.mxu0 %v3519
      %3978 = vmatprep.subr.bf16.mxu0 %v3524
      %3979 = vmatpush1.bf16.xpose.msra.mxu0 %v3523
      %3980 = vmatprep.subr.bf16.mxu0 %v3528
      %3981 = vmatpush1.bf16.xpose.msra.mxu0 %v3527
      %3982 = vmatprep.subr.bf16.mxu0 %v3532
      %3983 = vmatpush1.bf16.xpose.msra.mxu0 %v3531
      %3984 = vmatprep.subr.bf16.mxu0 %v3536
      %3985 = vmatpush1.bf16.xpose.msra.mxu0 %v3535
      %3986 = vmatprep.subr.bf16.mxu0 %v3540
      %3987 = vmatpush1.bf16.xpose.msra.mxu0 %v3539
      %3988 = vmatprep.mubr.bf16.mxu0 1065369472
      %3989 = vmatmul.mubr.bf16.gmra.mrb[0].mxu0 1065369472
      %v3990 = vpop.f32.mrb[0].mxu0
      %v3991 = vadd.f32 %v3950, %v3990
      %v3992 = vpop.f32.mrb[0].mxu0
      %v3993 = vadd.f32 %v3952, %v3992
      %v3994 = vpop.f32.mrb[0].mxu0
      %v3995 = vpop.f32.mrb[0].mxu0
      %3996 = vdwg.mxu0
      %v3997 = vrcp.pop %v3909
      %v3998 = vrcp.pop %v3911
      %v3999 = vrcp.pop %v3991
      %v4000 = vrcp.pop %v3993
      %v4001 = vlaneseq
      %v4002 = vshrl.u32 %v4001, 7
      %v4003 = vsub.s32 0, %v4002
      %v4004 = vrot.slane %v3997, %v4003
      %v4005 = vlaneseq
      %v4006 = vshrl.u32 %v4005, 7
      %v4007 = vsub.s32 0, %v4006
      %v4008 = vrot.slane %v3998, %v4007
      %v4009 = vlaneseq
      %v4010 = vshrl.u32 %v4009, 7
      %v4011 = vsub.s32 0, %v4010
      %v4012 = vrot.slane %v3999, %v4011
      %v4013 = vlaneseq
      %v4014 = vshrl.u32 %v4013, 7
      %v4015 = vsub.s32 0, %v4014
      %v4016 = vrot.slane %v4000, %v4015
      %v4017 = vmul.f32 %v3649, %v4004
      %v4018 = vmul.f32 %v3651, %v4008
      %v4019 = vmul.f32 %v3795, %v4012
      %v4020 = vmul.f32 %v3797, %v4016
      %v4021 = vmul.f32 %v3653, %v4004
      %v4022 = vmul.f32 %v3655, %v4008
      %v4023 = vmul.f32 %v3799, %v4012
      %v4024 = vmul.f32 %v3801, %v4016
      %v4025 = vmul.f32 %v3659, %v4004
      %v4026 = vmul.f32 %v3661, %v4008
      %v4027 = vmul.f32 %v3805, %v4012
      %v4028 = vmul.f32 %v3807, %v4016
      %v4029 = vmul.f32 %v3663, %v4004
      %v4030 = vmul.f32 %v3665, %v4008
      %v4031 = vmul.f32 %v3809, %v4012
      %v4032 = vmul.f32 %v3811, %v4016
      %v4033 = vmul.f32 %v3669, %v4004
      %v4034 = vmul.f32 %v3671, %v4008
      %v4035 = vmul.f32 %v3815, %v4012
      %v4036 = vmul.f32 %v3817, %v4016
      %v4037 = vmul.f32 %v3673, %v4004
      %v4038 = vmul.f32 %v3675, %v4008
      %v4039 = vmul.f32 %v3819, %v4012
      %v4040 = vmul.f32 %v3821, %v4016
      %v4041 = vmul.f32 %v3679, %v4004
      %v4042 = vmul.f32 %v3681, %v4008
      %v4043 = vmul.f32 %v3825, %v4012
      %v4044 = vmul.f32 %v3827, %v4016
      %v4045 = vmul.f32 %v3683, %v4004
      %v4046 = vmul.f32 %v3685, %v4008
      %v4047 = vmul.f32 %v3829, %v4012
      %v4048 = vmul.f32 %v3831, %v4016
      %v4049 = vld [vmem:[%s4] sm:$0xf]
      %v4050 = vld [vmem:[%s4 + $0x4] sm:$0xf]
      %v4051 = vld [vmem:[%s4 + $0x8] sm:$0xf]
      %v4052 = vld [vmem:[%s4 + $0xc] sm:$0xf]
      %v4053 = vld [vmem:[%s4 + $0x10] sm:$0xf]
      %v4054 = vld [vmem:[%s4 + $0x14] sm:$0xf]
      %v4055 = vld [vmem:[%s4 + $0x18] sm:$0xf]
      %v4056 = vld [vmem:[%s4 + $0x1c] sm:$0xf]
      %v4057 = vpack.c.bf16 %v4021, %v4017
      %v4058 = vpack.c.bf16 %v4022, %v4018
      %v4059 = vpack.c.bf16 %v4023, %v4019
      %v4060 = vpack.c.bf16 %v4024, %v4020
      %v4061 = vpack.c.bf16 %v4029, %v4025
      %v4062 = vpack.c.bf16 %v4030, %v4026
      %v4063 = vpack.c.bf16 %v4031, %v4027
      %v4064 = vpack.c.bf16 %v4032, %v4028
      %v4065 = vpack.c.bf16 %v4037, %v4033
      %v4066 = vpack.c.bf16 %v4038, %v4034
      %v4067 = vpack.c.bf16 %v4039, %v4035
      %v4068 = vpack.c.bf16 %v4040, %v4036
      %v4069 = vpack.c.bf16 %v4045, %v4041
      %v4070 = vpack.c.bf16 %v4046, %v4042
      %v4071 = vpack.c.bf16 %v4047, %v4043
      %v4072 = vpack.c.bf16 %v4048, %v4044
      %v4073 = vld [vmem:[%s5] sm:$0xff]
      %v4074 = vld [vmem:[%s5 + $0x8] sm:$0xff]
      %v4075 = vld [vmem:[%s5 + $0x10] sm:$0xff]
      %v4076 = vld [vmem:[%s5 + $0x18] sm:$0xff]
      %v4077 = vld [vmem:[%s5 + $0x20] sm:$0xff]
      %v4078 = vld [vmem:[%s5 + $0x28] sm:$0xff]
      %v4079 = vld [vmem:[%s5 + $0x30] sm:$0xff]
      %v4080 = vld [vmem:[%s5 + $0x38] sm:$0xff]
      %4082 = vset.pattern.permute.xlu0 0
      %4083 = vperm.xlu0 %4082, %v4073
      %v4084 = vpop.permute.xlu0 %4083
      %4087 = vset.pattern.permute.xlu0 0
      %4088 = vperm.xlu0 %4087, %v4074
      %v4089 = vpop.permute.xlu0 %4088
      %4092 = vset.pattern.permute.xlu0 0
      %4093 = vperm.xlu0 %4092, %v4075
      %v4094 = vpop.permute.xlu0 %4093
      %4097 = vset.pattern.permute.xlu0 0
      %4098 = vperm.xlu0 %4097, %v4076
      %v4099 = vpop.permute.xlu0 %4098
      %4102 = vset.pattern.permute.xlu0 0
      %4103 = vperm.xlu0 %4102, %v4077
      %v4104 = vpop.permute.xlu0 %4103
      %4107 = vset.pattern.permute.xlu0 0
      %4108 = vperm.xlu0 %4107, %v4078
      %v4109 = vpop.permute.xlu0 %4108
      %4112 = vset.pattern.permute.xlu0 0
      %4113 = vperm.xlu0 %4112, %v4079
      %v4114 = vpop.permute.xlu0 %4113
      %4117 = vset.pattern.permute.xlu0 0
      %4118 = vperm.xlu0 %4117, %v4080
      %v4119 = vpop.permute.xlu0 %4118
      %v4129 = vunpack.c.l.b16 %v4049
      %v4130 = vunpack.c.l.b16 %v4050
      %v4131 = vunpack.c.l.b16 %v4051
      %v4132 = vunpack.c.l.b16 %v4052
      %v4133 = vunpack.c.l.b16 %v4053
      %v4134 = vunpack.c.l.b16 %v4054
      %v4135 = vunpack.c.l.b16 %v4055
      %v4136 = vunpack.c.l.b16 %v4056
      %v4137 = vpack.c.b16 %v4130, %v4129
      %v4138 = vpack.c.b16 %v4132, %v4131
      %v4139 = vpack.c.b16 %v4134, %v4133
      %v4140 = vpack.c.b16 %v4136, %v4135
      %v4142 = vsel %vm406, %v4137, 0
      %v4145 = vsel %vm406, %v4138, 0
      %v4148 = vsel %vm406, %v4139, 0
      %v4151 = vsel %vm406, %v4140, 0
      %4153 = vmatprep.subr.bf16.mxu0 %v4058
      %4154 = vmatpush1.bf16.msra.mxu0 %v4057
      %4155 = vmatprep.subr.bf16.mxu0 %v4062
      %4156 = vmatpush1.bf16.msra.mxu0 %v4061
      %4157 = vmatprep.subr.bf16.mxu0 %v4066
      %4158 = vmatpush1.bf16.msra.mxu0 %v4065
      %4159 = vmatprep.subr.bf16.mxu0 %v4070
      %4160 = vmatpush1.bf16.msra.mxu0 %v4069
      %4161 = vmatprep.subr.bf16.mxu0 0
      %4162 = vmatpush1.bf16.msra.mxu0 0
      %4163 = vmatprep.subr.bf16.mxu0 0
      %4164 = vmatpush1.bf16.msra.mxu0 0
      %4165 = vmatprep.subr.bf16.mxu0 0
      %4166 = vmatpush1.bf16.msra.mxu0 0
      %4167 = vmatprep.subr.bf16.mxu0 0
      %4168 = vmatpush1.bf16.msra.mxu0 0
      %4169 = vmatprep.subr.bf16.mxu0 0
      %4170 = vmatpush1.bf16.msra.mxu0 0
      %4171 = vmatprep.subr.bf16.mxu0 0
      %4172 = vmatpush1.bf16.msra.mxu0 0
      %4173 = vmatprep.subr.bf16.mxu0 0
      %4174 = vmatpush1.bf16.msra.mxu0 0
      %4175 = vmatprep.subr.bf16.mxu0 0
      %4176 = vmatpush1.bf16.msra.mxu0 0
      %4177 = vmatprep.subr.bf16.mxu0 0
      %4178 = vmatpush1.bf16.msra.mxu0 0
      %4179 = vmatprep.subr.bf16.mxu0 0
      %4180 = vmatpush1.bf16.msra.mxu0 0
      %4181 = vmatprep.subr.bf16.mxu0 0
      %4182 = vmatpush1.bf16.msra.mxu0 0
      %4183 = vmatprep.subr.bf16.mxu0 0
      %4184 = vmatpush1.bf16.msra.mxu0 0
      %4185 = vmatprep.mubr.bf16.mxu0 0
      %4186 = vmatmul.mubr.bf16.gmra.mrb[0].mxu0 %v4142
      %v4187 = vpop.f32.mrb[0].mxu0
      %v4188 = vadd.f32 %v4084, %v4187
      %v4189 = vpop.f32.mrb[0].mxu0
      %v4190 = vadd.f32 %v4084, %v4189
      %v4191 = vpop.f32.mrb[0].mxu0
      %v4192 = vadd.f32 %v4089, %v4191
      %v4193 = vpop.f32.mrb[0].mxu0
      %v4194 = vadd.f32 %v4089, %v4193
      %4195 = vmatprep.mubr.bf16.mxu0 0
      %4196 = vmatmul.mubr.bf16.gmra.mrb[0].mxu0 %v4145
      %v4197 = vpop.f32.mrb[0].mxu0
      %v4198 = vadd.f32 %v4094, %v4197
      %v4199 = vpop.f32.mrb[0].mxu0
      %v4200 = vadd.f32 %v4094, %v4199
      %v4201 = vpop.f32.mrb[0].mxu0
      %v4202 = vadd.f32 %v4099, %v4201
      %v4203 = vpop.f32.mrb[0].mxu0
      %v4204 = vadd.f32 %v4099, %v4203
      %4205 = vmatprep.mubr.bf16.mxu0 0
      %4206 = vmatmul.mubr.bf16.gmra.mrb[0].mxu0 %v4148
      %v4207 = vpop.f32.mrb[0].mxu0
      %v4208 = vadd.f32 %v4104, %v4207
      %v4209 = vpop.f32.mrb[0].mxu0
      %v4210 = vadd.f32 %v4104, %v4209
      %v4211 = vpop.f32.mrb[0].mxu0
      %v4212 = vadd.f32 %v4109, %v4211
      %v4213 = vpop.f32.mrb[0].mxu0
      %v4214 = vadd.f32 %v4109, %v4213
      %4215 = vmatprep.mubr.bf16.mxu0 0
      %4216 = vmatmul.mubr.bf16.gmra.mrb[0].mxu0 %v4151
      %v4217 = vpop.f32.mrb[0].mxu0
      %v4218 = vadd.f32 %v4114, %v4217
      %v4219 = vpop.f32.mrb[0].mxu0
      %v4220 = vadd.f32 %v4114, %v4219
      %v4221 = vpop.f32.mrb[0].mxu0
      %v4222 = vadd.f32 %v4119, %v4221
      %v4223 = vpop.f32.mrb[0].mxu0
      %v4224 = vadd.f32 %v4119, %v4223
      %4225 = vdwg.mxu0
      %4226 = vmatprep.subr.bf16.mxu0 %v4060
      %4227 = vmatpush1.bf16.msra.mxu0 %v4059
      %4228 = vmatprep.subr.bf16.mxu0 %v4064
      %4229 = vmatpush1.bf16.msra.mxu0 %v4063
      %4230 = vmatprep.subr.bf16.mxu0 %v4068
      %4231 = vmatpush1.bf16.msra.mxu0 %v4067
      %4232 = vmatprep.subr.bf16.mxu0 %v4072
      %4233 = vmatpush1.bf16.msra.mxu0 %v4071
      %4234 = vmatprep.subr.bf16.mxu0 0
      %4235 = vmatpush1.bf16.msra.mxu0 0
      %4236 = vmatprep.subr.bf16.mxu0 0
      %4237 = vmatpush1.bf16.msra.mxu0 0
      %4238 = vmatprep.subr.bf16.mxu0 0
      %4239 = vmatpush1.bf16.msra.mxu0 0
      %4240 = vmatprep.subr.bf16.mxu0 0
      %4241 = vmatpush1.bf16.msra.mxu0 0
      %4242 = vmatprep.subr.bf16.mxu0 0
      %4243 = vmatpush1.bf16.msra.mxu0 0
      %4244 = vmatprep.subr.bf16.mxu0 0
      %4245 = vmatpush1.bf16.msra.mxu0 0
      %4246 = vmatprep.subr.bf16.mxu0 0
      %4247 = vmatpush1.bf16.msra.mxu0 0
      %4248 = vmatprep.subr.bf16.mxu0 0
      %4249 = vmatpush1.bf16.msra.mxu0 0
      %4250 = vmatprep.subr.bf16.mxu0 0
      %4251 = vmatpush1.bf16.msra.mxu0 0
      %4252 = vmatprep.subr.bf16.mxu0 0
      %4253 = vmatpush1.bf16.msra.mxu0 0
      %4254 = vmatprep.subr.bf16.mxu0 0
      %4255 = vmatpush1.bf16.msra.mxu0 0
      %4256 = vmatprep.subr.bf16.mxu0 0
      %4257 = vmatpush1.bf16.msra.mxu0 0
      %4258 = vmatprep.mubr.bf16.mxu0 0
      %4259 = vmatmul.mubr.bf16.gmra.mrb[0].mxu0 %v4142
      %v4260 = vpop.f32.mrb[0].mxu0
      %v4261 = vadd.f32 %v4084, %v4260
      %v4262 = vpop.f32.mrb[0].mxu0
      %v4263 = vadd.f32 %v4084, %v4262
      %v4264 = vpop.f32.mrb[0].mxu0
      %v4265 = vadd.f32 %v4089, %v4264
      %v4266 = vpop.f32.mrb[0].mxu0
      %v4267 = vadd.f32 %v4089, %v4266
      %4268 = vmatprep.mubr.bf16.mxu0 0
      %4269 = vmatmul.mubr.bf16.gmra.mrb[0].mxu0 %v4145
      %v4270 = vpop.f32.mrb[0].mxu0
      %v4271 = vadd.f32 %v4094, %v4270
      %v4272 = vpop.f32.mrb[0].mxu0
      %v4273 = vadd.f32 %v4094, %v4272
      %v4274 = vpop.f32.mrb[0].mxu0
      %v4275 = vadd.f32 %v4099, %v4274
      %v4276 = vpop.f32.mrb[0].mxu0
      %v4277 = vadd.f32 %v4099, %v4276
      %4278 = vmatprep.mubr.bf16.mxu0 0
      %4279 = vmatmul.mubr.bf16.gmra.mrb[0].mxu0 %v4148
      %v4280 = vpop.f32.mrb[0].mxu0
      %v4281 = vadd.f32 %v4104, %v4280
      %v4282 = vpop.f32.mrb[0].mxu0
      %v4283 = vadd.f32 %v4104, %v4282
      %v4284 = vpop.f32.mrb[0].mxu0
      %v4285 = vadd.f32 %v4109, %v4284
      %v4286 = vpop.f32.mrb[0].mxu0
      %v4287 = vadd.f32 %v4109, %v4286
      %4288 = vmatprep.mubr.bf16.mxu0 0
      %4289 = vmatmul.mubr.bf16.gmra.mrb[0].mxu0 %v4151
      %v4290 = vpop.f32.mrb[0].mxu0
      %v4291 = vadd.f32 %v4114, %v4290
      %v4292 = vpop.f32.mrb[0].mxu0
      %v4293 = vadd.f32 %v4114, %v4292
      %v4294 = vpop.f32.mrb[0].mxu0
      %v4295 = vadd.f32 %v4119, %v4294
      %v4296 = vpop.f32.mrb[0].mxu0
      %v4297 = vadd.f32 %v4119, %v4296
      %4298 = vdwg.mxu0
      %v4299 = vadd.f32 %v4188, %v254
      %v4300 = vadd.f32 %v4190, %v255
      %v4301 = vadd.f32 %v4261, %v256
      %v4302 = vadd.f32 %v4263, %v257
      %v4303 = vadd.f32 %v4192, %v258
      %v4304 = vadd.f32 %v4194, %v259
      %v4305 = vadd.f32 %v4265, %v260
      %v4306 = vadd.f32 %v4267, %v261
      %v4307 = vadd.f32 %v4198, %v262
      %v4308 = vadd.f32 %v4200, %v263
      %v4309 = vadd.f32 %v4271, %v264
      %v4310 = vadd.f32 %v4273, %v265
      %v4311 = vadd.f32 %v4202, %v266
      %v4312 = vadd.f32 %v4204, %v267
      %v4313 = vadd.f32 %v4275, %v268
      %v4314 = vadd.f32 %v4277, %v269
      %v4315 = vadd.f32 %v4208, %v270
      %v4316 = vadd.f32 %v4210, %v271
      %v4317 = vadd.f32 %v4281, %v272
      %v4318 = vadd.f32 %v4283, %v273
      %v4319 = vadd.f32 %v4212, %v274
      %v4320 = vadd.f32 %v4214, %v275
      %v4321 = vadd.f32 %v4285, %v276
      %v4322 = vadd.f32 %v4287, %v277
      %v4323 = vadd.f32 %v4218, %v278
      %v4324 = vadd.f32 %v4220, %v279
      %v4325 = vadd.f32 %v4291, %v280
      %v4326 = vadd.f32 %v4293, %v281
      %v4327 = vadd.f32 %v4222, %v282
      %v4328 = vadd.f32 %v4224, %v283
      %v4329 = vadd.f32 %v4295, %v284
      %v4330 = vadd.f32 %v4297, %v285
      %4331 = vst [vmem:[%s251] sm:$0xff] %v4299
      %4332 = vst [vmem:[%s251 + $0x8] sm:$0xff] %v4300
      %4333 = vst [vmem:[%s251 + $0x10] sm:$0xff] %v4301
      %4334 = vst [vmem:[%s251 + $0x18] sm:$0xff] %v4302
      %4335 = vst [vmem:[%s251 + $0x20] sm:$0xff] %v4303
      %4336 = vst [vmem:[%s251 + $0x28] sm:$0xff] %v4304
      %4337 = vst [vmem:[%s251 + $0x30] sm:$0xff] %v4305
      %4338 = vst [vmem:[%s251 + $0x38] sm:$0xff] %v4306
      %4339 = vst [vmem:[%s251 + $0x40] sm:$0xff] %v4307
      %4340 = vst [vmem:[%s251 + $0x48] sm:$0xff] %v4308
      %4341 = vst [vmem:[%s251 + $0x50] sm:$0xff] %v4309
      %4342 = vst [vmem:[%s251 + $0x58] sm:$0xff] %v4310
      %4343 = vst [vmem:[%s251 + $0x60] sm:$0xff] %v4311
      %4344 = vst [vmem:[%s251 + $0x68] sm:$0xff] %v4312
      %4345 = vst [vmem:[%s251 + $0x70] sm:$0xff] %v4313
      %4346 = vst [vmem:[%s251 + $0x78] sm:$0xff] %v4314
      %4347 = vst [vmem:[%s251 + $0x80] sm:$0xff] %v4315
      %4348 = vst [vmem:[%s251 + $0x88] sm:$0xff] %v4316
      %4349 = vst [vmem:[%s251 + $0x90] sm:$0xff] %v4317
      %4350 = vst [vmem:[%s251 + $0x98] sm:$0xff] %v4318
      %4351 = vst [vmem:[%s251 + $0xa0] sm:$0xff] %v4319
      %4352 = vst [vmem:[%s251 + $0xa8] sm:$0xff] %v4320
      %4353 = vst [vmem:[%s251 + $0xb0] sm:$0xff] %v4321
      %4354 = vst [vmem:[%s251 + $0xb8] sm:$0xff] %v4322
      %4355 = vst [vmem:[%s251 + $0xc0] sm:$0xff] %v4323
      %4356 = vst [vmem:[%s251 + $0xc8] sm:$0xff] %v4324
      %4357 = vst [vmem:[%s251 + $0xd0] sm:$0xff] %v4325
      %4358 = vst [vmem:[%s251 + $0xd8] sm:$0xff] %v4326
      %4359 = vst [vmem:[%s251 + $0xe0] sm:$0xff] %v4327
      %4360 = vst [vmem:[%s251 + $0xe8] sm:$0xff] %v4328
      %4361 = vst [vmem:[%s251 + $0xf0] sm:$0xff] %v4329
      %4362 = vst [vmem:[%s251 + $0xf8] sm:$0xff] %v4330
      %p4363 = scmp.lt.s32.totalorder %s17, 1
      %s4364 = scalar_select %p4363, %s17, 1
      %s4365 = smul.addr %s4364, 32
      %s4366 = smul.addr %s4365, 8
      %s4367 = scalar_lea.vmem %s6, %s4366
      // Predicated region
      $region45: #{self_attention_forward.1} parent=43 // pred_check
        %p4368 = pneg %p166
      $region46: #{self_attention_forward.1} parent=43 // pred_check_branch
        %4370 = sbr.rel (%p4368) target = $region48
      $region47: #{self_attention_forward.1} parent=43 // pred_region
        _
      $region48: #{self_attention_forward.1} parent=43 // pred_fallthru
        _
    $region44: #{self_attention_forward.1} parent=5 // pred_fallthru
      _
    %p4371 = scmp.le.s32.totalorder 2, %s12
    // Predicated region
    $region49: #{self_attention_forward.1} parent=5 // pred_check
      %p4372 = pneg %p4371
    $region50: #{self_attention_forward.1} parent=5 // pred_check_branch
      %4374 = sbr.rel (%p4372) target = $region52
    $region51: #{self_attention_forward.1} parent=5 // pred_region
      %s4375 = ssub.s32 %s12, 2
      // Predicated region
      $region53: #{self_attention_forward.1} parent=51 // pred_check
        %p4376 = pneg %p172
      $region54: #{self_attention_forward.1} parent=51 // pred_check_branch
        %4378 = sbr.rel (%p4376) target = $region56
      $region55: #{self_attention_forward.1} parent=51 // pred_region
        %p4379 = scmp.lt.s32.totalorder %s18, 1
        %s4380 = scalar_select %p4379, %s18, 1
        %s4381 = smul.addr %s4380, 32
        %s4382 = smul.addr %s4381, 8
        %s4383 = scalar_lea.vmem %s6, %s4382
      $region56: #{self_attention_forward.1} parent=51 // pred_fallthru
        _
    $region52: #{self_attention_forward.1} parent=5 // pred_fallthru
      _
  $region6: #{self_attention_forward.1} parent=0 // loop_footer
    %s16 = sadd.s32 1, %s12
  $region7: #{self_attention_forward.1} parent=0 // loop_footer_branch
    %11 = sbr.rel target = $region3
  $region8: #{self_attention_forward.1} parent=0 // loop_exit
    _

</llo_original>
